<compile_context>
chip_gen: v7x
topology: tpu7x:2x2x1
jax: 0.10.0
libtpu: 0.0.40
codegen_flags: <defaults>
</compile_context>

<pallas_src>
import functools

import numpy as np
import jax
import jax.numpy as jnp
from jax.experimental import pallas as pl
from jax.experimental.pallas import tpu as pltpu


def make_divisible(v, divisor=8, min_value=None, round_limit=0.9):
    min_value = min_value or divisor
    new_v = max(min_value, int(v + divisor / 2) // divisor * divisor)
    if new_v < round_limit * v:
        new_v += divisor
    return new_v


# ----------------------- fused q/k/v projection kernel ----------------------

def _qkv_proj_kernel(x_ref, w_ref, o_ref):
    """(tm, C) @ (C, Nq+Nk+Nv) -> one fused bf16 output.  bf16 MXU, f32 acc."""
    o_ref[...] = jnp.dot(x_ref[...].astype(jnp.bfloat16), w_ref[...],
                         preferred_element_type=jnp.float32).astype(o_ref.dtype)


def pallas_qkv_proj(x, w_qkv, tile_m=1024):
    """Row-tiled projection with the fused (scale-folded) q|k|v weight."""
    M, K = x.shape
    N = w_qkv.shape[1]
    tm = min(tile_m, M)
    return pl.pallas_call(
        _qkv_proj_kernel,
        out_shape=jax.ShapeDtypeStruct((M, N), jnp.bfloat16),
        grid=(pl.cdiv(M, tm),),
        in_specs=[pl.BlockSpec((tm, K), lambda i: (i, 0)),
                  pl.BlockSpec((K, N), lambda i: (0, 0))],        # const weight
        out_specs=pl.BlockSpec((tm, N), lambda i: (i, 0)),
        compiler_params=pltpu.CompilerParams(
            dimension_semantics=("parallel",),
            vmem_limit_bytes=48 * 1024 * 1024),
    )(x, w_qkv)


# ------------------------------ halo attention ------------------------------

def _halo_attn_kernel(q_ref, kv_ref, bias_ref, mask_ref, wproj_ref, bproj_ref,
                      o_ref, kv_scr, o_scr, *, num_heads, dim_head_qk,
                      dim_head_v, block_size, win_size):
    bs2 = block_size * block_size
    nhdq = num_heads * dim_head_qk

    j = pl.program_id(2)
    c0 = pl.multiple_of(j * block_size, block_size)

    # Gather the overlapping (win, win) window from the VMEM-resident row band
    # into a sublane-aligned flat (win^2, ckv) scratch ONCE per block; reused
    # by every head (no per-head relayout, no unaligned reshape).
    for r in range(win_size):
        kv_scr[r * win_size:(r + 1) * win_size, :] = \
            kv_ref[0, 0, r, pl.ds(c0, win_size), :]

    # q block arrives in NHWC layout; (bs, bs, .) -> (bs^2, .) is layout-trivial
    # because bs == 8 (one sublane tile per row-block).  scale already folded
    # into the q weights.
    q = q_ref[0].reshape(bs2, q_ref.shape[3])          # (bs^2, nhdq + ckv) bf16
    addm = mask_ref[0, 0]                              # (1, win^2) {0, -1e30}

    for h in range(num_heads):
        qh = q[:, h * dim_head_qk:(h + 1) * dim_head_qk]
        kh = kv_scr[:, h * dim_head_qk:(h + 1) * dim_head_qk]
        vh = kv_scr[:, nhdq + h * dim_head_v:nhdq + (h + 1) * dim_head_v]

        # logits = (q*scale) @ k^T + rel-pos bias + additive halo mask
        s = jax.lax.dot_general(qh, kh, (((1,), (1,)), ((), ())),
                                preferred_element_type=jnp.float32)
        s = s + bias_ref[h] + addm

        # f32 softmax stats (safe on v5e); normalisation deferred past PV.
        m = jnp.max(s, axis=-1, keepdims=True)
        p = jnp.exp(s - m)
        denom = jnp.sum(p, axis=-1, keepdims=True)
        oh = jnp.dot(p.astype(jnp.bfloat16), vh,
                     preferred_element_type=jnp.float32)
        oh = oh * pl.reciprocal(denom, approx=True)
        # pack the head into the (bs^2, Cv) slab for one wide proj matmul
        o_scr[:, h * dim_head_v:(h + 1) * dim_head_v] = oh.astype(jnp.bfloat16)

    # single Cv-wide fused output-projection epilogue (fills the MXU K dim)
    out = jnp.dot(o_scr[...], wproj_ref[...],
                  preferred_element_type=jnp.float32) + bproj_ref[...]
    o_ref[0] = out.reshape(block_size, block_size, out.shape[-1]).astype(o_ref.dtype)


def pallas_halo_attention(qkv, kv_band, rel_bias, add_mask, w_proj, b_proj, *,
                          num_heads, dim_head_qk, dim_head_v, block_size,
                          win_size):
    B, H, W, n_tot = qkv.shape
    num_h = kv_band.shape[1]
    win, wp, ckv = kv_band.shape[2:]
    num_w = W // block_size
    cv = num_heads * dim_head_v
    bs = block_size
    win2 = win_size * win_size

    kern = functools.partial(
        _halo_attn_kernel, num_heads=num_heads, dim_head_qk=dim_head_qk,
        dim_head_v=dim_head_v, block_size=block_size, win_size=win_size)

    # TODO(synk): on v7x, constant-index operands (rel_bias, w_proj, b_proj,
    # kv_band over j) could use pipeline_mode=pl.Buffered(1) to avoid
    # double-buffering; omitted here for API portability across jax versions.
    return pl.pallas_call(
        kern,
        out_shape=jax.ShapeDtypeStruct((B, H, W, cv), jnp.bfloat16),
        grid=(B, num_h, num_w),
        in_specs=[
            # fused q|k|v in NHWC; q columns sliced in-kernel
            pl.BlockSpec((1, bs, bs, n_tot), lambda b, i, j: (b, i, j, 0)),
            # kv halo row-band: constant over j -> resident across the row
            pl.BlockSpec((1, 1, win, wp, ckv), lambda b, i, j: (b, i, 0, 0, 0)),
            pl.BlockSpec(rel_bias.shape, lambda b, i, j: (0, 0, 0)),   # const
            pl.BlockSpec((1, 1, 1, win2), lambda b, i, j: (i, j, 0, 0)),
            pl.BlockSpec(w_proj.shape, lambda b, i, j: (0, 0)),        # const
            pl.BlockSpec(b_proj.shape, lambda b, i, j: (0, 0)),        # const
        ],
        out_specs=pl.BlockSpec((1, bs, bs, cv), lambda b, i, j: (b, i, j, 0)),
        scratch_shapes=[pltpu.VMEM((win2, ckv), jnp.bfloat16),   # flat window
                        pltpu.VMEM((bs * bs, cv), jnp.bfloat16)],  # head pack
        compiler_params=pltpu.CompilerParams(
            dimension_semantics=("parallel", "parallel", "arbitrary"),
            vmem_limit_bytes=48 * 1024 * 1024),
    )(qkv, kv_band, rel_bias, add_mask, w_proj, b_proj)


# ------------------------------- module port --------------------------------

class HaloAttnPallas:
    """Pallas TPU port of HaloAttn (query_free pos-embed, stride=1, no qkv bias)."""

    def __init__(self, dim, dim_out=None, num_heads=8, dim_head=None,
                 block_size=7, halo_size=3, qk_ratio=1.0,
                 input_resolution=None, key=None):
        dim_out = dim_out or dim
        assert dim_out % num_heads == 0
        if min(input_resolution) < block_size:
            block_size = min(input_resolution)
            halo_size = 0
        self.dim = dim
        self.num_heads = num_heads
        self.dim_head_qk = dim_head or make_divisible(dim_out * qk_ratio, divisor=8) // num_heads
        self.dim_head_v = dim_out // num_heads
        self.dim_out_qk = num_heads * self.dim_head_qk
        self.dim_out_v = num_heads * self.dim_head_v
        self.scale = self.dim_head_qk ** -0.5
        self.block_size = block_size
        self.halo_size = halo_size
        self.win_size = block_size + 2 * halo_size

        # deterministic synthetic parameters (qkv_bias=False; proj has a bias)
        k0, k1, k2, k3, k4, k5 = jax.random.split(key, 6)
        std = 0.05
        self.w_q = jax.random.normal(k0, (dim, self.dim_out_qk), jnp.float32) * std
        self.w_k = jax.random.normal(k1, (dim, self.dim_out_qk), jnp.float32) * std
        self.w_v = jax.random.normal(k2, (dim, self.dim_out_v), jnp.float32) * std
        self.w_proj = jax.random.normal(k3, (self.dim_out_v, self.dim_out_v), jnp.float32) * std
        self.b_proj = jax.random.normal(k4, (1, self.dim_out_v), jnp.float32) * std
        num_rel = (2 * self.win_size - 1) ** 2
        self.rel_bias_table = jax.random.normal(k5, (num_rel, num_heads), jnp.float32) * std

        # TODO(synk): relative-position bias table gather stays in JAX/numpy
        # init glue (tiny, done once); only the dense (NH, bs^2, win^2) bias is
        # consumed by the Pallas kernel.
        rel_index = self._rel_pos_index(self.win_size, self.block_size)
        bias = self.rel_bias_table[rel_index.reshape(-1)]
        self.rel_bias = bias.reshape(self.block_size ** 2, self.win_size ** 2,
                                     num_heads).transpose(2, 0, 1)

        # fused / bf16 parameter copies used by the Pallas path;
        # self.scale is folded into the q columns so the kernel never rescales.
        self.w_qkv_bf16 = jnp.concatenate(
            [self.w_q * self.scale, self.w_k, self.w_v],
            axis=1).astype(jnp.bfloat16)
        self.w_proj_bf16 = self.w_proj.astype(jnp.bfloat16)

    @staticmethod
    def _rel_pos_index(win, block):
        coords = np.stack(np.meshgrid(np.arange(win), np.arange(win), indexing='ij'))
        cf = coords.reshape(2, -1)
        rel = cf[:, :, None] - cf[:, None, :]
        rel = rel.transpose(1, 2, 0).copy()
        rel[:, :, 0] += win - 1
        rel[:, :, 1] += win - 1
        rel[:, :, 0] *= 2 * win - 1
        rel = rel.sum(-1)
        sh = (win - block) // 2
        rel = rel.reshape(win, win, win, win)
        rel = rel[sh:sh + block, sh:sh + block, :, 0:win]
        return rel.reshape(block * block, win * win).astype(np.int32)

    def _additive_mask(self, H, W):
        """(num_h, num_w, 1, win^2): 0 for real pixels, -1e30 for halo padding."""
        bs, hs, win = self.block_size, self.halo_size, self.win_size
        num_h, num_w = H // bs, W // bs
        mp = np.pad(np.ones((H, W), np.float32), ((hs, hs), (hs, hs)))
        hi = (np.arange(num_h) * bs)[:, None] + np.arange(win)[None, :]
        wi = (np.arange(num_w) * bs)[:, None] + np.arange(win)[None, :]
        mw = mp[hi][:, :, wi]                                  # (num_h, win, num_w, win)
        mw = mw.transpose(0, 2, 1, 3).reshape(num_h, num_w, win * win)
        # large finite sentinel (no -inf after adding to finite logits)
        masked = np.where(mw > 0.5, 0.0, -1e30).astype(np.float32)
        return masked.reshape(num_h, num_w, 1, win * win)

    def __call__(self, x):
        B, H, W, C = x.shape
        bs, hs, win = self.block_size, self.halo_size, self.win_size
        assert H % bs == 0 and W % bs == 0
        num_h = H // bs
        nhdq, nhdv = self.dim_out_qk, self.dim_out_v
        ckv = nhdq + nhdv

        # --- fused q/k/v projection: one tiled bf16 Pallas matmul, one fused output ---
        qkv = pallas_qkv_proj(x.reshape(B * H * W, C), self.w_qkv_bf16)
        qkv = qkv.reshape(B, H, W, nhdq + ckv)

        # --- kv: symmetric halo pad + overlapping *row bands* (1.5x, not 2.25x) ---
        # TODO(synk): halo padding + band gather stay as one XLA glue pass;
        # a data-dependent BlockSpec cannot express the symmetric halo pad.
        kv_pad = jnp.pad(qkv[..., nhdq:], ((0, 0), (hs, hs), (hs, hs), (0, 0)))
        hi = (np.arange(num_h) * bs)[:, None] + np.arange(win)[None, :]
        kv_band = kv_pad[:, hi]                    # (B, num_h, win, W+2hs, ckv)

        add_mask = jnp.asarray(self._additive_mask(H, W))

        # --- attention + fused proj epilogue; NHWC in, NHWC out, bf16 ---
        out = pallas_halo_attention(
            qkv, kv_band, self.rel_bias, add_mask,
            self.w_proj_bf16, self.b_proj,
            num_heads=self.num_heads, dim_head_qk=self.dim_head_qk,
            dim_head_v=self.dim_head_v, block_size=bs, win_size=win)
        return out                                 # (B, H, W, dim_out_v) bf16

    # ------------------------- pure-JAX f32 reference -----------------------
    def reference(self, x):
        B, H, W, C = x.shape
        bs, hs, win = self.block_size, self.halo_size, self.win_size
        num_h, num_w = H // bs, W // bs
        nb = num_h * num_w
        NH, dq, dv = self.num_heads, self.dim_head_qk, self.dim_head_v

        xf = x.reshape(B * H * W, C)
        q = (xf @ self.w_q).reshape(B, num_h, bs, num_w, bs, NH, dq)
        q = q.transpose(0, 5, 1, 3, 2, 4, 6).reshape(B, NH, nb, bs * bs, dq)

        k = (xf @ self.w_k).reshape(B, H, W, NH, dq)
        v = (xf @ self.w_v).reshape(B, H, W, NH, dv)
        kp = jnp.pad(k, ((0, 0), (hs, hs), (hs, hs), (0, 0), (0, 0)))
        vp = jnp.pad(v, ((0, 0), (hs, hs), (hs, hs), (0, 0), (0, 0)))
        hi = (np.arange(num_h) * bs)[:, None] + np.arange(win)[None, :]
        wi = (np.arange(num_w) * bs)[:, None] + np.arange(win)[None, :]

        def windows(t):
            t = t[:, hi]                 # (B, num_h, win, Wp, NH, d)
            t = t[:, :, :, wi]           # (B, num_h, win, num_w, win, NH, d)
            t = t.transpose(0, 5, 1, 3, 2, 4, 6)
            return t.reshape(B, NH, nb, win * win, t.shape[-1])

        kw, vw = windows(kp), windows(vp)

        mp = np.pad(np.ones((H, W), np.float32), ((hs, hs), (hs, hs)))
        mw = mp[hi][:, :, wi].transpose(0, 2, 1, 3).reshape(nb, win * win)
        invalid = jnp.asarray(mw < 0.5)

        s = jnp.einsum('bhnqd,bhnkd->bhnqk', q * self.scale, kw)
        s = s + self.rel_bias[None, :, None]
        s = jnp.where(invalid[None, None, :, None, :],
                      -jnp.finfo(jnp.float32).max, s)
        p = jax.nn.softmax(s, axis=-1)
        o = jnp.einsum('bhnqk,bhnkd->bhnqd', p, vw)

        o = o.reshape(B, NH, num_h, num_w, bs, bs, dv)
        o = o.transpose(0, 2, 4, 3, 5, 1, 6).reshape(B, H, W, self.dim_out_v)
        return o @ self.w_proj + self.b_proj


if __name__ == "__main__":
    key = jax.random.PRNGKey(0)
    kx, kp = jax.random.split(key)
    B, H, W, C = 2, 16, 16, 32
    x = jax.random.normal(kx, (B, H, W, C), jnp.float32)

    mod = HaloAttnPallas(dim=C, num_heads=4, block_size=8, halo_size=2,
                         input_resolution=(H, W), key=kp)

    out = jax.block_until_ready(jax.jit(mod.__call__)(x))
    ref = jax.block_until_ready(mod.reference(x))
    assert out.shape == (B, H, W, C)
    np.testing.assert_allclose(np.asarray(out, dtype=np.float32), np.asarray(ref),
                               rtol=2e-2, atol=5e-3)
    print("KERNEL_OK")
</pallas_src>

<mosaic_0001>
module attributes {stable_mosaic.version = 11 : i64} {
  func.func @_qkv_proj_kernel(%arg0: i32, %arg1: memref<512x32xf32, #tpu.memory_space<vmem>>, %arg2: memref<32x96xbf16, #tpu.memory_space<vmem>>, %arg3: memref<512x96xbf16, #tpu.memory_space<vmem>>) attributes {dimension_semantics = [#tpu.dimension_semantics<parallel>], iteration_bounds = array<i64: 1>, scalar_prefetch = 0 : i64, scratch_operands = 0 : i64, tpu.core_type = #tpu.core_type<tc>, window_params = [{transform_indices = @transform_0, window_bounds = array<i64: 512, 32>}, {pipeline_mode = #tpu.pipeline_mode<synchronous>, transform_indices = @transform_1, window_bounds = array<i64: 32, 96>}, {transform_indices = @transform_2, window_bounds = array<i64: 512, 96>}]} {
    %c0 = arith.constant 0 : index
    %c0_0 = arith.constant 0 : index
    %0 = vector.load %arg1[%c0, %c0_0] : memref<512x32xf32, #tpu.memory_space<vmem>>, vector<512x32xf32>
    %1 = arith.truncf %0 : vector<512x32xf32> to vector<512x32xbf16>
    %c0_1 = arith.constant 0 : index
    %c0_2 = arith.constant 0 : index
    %2 = vector.load %arg2[%c0_1, %c0_2] : memref<32x96xbf16, #tpu.memory_space<vmem>>, vector<32x96xbf16>
    %cst = arith.constant dense<0.000000e+00> : vector<512x96xf32>
    %3 = tpu.matmul %1, %2, %cst {dimension_numbers = #tpu.dot_dimension_numbers<[1], [0], [0], [1], [0, 0, 1, 1], [], []>} : vector<512x32xbf16>, vector<32x96xbf16>, vector<512x96xf32> -> vector<512x96xf32>
    %4 = arith.truncf %3 : vector<512x96xf32> to vector<512x96xbf16>
    %c0_3 = arith.constant 0 : index
    %c0_4 = arith.constant 0 : index
    %5 = vector.load %arg3[%c0_3, %c0_4] : memref<512x96xbf16, #tpu.memory_space<vmem>>, vector<512x96xbf16>
    tpu.vector_store %arg3[%c0_3, %c0_4], %4 {strides = array<i32>} : memref<512x96xbf16, #tpu.memory_space<vmem>>, vector<512x96xbf16>,
    return
  }
  func.func @transform_0(%arg0: i32) -> (i32, i32) {
    %c0_i32 = arith.constant 0 : i32
    %c0_i32_0 = arith.constant 0 : i32
    return %arg0, %c0_i32 : i32, i32
  }
  func.func @transform_1(%arg0: i32) -> (i32, i32) {
    %c0_i32 = arith.constant 0 : i32
    %c0_i32_0 = arith.constant 0 : i32
    %c0_i32_1 = arith.constant 0 : i32
    return %c0_i32, %c0_i32_0 : i32, i32
  }
  func.func @transform_2(%arg0: i32) -> (i32, i32) {
    %c0_i32 = arith.constant 0 : i32
    %c0_i32_0 = arith.constant 0 : i32
    return %arg0, %c0_i32 : i32, i32
  }
}

module attributes {stable_mosaic.version = 11 : i64} {
  func.func @_halo_attn_kernel(%arg0: i32, %arg1: i32, %arg2: i32, %arg3: memref<1x8x8x96xbf16, #tpu.memory_space<vmem>>, %arg4: memref<1x1x12x20x64xbf16, #tpu.memory_space<vmem>>, %arg5: memref<4x64x144xf32, #tpu.memory_space<vmem>>, %arg6: memref<1x1x1x144xf32, #tpu.memory_space<vmem>>, %arg7: memref<32x32xbf16, #tpu.memory_space<vmem>>, %arg8: memref<1x32xf32, #tpu.memory_space<vmem>>, %arg9: memref<1x8x8x32xbf16, #tpu.memory_space<vmem>>, %arg10: memref<144x64xbf16, #tpu.memory_space<vmem>>, %arg11: memref<64x32xbf16, #tpu.memory_space<vmem>>) attributes {dimension_semantics = [#tpu.dimension_semantics<parallel>, #tpu.dimension_semantics<parallel>, #tpu.dimension_semantics<arbitrary>], iteration_bounds = array<i64: 2, 2, 2>, scalar_prefetch = 0 : i64, scratch_operands = 2 : i64, tpu.core_type = #tpu.core_type<tc>, window_params = [{transform_indices = @transform_0, window_bounds = array<i64: 1, 8, 8, 96>}, {transform_indices = @transform_1, window_bounds = array<i64: 1, 1, 12, 20, 64>}, {pipeline_mode = #tpu.pipeline_mode<synchronous>, transform_indices = @transform_2, window_bounds = array<i64: 4, 64, 144>}, {transform_indices = @transform_3, window_bounds = array<i64: 1, 1, 1, 144>}, {pipeline_mode = #tpu.pipeline_mode<synchronous>, transform_indices = @transform_4, window_bounds = array<i64: 32, 32>}, {pipeline_mode = #tpu.pipeline_mode<synchronous>, transform_indices = @transform_5, window_bounds = array<i64: 1, 32>}, {transform_indices = @transform_6, window_bounds = array<i64: 1, 8, 8, 32>}]} {
    %c8_i32 = arith.constant 8 : i32
    %0 = arith.muli %arg2, %c8_i32 : i32
    %1 = tpu.assume_multiple %0, 8 : i32
    %c0 = arith.constant 0 : index
    %c0_0 = arith.constant 0 : index
    %c0_1 = arith.constant 0 : index
    %2 = arith.index_cast %1 : i32 to index
    %c0_2 = arith.constant 0 : index
    %3 = vector.load %arg4[%c0, %c0_0, %c0_1, %2, %c0_2] : memref<1x1x12x20x64xbf16, #tpu.memory_space<vmem>>, vector<1x1x1x12x64xbf16>
    %4 = vector.shape_cast %3 : vector<1x1x1x12x64xbf16> to vector<12x64xbf16>
    %c0_3 = arith.constant 0 : index
    %c0_4 = arith.constant 0 : index
    %5 = vector.load %arg10[%c0_3, %c0_4] : memref<144x64xbf16, #tpu.memory_space<vmem>>, vector<12x64xbf16>
    tpu.vector_store %arg10[%c0_3, %c0_4], %4 {strides = array<i32>} : memref<144x64xbf16, #tpu.memory_space<vmem>>, vector<12x64xbf16>,
    %c0_5 = arith.constant 0 : index
    %c0_6 = arith.constant 0 : index
    %c1 = arith.constant 1 : index
    %6 = arith.index_cast %1 : i32 to index
    %c0_7 = arith.constant 0 : index
    %7 = vector.load %arg4[%c0_5, %c0_6, %c1, %6, %c0_7] : memref<1x1x12x20x64xbf16, #tpu.memory_space<vmem>>, vector<1x1x1x12x64xbf16>
    %8 = vector.shape_cast %7 : vector<1x1x1x12x64xbf16> to vector<12x64xbf16>
    %c12 = arith.constant 12 : index
    %c0_8 = arith.constant 0 : index
    %9 = vector.load %arg10[%c12, %c0_8] : memref<144x64xbf16, #tpu.memory_space<vmem>>, vector<12x64xbf16>
    tpu.vector_store %arg10[%c12, %c0_8], %8 {strides = array<i32>} : memref<144x64xbf16, #tpu.memory_space<vmem>>, vector<12x64xbf16>,
    %c0_9 = arith.constant 0 : index
    %c0_10 = arith.constant 0 : index
    %c2 = arith.constant 2 : index
    %10 = arith.index_cast %1 : i32 to index
    %c0_11 = arith.constant 0 : index
    %11 = vector.load %arg4[%c0_9, %c0_10, %c2, %10, %c0_11] : memref<1x1x12x20x64xbf16, #tpu.memory_space<vmem>>, vector<1x1x1x12x64xbf16>
    %12 = vector.shape_cast %11 : vector<1x1x1x12x64xbf16> to vector<12x64xbf16>
    %c24 = arith.constant 24 : index
    %c0_12 = arith.constant 0 : index
    %13 = vector.load %arg10[%c24, %c0_12] : memref<144x64xbf16, #tpu.memory_space<vmem>>, vector<12x64xbf16>
    tpu.vector_store %arg10[%c24, %c0_12], %12 {strides = array<i32>} : memref<144x64xbf16, #tpu.memory_space<vmem>>, vector<12x64xbf16>,
    %c0_13 = arith.constant 0 : index
    %c0_14 = arith.constant 0 : index
    %c3 = arith.constant 3 : index
    %14 = arith.index_cast %1 : i32 to index
    %c0_15 = arith.constant 0 : index
    %15 = vector.load %arg4[%c0_13, %c0_14, %c3, %14, %c0_15] : memref<1x1x12x20x64xbf16, #tpu.memory_space<vmem>>, vector<1x1x1x12x64xbf16>
    %16 = vector.shape_cast %15 : vector<1x1x1x12x64xbf16> to vector<12x64xbf16>
    %c36 = arith.constant 36 : index
    %c0_16 = arith.constant 0 : index
    %17 = vector.load %arg10[%c36, %c0_16] : memref<144x64xbf16, #tpu.memory_space<vmem>>, vector<12x64xbf16>
    tpu.vector_store %arg10[%c36, %c0_16], %16 {strides = array<i32>} : memref<144x64xbf16, #tpu.memory_space<vmem>>, vector<12x64xbf16>,
    %c0_17 = arith.constant 0 : index
    %c0_18 = arith.constant 0 : index
    %c4 = arith.constant 4 : index
    %18 = arith.index_cast %1 : i32 to index
    %c0_19 = arith.constant 0 : index
    %19 = vector.load %arg4[%c0_17, %c0_18, %c4, %18, %c0_19] : memref<1x1x12x20x64xbf16, #tpu.memory_space<vmem>>, vector<1x1x1x12x64xbf16>
    %20 = vector.shape_cast %19 : vector<1x1x1x12x64xbf16> to vector<12x64xbf16>
    %c48 = arith.constant 48 : index
    %c0_20 = arith.constant 0 : index
    %21 = vector.load %arg10[%c48, %c0_20] : memref<144x64xbf16, #tpu.memory_space<vmem>>, vector<12x64xbf16>
    tpu.vector_store %arg10[%c48, %c0_20], %20 {strides = array<i32>} : memref<144x64xbf16, #tpu.memory_space<vmem>>, vector<12x64xbf16>,
    %c0_21 = arith.constant 0 : index
    %c0_22 = arith.constant 0 : index
    %c5 = arith.constant 5 : index
    %22 = arith.index_cast %1 : i32 to index
    %c0_23 = arith.constant 0 : index
    %23 = vector.load %arg4[%c0_21, %c0_22, %c5, %22, %c0_23] : memref<1x1x12x20x64xbf16, #tpu.memory_space<vmem>>, vector<1x1x1x12x64xbf16>
    %24 = vector.shape_cast %23 : vector<1x1x1x12x64xbf16> to vector<12x64xbf16>
    %c60 = arith.constant 60 : index
    %c0_24 = arith.constant 0 : index
    %25 = vector.load %arg10[%c60, %c0_24] : memref<144x64xbf16, #tpu.memory_space<vmem>>, vector<12x64xbf16>
    tpu.vector_store %arg10[%c60, %c0_24], %24 {strides = array<i32>} : memref<144x64xbf16, #tpu.memory_space<vmem>>, vector<12x64xbf16>,
    %c0_25 = arith.constant 0 : index
    %c0_26 = arith.constant 0 : index
    %c6 = arith.constant 6 : index
    %26 = arith.index_cast %1 : i32 to index
    %c0_27 = arith.constant 0 : index
    %27 = vector.load %arg4[%c0_25, %c0_26, %c6, %26, %c0_27] : memref<1x1x12x20x64xbf16, #tpu.memory_space<vmem>>, vector<1x1x1x12x64xbf16>
    %28 = vector.shape_cast %27 : vector<1x1x1x12x64xbf16> to vector<12x64xbf16>
    %c72 = arith.constant 72 : index
    %c0_28 = arith.constant 0 : index
    %29 = vector.load %arg10[%c72, %c0_28] : memref<144x64xbf16, #tpu.memory_space<vmem>>, vector<12x64xbf16>
    tpu.vector_store %arg10[%c72, %c0_28], %28 {strides = array<i32>} : memref<144x64xbf16, #tpu.memory_space<vmem>>, vector<12x64xbf16>,
    %c0_29 = arith.constant 0 : index
    %c0_30 = arith.constant 0 : index
    %c7 = arith.constant 7 : index
    %30 = arith.index_cast %1 : i32 to index
    %c0_31 = arith.constant 0 : index
    %31 = vector.load %arg4[%c0_29, %c0_30, %c7, %30, %c0_31] : memref<1x1x12x20x64xbf16, #tpu.memory_space<vmem>>, vector<1x1x1x12x64xbf16>
    %32 = vector.shape_cast %31 : vector<1x1x1x12x64xbf16> to vector<12x64xbf16>
    %c84 = arith.constant 84 : index
    %c0_32 = arith.constant 0 : index
    %33 = vector.load %arg10[%c84, %c0_32] : memref<144x64xbf16, #tpu.memory_space<vmem>>, vector<12x64xbf16>
    tpu.vector_store %arg10[%c84, %c0_32], %32 {strides = array<i32>} : memref<144x64xbf16, #tpu.memory_space<vmem>>, vector<12x64xbf16>,
    %c0_33 = arith.constant 0 : index
    %c0_34 = arith.constant 0 : index
    %c8 = arith.constant 8 : index
    %34 = arith.index_cast %1 : i32 to index
    %c0_35 = arith.constant 0 : index
    %35 = vector.load %arg4[%c0_33, %c0_34, %c8, %34, %c0_35] : memref<1x1x12x20x64xbf16, #tpu.memory_space<vmem>>, vector<1x1x1x12x64xbf16>
    %36 = vector.shape_cast %35 : vector<1x1x1x12x64xbf16> to vector<12x64xbf16>
    %c96 = arith.constant 96 : index
    %c0_36 = arith.constant 0 : index
    %37 = vector.load %arg10[%c96, %c0_36] : memref<144x64xbf16, #tpu.memory_space<vmem>>, vector<12x64xbf16>
    tpu.vector_store %arg10[%c96, %c0_36], %36 {strides = array<i32>} : memref<144x64xbf16, #tpu.memory_space<vmem>>, vector<12x64xbf16>,
    %c0_37 = arith.constant 0 : index
    %c0_38 = arith.constant 0 : index
    %c9 = arith.constant 9 : index
    %38 = arith.index_cast %1 : i32 to index
    %c0_39 = arith.constant 0 : index
    %39 = vector.load %arg4[%c0_37, %c0_38, %c9, %38, %c0_39] : memref<1x1x12x20x64xbf16, #tpu.memory_space<vmem>>, vector<1x1x1x12x64xbf16>
    %40 = vector.shape_cast %39 : vector<1x1x1x12x64xbf16> to vector<12x64xbf16>
    %c108 = arith.constant 108 : index
    %c0_40 = arith.constant 0 : index
    %41 = vector.load %arg10[%c108, %c0_40] : memref<144x64xbf16, #tpu.memory_space<vmem>>, vector<12x64xbf16>
    tpu.vector_store %arg10[%c108, %c0_40], %40 {strides = array<i32>} : memref<144x64xbf16, #tpu.memory_space<vmem>>, vector<12x64xbf16>,
    %c0_41 = arith.constant 0 : index
    %c0_42 = arith.constant 0 : index
    %c10 = arith.constant 10 : index
    %42 = arith.index_cast %1 : i32 to index
    %c0_43 = arith.constant 0 : index
    %43 = vector.load %arg4[%c0_41, %c0_42, %c10, %42, %c0_43] : memref<1x1x12x20x64xbf16, #tpu.memory_space<vmem>>, vector<1x1x1x12x64xbf16>
    %44 = vector.shape_cast %43 : vector<1x1x1x12x64xbf16> to vector<12x64xbf16>
    %c120 = arith.constant 120 : index
    %c0_44 = arith.constant 0 : index
    %45 = vector.load %arg10[%c120, %c0_44] : memref<144x64xbf16, #tpu.memory_space<vmem>>, vector<12x64xbf16>
    tpu.vector_store %arg10[%c120, %c0_44], %44 {strides = array<i32>} : memref<144x64xbf16, #tpu.memory_space<vmem>>, vector<12x64xbf16>,
    %c0_45 = arith.constant 0 : index
    %c0_46 = arith.constant 0 : index
    %c11 = arith.constant 11 : index
    %46 = arith.index_cast %1 : i32 to index
    %c0_47 = arith.constant 0 : index
    %47 = vector.load %arg4[%c0_45, %c0_46, %c11, %46, %c0_47] : memref<1x1x12x20x64xbf16, #tpu.memory_space<vmem>>, vector<1x1x1x12x64xbf16>
    %48 = vector.shape_cast %47 : vector<1x1x1x12x64xbf16> to vector<12x64xbf16>
    %c132 = arith.constant 132 : index
    %c0_48 = arith.constant 0 : index
    %49 = vector.load %arg10[%c132, %c0_48] : memref<144x64xbf16, #tpu.memory_space<vmem>>, vector<12x64xbf16>
    tpu.vector_store %arg10[%c132, %c0_48], %48 {strides = array<i32>} : memref<144x64xbf16, #tpu.memory_space<vmem>>, vector<12x64xbf16>,
    %c0_49 = arith.constant 0 : index
    %c0_50 = arith.constant 0 : index
    %c0_51 = arith.constant 0 : index
    %c0_52 = arith.constant 0 : index
    %50 = vector.load %arg3[%c0_49, %c0_50, %c0_51, %c0_52] : memref<1x8x8x96xbf16, #tpu.memory_space<vmem>>, vector<1x8x8x96xbf16>
    %51 = vector.shape_cast %50 : vector<1x8x8x96xbf16> to vector<8x8x96xbf16>
    %52 = vector.shape_cast %51 : vector<8x8x96xbf16> to vector<64x96xbf16>
    %c0_53 = arith.constant 0 : index
    %c0_54 = arith.constant 0 : index
    %c0_55 = arith.constant 0 : index
    %c0_56 = arith.constant 0 : index
    %53 = vector.load %arg6[%c0_53, %c0_54, %c0_55, %c0_56] : memref<1x1x1x144xf32, #tpu.memory_space<vmem>>, vector<1x1x1x144xf32>
    %54 = vector.shape_cast %53 : vector<1x1x1x144xf32> to vector<1x144xf32>
    %55 = vector.extract_strided_slice %52 {offsets = [0, 0], sizes = [64, 8], strides = [1, 1]} : vector<64x96xbf16> to vector<64x8xbf16>
    %c0_57 = arith.constant 0 : index
    %c0_58 = arith.constant 0 : index
    %56 = vector.load %arg10[%c0_57, %c0_58] : memref<144x64xbf16, #tpu.memory_space<vmem>>, vector<144x8xbf16>
    %c0_59 = arith.constant 0 : index
    %c32 = arith.constant 32 : index
    %57 = vector.load %arg10[%c0_59, %c32] : memref<144x64xbf16, #tpu.memory_space<vmem>>, vector<144x8xbf16>
    %cst = arith.constant dense<0.000000e+00> : vector<64x144xf32>
    %58 = tpu.matmul %55, %56, %cst {dimension_numbers = #tpu.dot_dimension_numbers<[1], [1], [0], [0], [0, 0, 1, 0], [], []>} : vector<64x8xbf16>, vector<144x8xbf16>, vector<64x144xf32> -> vector<64x144xf32>
    %c0_60 = arith.constant 0 : index
    %c0_61 = arith.constant 0 : index
    %c0_62 = arith.constant 0 : index
    %59 = vector.load %arg5[%c0_60, %c0_61, %c0_62] : memref<4x64x144xf32, #tpu.memory_space<vmem>>, vector<1x64x144xf32>
    %60 = vector.shape_cast %59 : vector<1x64x144xf32> to vector<64x144xf32>
    %61 = arith.addf %58, %60 : vector<64x144xf32>
    %62 = vector.broadcast %54 : vector<1x144xf32> to vector<64x144xf32>
    %63 = arith.addf %61, %62 : vector<64x144xf32>
    %cst_63 = arith.constant dense<0xFF800000> : vector<64xf32>
    %64 = vector.multi_reduction <maximumf>, %63, %cst_63 [1] : vector<64x144xf32> to vector<64xf32>
    %65 = vector.shape_cast %64 : vector<64xf32> to vector<64x1xf32>
    %66 = vector.broadcast %65 : vector<64x1xf32> to vector<64x144xf32>
    %67 = arith.subf %63, %66 : vector<64x144xf32>
    %68 = math.exp %67 : vector<64x144xf32>
    %cst_64 = arith.constant dense<0.000000e+00> : vector<64xf32>
    %69 = vector.multi_reduction <add>, %68, %cst_64 [1] : vector<64x144xf32> to vector<64xf32>
    %70 = vector.shape_cast %69 : vector<64xf32> to vector<64x1xf32>
    %71 = arith.truncf %68 : vector<64x144xf32> to vector<64x144xbf16>
    %cst_65 = arith.constant dense<0.000000e+00> : vector<64x8xf32>
    %72 = tpu.matmul %71, %57, %cst_65 {dimension_numbers = #tpu.dot_dimension_numbers<[1], [0], [0], [1], [0, 0, 1, 1], [], []>} : vector<64x144xbf16>, vector<144x8xbf16>, vector<64x8xf32> -> vector<64x8xf32>
    %73 = tpu.reciprocal %70 {approx = true} : vector<64x1xf32> -> vector<64x1xf32>
    %74 = vector.broadcast %73 : vector<64x1xf32> to vector<64x8xf32>
    %75 = arith.mulf %72, %74 : vector<64x8xf32>
    %76 = arith.truncf %75 : vector<64x8xf32> to vector<64x8xbf16>
    %c0_66 = arith.constant 0 : index
    %c0_67 = arith.constant 0 : index
    %77 = vector.load %arg11[%c0_66, %c0_67] : memref<64x32xbf16, #tpu.memory_space<vmem>>, vector<64x8xbf16>
    tpu.vector_store %arg11[%c0_66, %c0_67], %76 {strides = array<i32>} : memref<64x32xbf16, #tpu.memory_space<vmem>>, vector<64x8xbf16>,
    %78 = vector.extract_strided_slice %52 {offsets = [0, 8], sizes = [64, 8], strides = [1, 1]} : vector<64x96xbf16> to vector<64x8xbf16>
    %c0_68 = arith.constant 0 : index
    %c8_69 = arith.constant 8 : index
    %79 = vector.load %arg10[%c0_68, %c8_69] : memref<144x64xbf16, #tpu.memory_space<vmem>>, vector<144x8xbf16>
    %c0_70 = arith.constant 0 : index
    %c40 = arith.constant 40 : index
    %80 = vector.load %arg10[%c0_70, %c40] : memref<144x64xbf16, #tpu.memory_space<vmem>>, vector<144x8xbf16>
    %cst_71 = arith.constant dense<0.000000e+00> : vector<64x144xf32>
    %81 = tpu.matmul %78, %79, %cst_71 {dimension_numbers = #tpu.dot_dimension_numbers<[1], [1], [0], [0], [0, 0, 1, 0], [], []>} : vector<64x8xbf16>, vector<144x8xbf16>, vector<64x144xf32> -> vector<64x144xf32>
    %c1_72 = arith.constant 1 : index
    %c0_73 = arith.constant 0 : index
    %c0_74 = arith.constant 0 : index
    %82 = vector.load %arg5[%c1_72, %c0_73, %c0_74] : memref<4x64x144xf32, #tpu.memory_space<vmem>>, vector<1x64x144xf32>
    %83 = vector.shape_cast %82 : vector<1x64x144xf32> to vector<64x144xf32>
    %84 = arith.addf %81, %83 : vector<64x144xf32>
    %85 = vector.broadcast %54 : vector<1x144xf32> to vector<64x144xf32>
    %86 = arith.addf %84, %85 : vector<64x144xf32>
    %cst_75 = arith.constant dense<0xFF800000> : vector<64xf32>
    %87 = vector.multi_reduction <maximumf>, %86, %cst_75 [1] : vector<64x144xf32> to vector<64xf32>
    %88 = vector.shape_cast %87 : vector<64xf32> to vector<64x1xf32>
    %89 = vector.broadcast %88 : vector<64x1xf32> to vector<64x144xf32>
    %90 = arith.subf %86, %89 : vector<64x144xf32>
    %91 = math.exp %90 : vector<64x144xf32>
    %cst_76 = arith.constant dense<0.000000e+00> : vector<64xf32>
    %92 = vector.multi_reduction <add>, %91, %cst_76 [1] : vector<64x144xf32> to vector<64xf32>
    %93 = vector.shape_cast %92 : vector<64xf32> to vector<64x1xf32>
    %94 = arith.truncf %91 : vector<64x144xf32> to vector<64x144xbf16>
    %cst_77 = arith.constant dense<0.000000e+00> : vector<64x8xf32>
    %95 = tpu.matmul %94, %80, %cst_77 {dimension_numbers = #tpu.dot_dimension_numbers<[1], [0], [0], [1], [0, 0, 1, 1], [], []>} : vector<64x144xbf16>, vector<144x8xbf16>, vector<64x8xf32> -> vector<64x8xf32>
    %96 = tpu.reciprocal %93 {approx = true} : vector<64x1xf32> -> vector<64x1xf32>
    %97 = vector.broadcast %96 : vector<64x1xf32> to vector<64x8xf32>
    %98 = arith.mulf %95, %97 : vector<64x8xf32>
    %99 = arith.truncf %98 : vector<64x8xf32> to vector<64x8xbf16>
    %c0_78 = arith.constant 0 : index
    %c8_79 = arith.constant 8 : index
    %100 = vector.load %arg11[%c0_78, %c8_79] : memref<64x32xbf16, #tpu.memory_space<vmem>>, vector<64x8xbf16>
    tpu.vector_store %arg11[%c0_78, %c8_79], %99 {strides = array<i32>} : memref<64x32xbf16, #tpu.memory_space<vmem>>, vector<64x8xbf16>,
    %101 = vector.extract_strided_slice %52 {offsets = [0, 16], sizes = [64, 8], strides = [1, 1]} : vector<64x96xbf16> to vector<64x8xbf16>
    %c0_80 = arith.constant 0 : index
    %c16 = arith.constant 16 : index
    %102 = vector.load %arg10[%c0_80, %c16] : memref<144x64xbf16, #tpu.memory_space<vmem>>, vector<144x8xbf16>
    %c0_81 = arith.constant 0 : index
    %c48_82 = arith.constant 48 : index
    %103 = vector.load %arg10[%c0_81, %c48_82] : memref<144x64xbf16, #tpu.memory_space<vmem>>, vector<144x8xbf16>
    %cst_83 = arith.constant dense<0.000000e+00> : vector<64x144xf32>
    %104 = tpu.matmul %101, %102, %cst_83 {dimension_numbers = #tpu.dot_dimension_numbers<[1], [1], [0], [0], [0, 0, 1, 0], [], []>} : vector<64x8xbf16>, vector<144x8xbf16>, vector<64x144xf32> -> vector<64x144xf32>
    %c2_84 = arith.constant 2 : index
    %c0_85 = arith.constant 0 : index
    %c0_86 = arith.constant 0 : index
    %105 = vector.load %arg5[%c2_84, %c0_85, %c0_86] : memref<4x64x144xf32, #tpu.memory_space<vmem>>, vector<1x64x144xf32>
    %106 = vector.shape_cast %105 : vector<1x64x144xf32> to vector<64x144xf32>
    %107 = arith.addf %104, %106 : vector<64x144xf32>
    %108 = vector.broadcast %54 : vector<1x144xf32> to vector<64x144xf32>
    %109 = arith.addf %107, %108 : vector<64x144xf32>
    %cst_87 = arith.constant dense<0xFF800000> : vector<64xf32>
    %110 = vector.multi_reduction <maximumf>, %109, %cst_87 [1] : vector<64x144xf32> to vector<64xf32>
    %111 = vector.shape_cast %110 : vector<64xf32> to vector<64x1xf32>
    %112 = vector.broadcast %111 : vector<64x1xf32> to vector<64x144xf32>
    %113 = arith.subf %109, %112 : vector<64x144xf32>
    %114 = math.exp %113 : vector<64x144xf32>
    %cst_88 = arith.constant dense<0.000000e+00> : vector<64xf32>
    %115 = vector.multi_reduction <add>, %114, %cst_88 [1] : vector<64x144xf32> to vector<64xf32>
    %116 = vector.shape_cast %115 : vector<64xf32> to vector<64x1xf32>
    %117 = arith.truncf %114 : vector<64x144xf32> to vector<64x144xbf16>
    %cst_89 = arith.constant dense<0.000000e+00> : vector<64x8xf32>
    %118 = tpu.matmul %117, %103, %cst_89 {dimension_numbers = #tpu.dot_dimension_numbers<[1], [0], [0], [1], [0, 0, 1, 1], [], []>} : vector<64x144xbf16>, vector<144x8xbf16>, vector<64x8xf32> -> vector<64x8xf32>
    %119 = tpu.reciprocal %116 {approx = true} : vector<64x1xf32> -> vector<64x1xf32>
    %120 = vector.broadcast %119 : vector<64x1xf32> to vector<64x8xf32>
    %121 = arith.mulf %118, %120 : vector<64x8xf32>
    %122 = arith.truncf %121 : vector<64x8xf32> to vector<64x8xbf16>
    %c0_90 = arith.constant 0 : index
    %c16_91 = arith.constant 16 : index
    %123 = vector.load %arg11[%c0_90, %c16_91] : memref<64x32xbf16, #tpu.memory_space<vmem>>, vector<64x8xbf16>
    tpu.vector_store %arg11[%c0_90, %c16_91], %122 {strides = array<i32>} : memref<64x32xbf16, #tpu.memory_space<vmem>>, vector<64x8xbf16>,
    %124 = vector.extract_strided_slice %52 {offsets = [0, 24], sizes = [64, 8], strides = [1, 1]} : vector<64x96xbf16> to vector<64x8xbf16>
    %c0_92 = arith.constant 0 : index
    %c24_93 = arith.constant 24 : index
    %125 = vector.load %arg10[%c0_92, %c24_93] : memref<144x64xbf16, #tpu.memory_space<vmem>>, vector<144x8xbf16>
    %c0_94 = arith.constant 0 : index
    %c56 = arith.constant 56 : index
    %126 = vector.load %arg10[%c0_94, %c56] : memref<144x64xbf16, #tpu.memory_space<vmem>>, vector<144x8xbf16>
    %cst_95 = arith.constant dense<0.000000e+00> : vector<64x144xf32>
    %127 = tpu.matmul %124, %125, %cst_95 {dimension_numbers = #tpu.dot_dimension_numbers<[1], [1], [0], [0], [0, 0, 1, 0], [], []>} : vector<64x8xbf16>, vector<144x8xbf16>, vector<64x144xf32> -> vector<64x144xf32>
    %c3_96 = arith.constant 3 : index
    %c0_97 = arith.constant 0 : index
    %c0_98 = arith.constant 0 : index
    %128 = vector.load %arg5[%c3_96, %c0_97, %c0_98] : memref<4x64x144xf32, #tpu.memory_space<vmem>>, vector<1x64x144xf32>
    %129 = vector.shape_cast %128 : vector<1x64x144xf32> to vector<64x144xf32>
    %130 = arith.addf %127, %129 : vector<64x144xf32>
    %131 = vector.broadcast %54 : vector<1x144xf32> to vector<64x144xf32>
    %132 = arith.addf %130, %131 : vector<64x144xf32>
    %cst_99 = arith.constant dense<0xFF800000> : vector<64xf32>
    %133 = vector.multi_reduction <maximumf>, %132, %cst_99 [1] : vector<64x144xf32> to vector<64xf32>
    %134 = vector.shape_cast %133 : vector<64xf32> to vector<64x1xf32>
    %135 = vector.broadcast %134 : vector<64x1xf32> to vector<64x144xf32>
    %136 = arith.subf %132, %135 : vector<64x144xf32>
    %137 = math.exp %136 : vector<64x144xf32>
    %cst_100 = arith.constant dense<0.000000e+00> : vector<64xf32>
    %138 = vector.multi_reduction <add>, %137, %cst_100 [1] : vector<64x144xf32> to vector<64xf32>
    %139 = vector.shape_cast %138 : vector<64xf32> to vector<64x1xf32>
    %140 = arith.truncf %137 : vector<64x144xf32> to vector<64x144xbf16>
    %cst_101 = arith.constant dense<0.000000e+00> : vector<64x8xf32>
    %141 = tpu.matmul %140, %126, %cst_101 {dimension_numbers = #tpu.dot_dimension_numbers<[1], [0], [0], [1], [0, 0, 1, 1], [], []>} : vector<64x144xbf16>, vector<144x8xbf16>, vector<64x8xf32> -> vector<64x8xf32>
    %142 = tpu.reciprocal %139 {approx = true} : vector<64x1xf32> -> vector<64x1xf32>
    %143 = vector.broadcast %142 : vector<64x1xf32> to vector<64x8xf32>
    %144 = arith.mulf %141, %143 : vector<64x8xf32>
    %145 = arith.truncf %144 : vector<64x8xf32> to vector<64x8xbf16>
    %c0_102 = arith.constant 0 : index
    %c24_103 = arith.constant 24 : index
    %146 = vector.load %arg11[%c0_102, %c24_103] : memref<64x32xbf16, #tpu.memory_space<vmem>>, vector<64x8xbf16>
    tpu.vector_store %arg11[%c0_102, %c24_103], %145 {strides = array<i32>} : memref<64x32xbf16, #tpu.memory_space<vmem>>, vector<64x8xbf16>,
    %c0_104 = arith.constant 0 : index
    %c0_105 = arith.constant 0 : index
    %147 = vector.load %arg11[%c0_104, %c0_105] : memref<64x32xbf16, #tpu.memory_space<vmem>>, vector<64x32xbf16>
    %c0_106 = arith.constant 0 : index
    %c0_107 = arith.constant 0 : index
    %148 = vector.load %arg7[%c0_106, %c0_107] : memref<32x32xbf16, #tpu.memory_space<vmem>>, vector<32x32xbf16>
    %cst_108 = arith.constant dense<0.000000e+00> : vector<64x32xf32>
    %149 = tpu.matmul %147, %148, %cst_108 {dimension_numbers = #tpu.dot_dimension_numbers<[1], [0], [0], [1], [0, 0, 1, 1], [], []>} : vector<64x32xbf16>, vector<32x32xbf16>, vector<64x32xf32> -> vector<64x32xf32>
    %c0_109 = arith.constant 0 : index
    %c0_110 = arith.constant 0 : index
    %150 = vector.load %arg8[%c0_109, %c0_110] : memref<1x32xf32, #tpu.memory_space<vmem>>, vector<1x32xf32>
    %151 = vector.broadcast %150 : vector<1x32xf32> to vector<64x32xf32>
    %152 = arith.addf %149, %151 : vector<64x32xf32>
    %153 = vector.shape_cast %152 : vector<64x32xf32> to vector<8x8x32xf32>
    %154 = arith.truncf %153 : vector<8x8x32xf32> to vector<8x8x32xbf16>
    %c0_111 = arith.constant 0 : index
    %c0_112 = arith.constant 0 : index
    %c0_113 = arith.constant 0 : index
    %c0_114 = arith.constant 0 : index
    %155 = vector.load %arg9[%c0_111, %c0_112, %c0_113, %c0_114] : memref<1x8x8x32xbf16, #tpu.memory_space<vmem>>, vector<1x8x8x32xbf16>
    %156 = vector.shape_cast %155 : vector<1x8x8x32xbf16> to vector<8x8x32xbf16>
    %157 = vector.shape_cast %154 : vector<8x8x32xbf16> to vector<1x8x8x32xbf16>
    tpu.vector_store %arg9[%c0_111, %c0_112, %c0_113, %c0_114], %157 {strides = array<i32>} : memref<1x8x8x32xbf16, #tpu.memory_space<vmem>>, vector<1x8x8x32xbf16>,
    return
  }
  func.func @transform_0(%arg0: i32, %arg1: i32, %arg2: i32) -> (i32, i32, i32, i32) {
    %c0_i32 = arith.constant 0 : i32
    %c0_i32_0 = arith.constant 0 : i32
    return %arg0, %arg1, %arg2, %c0_i32 : i32, i32, i32, i32
  }
  func.func @transform_1(%arg0: i32, %arg1: i32, %arg2: i32) -> (i32, i32, i32, i32, i32) {
    %c0_i32 = arith.constant 0 : i32
    %c0_i32_0 = arith.constant 0 : i32
    %c0_i32_1 = arith.constant 0 : i32
    %c0_i32_2 = arith.constant 0 : i32
    return %arg0, %arg1, %c0_i32, %c0_i32_0, %c0_i32_1 : i32, i32, i32, i32, i32
  }
  func.func @transform_2(%arg0: i32, %arg1: i32, %arg2: i32) -> (i32, i32, i32) {
    %c0_i32 = arith.constant 0 : i32
    %c0_i32_0 = arith.constant 0 : i32
    %c0_i32_1 = arith.constant 0 : i32
    %c0_i32_2 = arith.constant 0 : i32
    return %c0_i32, %c0_i32_0, %c0_i32_1 : i32, i32, i32
  }
  func.func @transform_3(%arg0: i32, %arg1: i32, %arg2: i32) -> (i32, i32, i32, i32) {
    %c0_i32 = arith.constant 0 : i32
    %c0_i32_0 = arith.constant 0 : i32
    %c0_i32_1 = arith.constant 0 : i32
    return %arg1, %arg2, %c0_i32, %c0_i32_0 : i32, i32, i32, i32
  }
  func.func @transform_4(%arg0: i32, %arg1: i32, %arg2: i32) -> (i32, i32) {
    %c0_i32 = arith.constant 0 : i32
    %c0_i32_0 = arith.constant 0 : i32
    %c0_i32_1 = arith.constant 0 : i32
    return %c0_i32, %c0_i32_0 : i32, i32
  }
  func.func @transform_5(%arg0: i32, %arg1: i32, %arg2: i32) -> (i32, i32) {
    %c0_i32 = arith.constant 0 : i32
    %c0_i32_0 = arith.constant 0 : i32
    %c0_i32_1 = arith.constant 0 : i32
    return %c0_i32, %c0_i32_0 : i32, i32
  }
  func.func @transform_6(%arg0: i32, %arg1: i32, %arg2: i32) -> (i32, i32, i32, i32) {
    %c0_i32 = arith.constant 0 : i32
    %c0_i32_0 = arith.constant 0 : i32
    return %arg0, %arg1, %arg2, %c0_i32 : i32, i32, i32, i32
  }
}

</mosaic_0001>

<llo_original>
// kernel: a_call__.2
$region0: #{a_call__.2}
  #allocation0 [shape = 'u32[]', space=smem, size = 0x4, offset = 0x4, fixed_abs, tag = 'smem constant byte address 0x4 - core index']
  #allocation1 [shape = 'u32[144,128]{1,0:T(1,128)}', space=vmem, size = 0x12000, scoped, tag = 'internal scratch']
  %s0 = inlined_call_operand.hbm [shape: f32[512,32], index: 0, kind: input, shape index: {}]
  %s1 = inlined_call_operand.vmem [shape: bf16[32,96], index: 1, kind: input, shape index: {}]
  %s2 = inlined_call_operand.vmem [shape: bf16[512,96], index: 2, kind: output, shape index: {}]
  %s3 = sld [smem:[#allocation0]]
  $region22: #{a_call__.2} parent=0
    _
  %s5 = ssub.s32 1, %s3
  %s6 = scalar_select 0, %s5, %s3
  $region1: #{a_call__.2} parent=0
    #allocation2 [shape = 'u8[262144]{0}', space=vmem, size = 0x40000, scoped, tag = 'input window, operand 0, single buffered']
    #allocation3 [shape = 's32[1]{0}', space=sflag, size = 0x4, scoped, tag = 'scoped memory for a_call__.2']
    %7 = vsyncpa [#allocation3], 0
    // Predicated region
    $region2: #{a_call__.2} parent=1 // pred_check
      _
    $region3: #{a_call__.2} parent=1 // pred_check_branch
      %9 = sbr.rel (0) target = $region5
    $region4: #{a_call__.2} parent=1 // pred_region
      %s11 = ssub.s32 8192, 8192
      %12 = vsyncadd [#allocation3], %s11
      %s13 = sshll.u32 [#allocation2], 4
      %s14 = int_to_ptr.vmem [resolvable:$true] %s13
      %19 = dma.hbm_to_vmem [thread:$0]  %s0, 8192, %s14, [#allocation3], 128, 128, 8
    $region5: #{a_call__.2} parent=1 // pred_fallthru
      _
    // Predicated region
    $region6: #{a_call__.2} parent=1 // pred_check
      _
    $region7: #{a_call__.2} parent=1 // pred_check_branch
      %21 = sbr.rel (0) target = $region9
    $region8: #{a_call__.2} parent=1 // pred_region
      _
    $region9: #{a_call__.2} parent=1 // pred_fallthru
      _
    // Predicated region
    $region10: #{a_call__.2} parent=1 // pred_check
      _
    $region11: #{a_call__.2} parent=1 // pred_check_branch
      %23 = sbr.rel (0) target = $region13
    $region12: #{a_call__.2} parent=1 // pred_region
      %24 = dma.done [#allocation3], 8192
    $region13: #{a_call__.2} parent=1 // pred_fallthru
      _
    %v26 = vld [vmem:[#allocation2] sm:$0xff]
    %v27 = vld [vmem:[#allocation2 + $0x8] sm:$0xff]
    %v28 = vld [vmem:[#allocation2 + $0x10] sm:$0xff]
    %v29 = vld [vmem:[#allocation2 + $0x18] sm:$0xff]
    %v30 = vld [vmem:[#allocation2 + $0x20] sm:$0xff]
    %v31 = vld [vmem:[#allocation2 + $0x28] sm:$0xff]
    %v32 = vld [vmem:[#allocation2 + $0x30] sm:$0xff]
    %v33 = vld [vmem:[#allocation2 + $0x38] sm:$0xff]
    %v34 = vld [vmem:[#allocation2 + $0x40] sm:$0xff]
    %v35 = vld [vmem:[#allocation2 + $0x48] sm:$0xff]
    %v36 = vld [vmem:[#allocation2 + $0x50] sm:$0xff]
    %v37 = vld [vmem:[#allocation2 + $0x58] sm:$0xff]
    %v38 = vld [vmem:[#allocation2 + $0x60] sm:$0xff]
    %v39 = vld [vmem:[#allocation2 + $0x68] sm:$0xff]
    %v40 = vld [vmem:[#allocation2 + $0x70] sm:$0xff]
    %v41 = vld [vmem:[#allocation2 + $0x78] sm:$0xff]
    %v42 = vld [vmem:[#allocation2 + $0x80] sm:$0xff]
    %v43 = vld [vmem:[#allocation2 + $0x88] sm:$0xff]
    %v44 = vld [vmem:[#allocation2 + $0x90] sm:$0xff]
    %v45 = vld [vmem:[#allocation2 + $0x98] sm:$0xff]
    %v46 = vld [vmem:[#allocation2 + $0xa0] sm:$0xff]
    %v47 = vld [vmem:[#allocation2 + $0xa8] sm:$0xff]
    %v48 = vld [vmem:[#allocation2 + $0xb0] sm:$0xff]
    %v49 = vld [vmem:[#allocation2 + $0xb8] sm:$0xff]
    %v50 = vld [vmem:[#allocation2 + $0xc0] sm:$0xff]
    %v51 = vld [vmem:[#allocation2 + $0xc8] sm:$0xff]
    %v52 = vld [vmem:[#allocation2 + $0xd0] sm:$0xff]
    %v53 = vld [vmem:[#allocation2 + $0xd8] sm:$0xff]
    %v54 = vld [vmem:[#allocation2 + $0xe0] sm:$0xff]
    %v55 = vld [vmem:[#allocation2 + $0xe8] sm:$0xff]
    %v56 = vld [vmem:[#allocation2 + $0xf0] sm:$0xff]
    %v57 = vld [vmem:[#allocation2 + $0xf8] sm:$0xff]
    %v58 = vld [vmem:[#allocation2 + $0x100] sm:$0xff]
    %v59 = vld [vmem:[#allocation2 + $0x108] sm:$0xff]
    %v60 = vld [vmem:[#allocation2 + $0x110] sm:$0xff]
    %v61 = vld [vmem:[#allocation2 + $0x118] sm:$0xff]
    %v62 = vld [vmem:[#allocation2 + $0x120] sm:$0xff]
    %v63 = vld [vmem:[#allocation2 + $0x128] sm:$0xff]
    %v64 = vld [vmem:[#allocation2 + $0x130] sm:$0xff]
    %v65 = vld [vmem:[#allocation2 + $0x138] sm:$0xff]
    %v66 = vld [vmem:[#allocation2 + $0x140] sm:$0xff]
    %v67 = vld [vmem:[#allocation2 + $0x148] sm:$0xff]
    %v68 = vld [vmem:[#allocation2 + $0x150] sm:$0xff]
    %v69 = vld [vmem:[#allocation2 + $0x158] sm:$0xff]
    %v70 = vld [vmem:[#allocation2 + $0x160] sm:$0xff]
    %v71 = vld [vmem:[#allocation2 + $0x168] sm:$0xff]
    %v72 = vld [vmem:[#allocation2 + $0x170] sm:$0xff]
    %v73 = vld [vmem:[#allocation2 + $0x178] sm:$0xff]
    %v74 = vld [vmem:[#allocation2 + $0x180] sm:$0xff]
    %v75 = vld [vmem:[#allocation2 + $0x188] sm:$0xff]
    %v76 = vld [vmem:[#allocation2 + $0x190] sm:$0xff]
    %v77 = vld [vmem:[#allocation2 + $0x198] sm:$0xff]
    %v78 = vld [vmem:[#allocation2 + $0x1a0] sm:$0xff]
    %v79 = vld [vmem:[#allocation2 + $0x1a8] sm:$0xff]
    %v80 = vld [vmem:[#allocation2 + $0x1b0] sm:$0xff]
    %v81 = vld [vmem:[#allocation2 + $0x1b8] sm:$0xff]
    %v82 = vld [vmem:[#allocation2 + $0x1c0] sm:$0xff]
    %v83 = vld [vmem:[#allocation2 + $0x1c8] sm:$0xff]
    %v84 = vld [vmem:[#allocation2 + $0x1d0] sm:$0xff]
    %v85 = vld [vmem:[#allocation2 + $0x1d8] sm:$0xff]
    %v86 = vld [vmem:[#allocation2 + $0x1e0] sm:$0xff]
    %v87 = vld [vmem:[#allocation2 + $0x1e8] sm:$0xff]
    %v88 = vld [vmem:[#allocation2 + $0x1f0] sm:$0xff]
    %v89 = vld [vmem:[#allocation2 + $0x1f8] sm:$0xff]
    %v90 = vpack.c.bf16 %v27, %v26
    %v91 = vpack.c.bf16 %v29, %v28
    %v92 = vpack.c.bf16 %v31, %v30
    %v93 = vpack.c.bf16 %v33, %v32
    %v94 = vpack.c.bf16 %v35, %v34
    %v95 = vpack.c.bf16 %v37, %v36
    %v96 = vpack.c.bf16 %v39, %v38
    %v97 = vpack.c.bf16 %v41, %v40
    %v98 = vpack.c.bf16 %v43, %v42
    %v99 = vpack.c.bf16 %v45, %v44
    %v100 = vpack.c.bf16 %v47, %v46
    %v101 = vpack.c.bf16 %v49, %v48
    %v102 = vpack.c.bf16 %v51, %v50
    %v103 = vpack.c.bf16 %v53, %v52
    %v104 = vpack.c.bf16 %v55, %v54
    %v105 = vpack.c.bf16 %v57, %v56
    %v106 = vpack.c.bf16 %v59, %v58
    %v107 = vpack.c.bf16 %v61, %v60
    %v108 = vpack.c.bf16 %v63, %v62
    %v109 = vpack.c.bf16 %v65, %v64
    %v110 = vpack.c.bf16 %v67, %v66
    %v111 = vpack.c.bf16 %v69, %v68
    %v112 = vpack.c.bf16 %v71, %v70
    %v113 = vpack.c.bf16 %v73, %v72
    %v114 = vpack.c.bf16 %v75, %v74
    %v115 = vpack.c.bf16 %v77, %v76
    %v116 = vpack.c.bf16 %v79, %v78
    %v117 = vpack.c.bf16 %v81, %v80
    %v118 = vpack.c.bf16 %v83, %v82
    %v119 = vpack.c.bf16 %v85, %v84
    %v120 = vpack.c.bf16 %v87, %v86
    %v121 = vpack.c.bf16 %v89, %v88
    %v122 = vld [vmem:[%s1] sm:$0xf]
    %v123 = vld [vmem:[%s1 + $0x4] sm:$0xf]
    %v124 = vld [vmem:[%s1 + $0x8] sm:$0xf]
    %v125 = vld [vmem:[%s1 + $0xc] sm:$0xf]
    %v130 = vunpack.c.l.b16 %v122
    %v131 = vunpack.c.l.b16 %v123
    %v132 = vunpack.c.l.b16 %v124
    %v133 = vunpack.c.l.b16 %v125
    %v134 = vpack.c.b16 %v131, %v130
    %v135 = vpack.c.b16 %v133, %v132
    %vm138 = vcmask 261120
    %v140 = vsel %vm138, %v90, 0
    %v143 = vsel %vm138, %v91, 0
    %v146 = vsel %vm138, %v92, 0
    %v149 = vsel %vm138, %v93, 0
    %v152 = vsel %vm138, %v94, 0
    %v155 = vsel %vm138, %v95, 0
    %v158 = vsel %vm138, %v96, 0
    %v161 = vsel %vm138, %v97, 0
    %v164 = vsel %vm138, %v98, 0
    %v167 = vsel %vm138, %v99, 0
    %v170 = vsel %vm138, %v100, 0
    %v173 = vsel %vm138, %v101, 0
    %v176 = vsel %vm138, %v102, 0
    %v179 = vsel %vm138, %v103, 0
    %v182 = vsel %vm138, %v104, 0
    %v185 = vsel %vm138, %v105, 0
    %v188 = vsel %vm138, %v106, 0
    %v191 = vsel %vm138, %v107, 0
    %v194 = vsel %vm138, %v108, 0
    %v197 = vsel %vm138, %v109, 0
    %v200 = vsel %vm138, %v110, 0
    %v203 = vsel %vm138, %v111, 0
    %v206 = vsel %vm138, %v112, 0
    %v209 = vsel %vm138, %v113, 0
    %v212 = vsel %vm138, %v114, 0
    %v215 = vsel %vm138, %v115, 0
    %v218 = vsel %vm138, %v116, 0
    %v221 = vsel %vm138, %v117, 0
    %v224 = vsel %vm138, %v118, 0
    %v227 = vsel %vm138, %v119, 0
    %v230 = vsel %vm138, %v120, 0
    %v233 = vsel %vm138, %v121, 0
    %235 = vmatprep.subr.bf16.mxu0 0
    %236 = vmatpush1.bf16.msra.mxu0 %v134
    %237 = vmatprep.subr.bf16.mxu0 0
    %238 = vmatpush1.bf16.msra.mxu0 %v135
    %239 = vmatprep.subr.bf16.mxu0 0
    %240 = vmatpush1.bf16.msra.mxu0 0
    %241 = vmatprep.subr.bf16.mxu0 0
    %242 = vmatpush1.bf16.msra.mxu0 0
    %243 = vmatprep.subr.bf16.mxu0 0
    %244 = vmatpush1.bf16.msra.mxu0 0
    %245 = vmatprep.subr.bf16.mxu0 0
    %246 = vmatpush1.bf16.msra.mxu0 0
    %247 = vmatprep.subr.bf16.mxu0 0
    %248 = vmatpush1.bf16.msra.mxu0 0
    %249 = vmatprep.subr.bf16.mxu0 0
    %250 = vmatpush1.bf16.msra.mxu0 0
    %251 = vmatprep.subr.bf16.mxu0 0
    %252 = vmatpush1.bf16.msra.mxu0 0
    %253 = vmatprep.subr.bf16.mxu0 0
    %254 = vmatpush1.bf16.msra.mxu0 0
    %255 = vmatprep.subr.bf16.mxu0 0
    %256 = vmatpush1.bf16.msra.mxu0 0
    %257 = vmatprep.subr.bf16.mxu0 0
    %258 = vmatpush1.bf16.msra.mxu0 0
    %259 = vmatprep.subr.bf16.mxu0 0
    %260 = vmatpush1.bf16.msra.mxu0 0
    %261 = vmatprep.subr.bf16.mxu0 0
    %262 = vmatpush1.bf16.msra.mxu0 0
    %263 = vmatprep.subr.bf16.mxu0 0
    %264 = vmatpush1.bf16.msra.mxu0 0
    %265 = vmatprep.subr.bf16.mxu0 0
    %266 = vmatpush1.bf16.msra.mxu0 0
    %267 = vmatprep.mubr.bf16.mxu0 0
    %268 = vmatmul.mubr.bf16.gmra.mrb[0].mxu0 %v140
    %v269 = vpop.f32.mrb[0].mxu0
    %v270 = vadd.f32 0.0, %v269
    %v271 = vpop.f32.mrb[0].mxu0
    %v272 = vpop.f32.mrb[0].mxu0
    %v273 = vadd.f32 0.0, %v272
    %v274 = vpop.f32.mrb[0].mxu0
    %275 = vmatprep.mubr.bf16.mxu0 0
    %276 = vmatmul.mubr.bf16.gmra.mrb[0].mxu0 %v143
    %v277 = vpop.f32.mrb[0].mxu0
    %v278 = vadd.f32 0.0, %v277
    %v279 = vpop.f32.mrb[0].mxu0
    %v280 = vpop.f32.mrb[0].mxu0
    %v281 = vadd.f32 0.0, %v280
    %v282 = vpop.f32.mrb[0].mxu0
    %283 = vmatprep.mubr.bf16.mxu0 0
    %284 = vmatmul.mubr.bf16.gmra.mrb[0].mxu0 %v146
    %v285 = vpop.f32.mrb[0].mxu0
    %v286 = vadd.f32 0.0, %v285
    %v287 = vpop.f32.mrb[0].mxu0
    %v288 = vpop.f32.mrb[0].mxu0
    %v289 = vadd.f32 0.0, %v288
    %v290 = vpop.f32.mrb[0].mxu0
    %291 = vmatprep.mubr.bf16.mxu0 0
    %292 = vmatmul.mubr.bf16.gmra.mrb[0].mxu0 %v149
    %v293 = vpop.f32.mrb[0].mxu0
    %v294 = vadd.f32 0.0, %v293
    %v295 = vpop.f32.mrb[0].mxu0
    %v296 = vpop.f32.mrb[0].mxu0
    %v297 = vadd.f32 0.0, %v296
    %v298 = vpop.f32.mrb[0].mxu0
    %299 = vmatprep.mubr.bf16.mxu0 0
    %300 = vmatmul.mubr.bf16.gmra.mrb[0].mxu0 %v152
    %v301 = vpop.f32.mrb[0].mxu0
    %v302 = vadd.f32 0.0, %v301
    %v303 = vpop.f32.mrb[0].mxu0
    %v304 = vpop.f32.mrb[0].mxu0
    %v305 = vadd.f32 0.0, %v304
    %v306 = vpop.f32.mrb[0].mxu0
    %307 = vmatprep.mubr.bf16.mxu0 0
    %308 = vmatmul.mubr.bf16.gmra.mrb[0].mxu0 %v155
    %v309 = vpop.f32.mrb[0].mxu0
    %v310 = vadd.f32 0.0, %v309
    %v311 = vpop.f32.mrb[0].mxu0
    %v312 = vpop.f32.mrb[0].mxu0
    %v313 = vadd.f32 0.0, %v312
    %v314 = vpop.f32.mrb[0].mxu0
    %315 = vmatprep.mubr.bf16.mxu0 0
    %316 = vmatmul.mubr.bf16.gmra.mrb[0].mxu0 %v158
    %v317 = vpop.f32.mrb[0].mxu0
    %v318 = vadd.f32 0.0, %v317
    %v319 = vpop.f32.mrb[0].mxu0
    %v320 = vpop.f32.mrb[0].mxu0
    %v321 = vadd.f32 0.0, %v320
    %v322 = vpop.f32.mrb[0].mxu0
    %323 = vmatprep.mubr.bf16.mxu0 0
    %324 = vmatmul.mubr.bf16.gmra.mrb[0].mxu0 %v161
    %v325 = vpop.f32.mrb[0].mxu0
    %v326 = vadd.f32 0.0, %v325
    %v327 = vpop.f32.mrb[0].mxu0
    %v328 = vpop.f32.mrb[0].mxu0
    %v329 = vadd.f32 0.0, %v328
    %v330 = vpop.f32.mrb[0].mxu0
    %331 = vmatprep.mubr.bf16.mxu0 0
    %332 = vmatmul.mubr.bf16.gmra.mrb[0].mxu0 %v164
    %v333 = vpop.f32.mrb[0].mxu0
    %v334 = vadd.f32 0.0, %v333
    %v335 = vpop.f32.mrb[0].mxu0
    %v336 = vpop.f32.mrb[0].mxu0
    %v337 = vadd.f32 0.0, %v336
    %v338 = vpop.f32.mrb[0].mxu0
    %339 = vmatprep.mubr.bf16.mxu0 0
    %340 = vmatmul.mubr.bf16.gmra.mrb[0].mxu0 %v167
    %v341 = vpop.f32.mrb[0].mxu0
    %v342 = vadd.f32 0.0, %v341
    %v343 = vpop.f32.mrb[0].mxu0
    %v344 = vpop.f32.mrb[0].mxu0
    %v345 = vadd.f32 0.0, %v344
    %v346 = vpop.f32.mrb[0].mxu0
    %347 = vmatprep.mubr.bf16.mxu0 0
    %348 = vmatmul.mubr.bf16.gmra.mrb[0].mxu0 %v170
    %v349 = vpop.f32.mrb[0].mxu0
    %v350 = vadd.f32 0.0, %v349
    %v351 = vpop.f32.mrb[0].mxu0
    %v352 = vpop.f32.mrb[0].mxu0
    %v353 = vadd.f32 0.0, %v352
    %v354 = vpop.f32.mrb[0].mxu0
    %355 = vmatprep.mubr.bf16.mxu0 0
    %356 = vmatmul.mubr.bf16.gmra.mrb[0].mxu0 %v173
    %v357 = vpop.f32.mrb[0].mxu0
    %v358 = vadd.f32 0.0, %v357
    %v359 = vpop.f32.mrb[0].mxu0
    %v360 = vpop.f32.mrb[0].mxu0
    %v361 = vadd.f32 0.0, %v360
    %v362 = vpop.f32.mrb[0].mxu0
    %363 = vmatprep.mubr.bf16.mxu0 0
    %364 = vmatmul.mubr.bf16.gmra.mrb[0].mxu0 %v176
    %v365 = vpop.f32.mrb[0].mxu0
    %v366 = vadd.f32 0.0, %v365
    %v367 = vpop.f32.mrb[0].mxu0
    %v368 = vpop.f32.mrb[0].mxu0
    %v369 = vadd.f32 0.0, %v368
    %v370 = vpop.f32.mrb[0].mxu0
    %371 = vmatprep.mubr.bf16.mxu0 0
    %372 = vmatmul.mubr.bf16.gmra.mrb[0].mxu0 %v179
    %v373 = vpop.f32.mrb[0].mxu0
    %v374 = vadd.f32 0.0, %v373
    %v375 = vpop.f32.mrb[0].mxu0
    %v376 = vpop.f32.mrb[0].mxu0
    %v377 = vadd.f32 0.0, %v376
    %v378 = vpop.f32.mrb[0].mxu0
    %379 = vmatprep.mubr.bf16.mxu0 0
    %380 = vmatmul.mubr.bf16.gmra.mrb[0].mxu0 %v182
    %v381 = vpop.f32.mrb[0].mxu0
    %v382 = vadd.f32 0.0, %v381
    %v383 = vpop.f32.mrb[0].mxu0
    %v384 = vpop.f32.mrb[0].mxu0
    %v385 = vadd.f32 0.0, %v384
    %v386 = vpop.f32.mrb[0].mxu0
    %387 = vmatprep.mubr.bf16.mxu0 0
    %388 = vmatmul.mubr.bf16.gmra.mrb[0].mxu0 %v185
    %v389 = vpop.f32.mrb[0].mxu0
    %v390 = vadd.f32 0.0, %v389
    %v391 = vpop.f32.mrb[0].mxu0
    %v392 = vpop.f32.mrb[0].mxu0
    %v393 = vadd.f32 0.0, %v392
    %v394 = vpop.f32.mrb[0].mxu0
    %395 = vmatprep.mubr.bf16.mxu0 0
    %396 = vmatmul.mubr.bf16.gmra.mrb[0].mxu0 %v188
    %v397 = vpop.f32.mrb[0].mxu0
    %v398 = vadd.f32 0.0, %v397
    %v399 = vpop.f32.mrb[0].mxu0
    %v400 = vpop.f32.mrb[0].mxu0
    %v401 = vadd.f32 0.0, %v400
    %v402 = vpop.f32.mrb[0].mxu0
    %403 = vmatprep.mubr.bf16.mxu0 0
    %404 = vmatmul.mubr.bf16.gmra.mrb[0].mxu0 %v191
    %v405 = vpop.f32.mrb[0].mxu0
    %v406 = vadd.f32 0.0, %v405
    %v407 = vpop.f32.mrb[0].mxu0
    %v408 = vpop.f32.mrb[0].mxu0
    %v409 = vadd.f32 0.0, %v408
    %v410 = vpop.f32.mrb[0].mxu0
    %411 = vmatprep.mubr.bf16.mxu0 0
    %412 = vmatmul.mubr.bf16.gmra.mrb[0].mxu0 %v194
    %v413 = vpop.f32.mrb[0].mxu0
    %v414 = vadd.f32 0.0, %v413
    %v415 = vpop.f32.mrb[0].mxu0
    %v416 = vpop.f32.mrb[0].mxu0
    %v417 = vadd.f32 0.0, %v416
    %v418 = vpop.f32.mrb[0].mxu0
    %419 = vmatprep.mubr.bf16.mxu0 0
    %420 = vmatmul.mubr.bf16.gmra.mrb[0].mxu0 %v197
    %v421 = vpop.f32.mrb[0].mxu0
    %v422 = vadd.f32 0.0, %v421
    %v423 = vpop.f32.mrb[0].mxu0
    %v424 = vpop.f32.mrb[0].mxu0
    %v425 = vadd.f32 0.0, %v424
    %v426 = vpop.f32.mrb[0].mxu0
    %427 = vmatprep.mubr.bf16.mxu0 0
    %428 = vmatmul.mubr.bf16.gmra.mrb[0].mxu0 %v200
    %v429 = vpop.f32.mrb[0].mxu0
    %v430 = vadd.f32 0.0, %v429
    %v431 = vpop.f32.mrb[0].mxu0
    %v432 = vpop.f32.mrb[0].mxu0
    %v433 = vadd.f32 0.0, %v432
    %v434 = vpop.f32.mrb[0].mxu0
    %435 = vmatprep.mubr.bf16.mxu0 0
    %436 = vmatmul.mubr.bf16.gmra.mrb[0].mxu0 %v203
    %v437 = vpop.f32.mrb[0].mxu0
    %v438 = vadd.f32 0.0, %v437
    %v439 = vpop.f32.mrb[0].mxu0
    %v440 = vpop.f32.mrb[0].mxu0
    %v441 = vadd.f32 0.0, %v440
    %v442 = vpop.f32.mrb[0].mxu0
    %443 = vmatprep.mubr.bf16.mxu0 0
    %444 = vmatmul.mubr.bf16.gmra.mrb[0].mxu0 %v206
    %v445 = vpop.f32.mrb[0].mxu0
    %v446 = vadd.f32 0.0, %v445
    %v447 = vpop.f32.mrb[0].mxu0
    %v448 = vpop.f32.mrb[0].mxu0
    %v449 = vadd.f32 0.0, %v448
    %v450 = vpop.f32.mrb[0].mxu0
    %451 = vmatprep.mubr.bf16.mxu0 0
    %452 = vmatmul.mubr.bf16.gmra.mrb[0].mxu0 %v209
    %v453 = vpop.f32.mrb[0].mxu0
    %v454 = vadd.f32 0.0, %v453
    %v455 = vpop.f32.mrb[0].mxu0
    %v456 = vpop.f32.mrb[0].mxu0
    %v457 = vadd.f32 0.0, %v456
    %v458 = vpop.f32.mrb[0].mxu0
    %459 = vmatprep.mubr.bf16.mxu0 0
    %460 = vmatmul.mubr.bf16.gmra.mrb[0].mxu0 %v212
    %v461 = vpop.f32.mrb[0].mxu0
    %v462 = vadd.f32 0.0, %v461
    %v463 = vpop.f32.mrb[0].mxu0
    %v464 = vpop.f32.mrb[0].mxu0
    %v465 = vadd.f32 0.0, %v464
    %v466 = vpop.f32.mrb[0].mxu0
    %467 = vmatprep.mubr.bf16.mxu0 0
    %468 = vmatmul.mubr.bf16.gmra.mrb[0].mxu0 %v215
    %v469 = vpop.f32.mrb[0].mxu0
    %v470 = vadd.f32 0.0, %v469
    %v471 = vpop.f32.mrb[0].mxu0
    %v472 = vpop.f32.mrb[0].mxu0
    %v473 = vadd.f32 0.0, %v472
    %v474 = vpop.f32.mrb[0].mxu0
    %475 = vmatprep.mubr.bf16.mxu0 0
    %476 = vmatmul.mubr.bf16.gmra.mrb[0].mxu0 %v218
    %v477 = vpop.f32.mrb[0].mxu0
    %v478 = vadd.f32 0.0, %v477
    %v479 = vpop.f32.mrb[0].mxu0
    %v480 = vpop.f32.mrb[0].mxu0
    %v481 = vadd.f32 0.0, %v480
    %v482 = vpop.f32.mrb[0].mxu0
    %483 = vmatprep.mubr.bf16.mxu0 0
    %484 = vmatmul.mubr.bf16.gmra.mrb[0].mxu0 %v221
    %v485 = vpop.f32.mrb[0].mxu0
    %v486 = vadd.f32 0.0, %v485
    %v487 = vpop.f32.mrb[0].mxu0
    %v488 = vpop.f32.mrb[0].mxu0
    %v489 = vadd.f32 0.0, %v488
    %v490 = vpop.f32.mrb[0].mxu0
    %491 = vmatprep.mubr.bf16.mxu0 0
    %492 = vmatmul.mubr.bf16.gmra.mrb[0].mxu0 %v224
    %v493 = vpop.f32.mrb[0].mxu0
    %v494 = vadd.f32 0.0, %v493
    %v495 = vpop.f32.mrb[0].mxu0
    %v496 = vpop.f32.mrb[0].mxu0
    %v497 = vadd.f32 0.0, %v496
    %v498 = vpop.f32.mrb[0].mxu0
    %499 = vmatprep.mubr.bf16.mxu0 0
    %500 = vmatmul.mubr.bf16.gmra.mrb[0].mxu0 %v227
    %v501 = vpop.f32.mrb[0].mxu0
    %v502 = vadd.f32 0.0, %v501
    %v503 = vpop.f32.mrb[0].mxu0
    %v504 = vpop.f32.mrb[0].mxu0
    %v505 = vadd.f32 0.0, %v504
    %v506 = vpop.f32.mrb[0].mxu0
    %507 = vmatprep.mubr.bf16.mxu0 0
    %508 = vmatmul.mubr.bf16.gmra.mrb[0].mxu0 %v230
    %v509 = vpop.f32.mrb[0].mxu0
    %v510 = vadd.f32 0.0, %v509
    %v511 = vpop.f32.mrb[0].mxu0
    %v512 = vpop.f32.mrb[0].mxu0
    %v513 = vadd.f32 0.0, %v512
    %v514 = vpop.f32.mrb[0].mxu0
    %515 = vmatprep.mubr.bf16.mxu0 0
    %516 = vmatmul.mubr.bf16.gmra.mrb[0].mxu0 %v233
    %v517 = vpop.f32.mrb[0].mxu0
    %v518 = vadd.f32 0.0, %v517
    %v519 = vpop.f32.mrb[0].mxu0
    %v520 = vpop.f32.mrb[0].mxu0
    %v521 = vadd.f32 0.0, %v520
    %v522 = vpop.f32.mrb[0].mxu0
    %523 = vdwg.mxu0
    %v524 = vpack.c.bf16 %v273, %v270
    %v525 = vpack.c.bf16 %v281, %v278
    %v526 = vpack.c.bf16 %v289, %v286
    %v527 = vpack.c.bf16 %v297, %v294
    %v528 = vpack.c.bf16 %v305, %v302
    %v529 = vpack.c.bf16 %v313, %v310
    %v530 = vpack.c.bf16 %v321, %v318
    %v531 = vpack.c.bf16 %v329, %v326
    %v532 = vpack.c.bf16 %v337, %v334
    %v533 = vpack.c.bf16 %v345, %v342
    %v534 = vpack.c.bf16 %v353, %v350
    %v535 = vpack.c.bf16 %v361, %v358
    %v536 = vpack.c.bf16 %v369, %v366
    %v537 = vpack.c.bf16 %v377, %v374
    %v538 = vpack.c.bf16 %v385, %v382
    %v539 = vpack.c.bf16 %v393, %v390
    %v540 = vpack.c.bf16 %v401, %v398
    %v541 = vpack.c.bf16 %v409, %v406
    %v542 = vpack.c.bf16 %v417, %v414
    %v543 = vpack.c.bf16 %v425, %v422
    %v544 = vpack.c.bf16 %v433, %v430
    %v545 = vpack.c.bf16 %v441, %v438
    %v546 = vpack.c.bf16 %v449, %v446
    %v547 = vpack.c.bf16 %v457, %v454
    %v548 = vpack.c.bf16 %v465, %v462
    %v549 = vpack.c.bf16 %v473, %v470
    %v550 = vpack.c.bf16 %v481, %v478
    %v551 = vpack.c.bf16 %v489, %v486
    %v552 = vpack.c.bf16 %v497, %v494
    %v553 = vpack.c.bf16 %v505, %v502
    %v554 = vpack.c.bf16 %v513, %v510
    %v555 = vpack.c.bf16 %v521, %v518
    %v588 = vunpack.c.l.b16 %v524
    %v589 = vunpack.c.h.b16 %v524
    %v590 = vunpack.c.l.b16 %v525
    %v591 = vunpack.c.h.b16 %v525
    %v592 = vunpack.c.l.b16 %v526
    %v593 = vunpack.c.h.b16 %v526
    %v594 = vunpack.c.l.b16 %v527
    %v595 = vunpack.c.h.b16 %v527
    %v596 = vunpack.c.l.b16 %v528
    %v597 = vunpack.c.h.b16 %v528
    %v598 = vunpack.c.l.b16 %v529
    %v599 = vunpack.c.h.b16 %v529
    %v600 = vunpack.c.l.b16 %v530
    %v601 = vunpack.c.h.b16 %v530
    %v602 = vunpack.c.l.b16 %v531
    %v603 = vunpack.c.h.b16 %v531
    %v604 = vunpack.c.l.b16 %v532
    %v605 = vunpack.c.h.b16 %v532
    %v606 = vunpack.c.l.b16 %v533
    %v607 = vunpack.c.h.b16 %v533
    %v608 = vunpack.c.l.b16 %v534
    %v609 = vunpack.c.h.b16 %v534
    %v610 = vunpack.c.l.b16 %v535
    %v611 = vunpack.c.h.b16 %v535
    %v612 = vunpack.c.l.b16 %v536
    %v613 = vunpack.c.h.b16 %v536
    %v614 = vunpack.c.l.b16 %v537
    %v615 = vunpack.c.h.b16 %v537
    %v616 = vunpack.c.l.b16 %v538
    %v617 = vunpack.c.h.b16 %v538
    %v618 = vunpack.c.l.b16 %v539
    %v619 = vunpack.c.h.b16 %v539
    %v620 = vunpack.c.l.b16 %v540
    %v621 = vunpack.c.h.b16 %v540
    %v622 = vunpack.c.l.b16 %v541
    %v623 = vunpack.c.h.b16 %v541
    %v624 = vunpack.c.l.b16 %v542
    %v625 = vunpack.c.h.b16 %v542
    %v626 = vunpack.c.l.b16 %v543
    %v627 = vunpack.c.h.b16 %v543
    %v628 = vunpack.c.l.b16 %v544
    %v629 = vunpack.c.h.b16 %v544
    %v630 = vunpack.c.l.b16 %v545
    %v631 = vunpack.c.h.b16 %v545
    %v632 = vunpack.c.l.b16 %v546
    %v633 = vunpack.c.h.b16 %v546
    %v634 = vunpack.c.l.b16 %v547
    %v635 = vunpack.c.h.b16 %v547
    %v636 = vunpack.c.l.b16 %v548
    %v637 = vunpack.c.h.b16 %v548
    %v638 = vunpack.c.l.b16 %v549
    %v639 = vunpack.c.h.b16 %v549
    %v640 = vunpack.c.l.b16 %v550
    %v641 = vunpack.c.h.b16 %v550
    %v642 = vunpack.c.l.b16 %v551
    %v643 = vunpack.c.h.b16 %v551
    %v644 = vunpack.c.l.b16 %v552
    %v645 = vunpack.c.h.b16 %v552
    %v646 = vunpack.c.l.b16 %v553
    %v647 = vunpack.c.h.b16 %v553
    %v648 = vunpack.c.l.b16 %v554
    %v649 = vunpack.c.h.b16 %v554
    %v650 = vunpack.c.l.b16 %v555
    %v651 = vunpack.c.h.b16 %v555
    %v652 = vpack.c.b16 %v588, %v588
    %v653 = vpack.c.b16 %v589, %v589
    %v654 = vpack.c.b16 %v590, %v590
    %v655 = vpack.c.b16 %v591, %v591
    %v656 = vpack.c.b16 %v592, %v592
    %v657 = vpack.c.b16 %v593, %v593
    %v658 = vpack.c.b16 %v594, %v594
    %v659 = vpack.c.b16 %v595, %v595
    %v660 = vpack.c.b16 %v596, %v596
    %v661 = vpack.c.b16 %v597, %v597
    %v662 = vpack.c.b16 %v598, %v598
    %v663 = vpack.c.b16 %v599, %v599
    %v664 = vpack.c.b16 %v600, %v600
    %v665 = vpack.c.b16 %v601, %v601
    %v666 = vpack.c.b16 %v602, %v602
    %v667 = vpack.c.b16 %v603, %v603
    %v668 = vpack.c.b16 %v604, %v604
    %v669 = vpack.c.b16 %v605, %v605
    %v670 = vpack.c.b16 %v606, %v606
    %v671 = vpack.c.b16 %v607, %v607
    %v672 = vpack.c.b16 %v608, %v608
    %v673 = vpack.c.b16 %v609, %v609
    %v674 = vpack.c.b16 %v610, %v610
    %v675 = vpack.c.b16 %v611, %v611
    %v676 = vpack.c.b16 %v612, %v612
    %v677 = vpack.c.b16 %v613, %v613
    %v678 = vpack.c.b16 %v614, %v614
    %v679 = vpack.c.b16 %v615, %v615
    %v680 = vpack.c.b16 %v616, %v616
    %v681 = vpack.c.b16 %v617, %v617
    %v682 = vpack.c.b16 %v618, %v618
    %v683 = vpack.c.b16 %v619, %v619
    %v684 = vpack.c.b16 %v620, %v620
    %v685 = vpack.c.b16 %v621, %v621
    %v686 = vpack.c.b16 %v622, %v622
    %v687 = vpack.c.b16 %v623, %v623
    %v688 = vpack.c.b16 %v624, %v624
    %v689 = vpack.c.b16 %v625, %v625
    %v690 = vpack.c.b16 %v626, %v626
    %v691 = vpack.c.b16 %v627, %v627
    %v692 = vpack.c.b16 %v628, %v628
    %v693 = vpack.c.b16 %v629, %v629
    %v694 = vpack.c.b16 %v630, %v630
    %v695 = vpack.c.b16 %v631, %v631
    %v696 = vpack.c.b16 %v632, %v632
    %v697 = vpack.c.b16 %v633, %v633
    %v698 = vpack.c.b16 %v634, %v634
    %v699 = vpack.c.b16 %v635, %v635
    %v700 = vpack.c.b16 %v636, %v636
    %v701 = vpack.c.b16 %v637, %v637
    %v702 = vpack.c.b16 %v638, %v638
    %v703 = vpack.c.b16 %v639, %v639
    %v704 = vpack.c.b16 %v640, %v640
    %v705 = vpack.c.b16 %v641, %v641
    %v706 = vpack.c.b16 %v642, %v642
    %v707 = vpack.c.b16 %v643, %v643
    %v708 = vpack.c.b16 %v644, %v644
    %v709 = vpack.c.b16 %v645, %v645
    %v710 = vpack.c.b16 %v646, %v646
    %v711 = vpack.c.b16 %v647, %v647
    %v712 = vpack.c.b16 %v648, %v648
    %v713 = vpack.c.b16 %v649, %v649
    %v714 = vpack.c.b16 %v650, %v650
    %v715 = vpack.c.b16 %v651, %v651
    %vm780 = vcmask 781312
    %781 = vst.msk [vmem:[%s2] sm:$0xf] %vm780, %v652
    %782 = vst.msk [vmem:[%s2 + $0x4] sm:$0xf] %vm780, %v653
    %783 = vst.msk [vmem:[%s2 + $0x8] sm:$0xf] %vm780, %v654
    %784 = vst.msk [vmem:[%s2 + $0xc] sm:$0xf] %vm780, %v655
    %785 = vst.msk [vmem:[%s2 + $0x10] sm:$0xf] %vm780, %v656
    %786 = vst.msk [vmem:[%s2 + $0x14] sm:$0xf] %vm780, %v657
    %787 = vst.msk [vmem:[%s2 + $0x18] sm:$0xf] %vm780, %v658
    %788 = vst.msk [vmem:[%s2 + $0x1c] sm:$0xf] %vm780, %v659
    %789 = vst.msk [vmem:[%s2 + $0x20] sm:$0xf] %vm780, %v660
    %790 = vst.msk [vmem:[%s2 + $0x24] sm:$0xf] %vm780, %v661
    %791 = vst.msk [vmem:[%s2 + $0x28] sm:$0xf] %vm780, %v662
    %792 = vst.msk [vmem:[%s2 + $0x2c] sm:$0xf] %vm780, %v663
    %793 = vst.msk [vmem:[%s2 + $0x30] sm:$0xf] %vm780, %v664
    %794 = vst.msk [vmem:[%s2 + $0x34] sm:$0xf] %vm780, %v665
    %795 = vst.msk [vmem:[%s2 + $0x38] sm:$0xf] %vm780, %v666
    %796 = vst.msk [vmem:[%s2 + $0x3c] sm:$0xf] %vm780, %v667
    %797 = vst.msk [vmem:[%s2 + $0x40] sm:$0xf] %vm780, %v668
    %798 = vst.msk [vmem:[%s2 + $0x44] sm:$0xf] %vm780, %v669
    %799 = vst.msk [vmem:[%s2 + $0x48] sm:$0xf] %vm780, %v670
    %800 = vst.msk [vmem:[%s2 + $0x4c] sm:$0xf] %vm780, %v671
    %801 = vst.msk [vmem:[%s2 + $0x50] sm:$0xf] %vm780, %v672
    %802 = vst.msk [vmem:[%s2 + $0x54] sm:$0xf] %vm780, %v673
    %803 = vst.msk [vmem:[%s2 + $0x58] sm:$0xf] %vm780, %v674
    %804 = vst.msk [vmem:[%s2 + $0x5c] sm:$0xf] %vm780, %v675
    %805 = vst.msk [vmem:[%s2 + $0x60] sm:$0xf] %vm780, %v676
    %806 = vst.msk [vmem:[%s2 + $0x64] sm:$0xf] %vm780, %v677
    %807 = vst.msk [vmem:[%s2 + $0x68] sm:$0xf] %vm780, %v678
    %808 = vst.msk [vmem:[%s2 + $0x6c] sm:$0xf] %vm780, %v679
    %809 = vst.msk [vmem:[%s2 + $0x70] sm:$0xf] %vm780, %v680
    %810 = vst.msk [vmem:[%s2 + $0x74] sm:$0xf] %vm780, %v681
    %811 = vst.msk [vmem:[%s2 + $0x78] sm:$0xf] %vm780, %v682
    %812 = vst.msk [vmem:[%s2 + $0x7c] sm:$0xf] %vm780, %v683
    %813 = vst.msk [vmem:[%s2 + $0x80] sm:$0xf] %vm780, %v684
    %814 = vst.msk [vmem:[%s2 + $0x84] sm:$0xf] %vm780, %v685
    %815 = vst.msk [vmem:[%s2 + $0x88] sm:$0xf] %vm780, %v686
    %816 = vst.msk [vmem:[%s2 + $0x8c] sm:$0xf] %vm780, %v687
    %817 = vst.msk [vmem:[%s2 + $0x90] sm:$0xf] %vm780, %v688
    %818 = vst.msk [vmem:[%s2 + $0x94] sm:$0xf] %vm780, %v689
    %819 = vst.msk [vmem:[%s2 + $0x98] sm:$0xf] %vm780, %v690
    %820 = vst.msk [vmem:[%s2 + $0x9c] sm:$0xf] %vm780, %v691
    %821 = vst.msk [vmem:[%s2 + $0xa0] sm:$0xf] %vm780, %v692
    %822 = vst.msk [vmem:[%s2 + $0xa4] sm:$0xf] %vm780, %v693
    %823 = vst.msk [vmem:[%s2 + $0xa8] sm:$0xf] %vm780, %v694
    %824 = vst.msk [vmem:[%s2 + $0xac] sm:$0xf] %vm780, %v695
    %825 = vst.msk [vmem:[%s2 + $0xb0] sm:$0xf] %vm780, %v696
    %826 = vst.msk [vmem:[%s2 + $0xb4] sm:$0xf] %vm780, %v697
    %827 = vst.msk [vmem:[%s2 + $0xb8] sm:$0xf] %vm780, %v698
    %828 = vst.msk [vmem:[%s2 + $0xbc] sm:$0xf] %vm780, %v699
    %829 = vst.msk [vmem:[%s2 + $0xc0] sm:$0xf] %vm780, %v700
    %830 = vst.msk [vmem:[%s2 + $0xc4] sm:$0xf] %vm780, %v701
    %831 = vst.msk [vmem:[%s2 + $0xc8] sm:$0xf] %vm780, %v702
    %832 = vst.msk [vmem:[%s2 + $0xcc] sm:$0xf] %vm780, %v703
    %833 = vst.msk [vmem:[%s2 + $0xd0] sm:$0xf] %vm780, %v704
    %834 = vst.msk [vmem:[%s2 + $0xd4] sm:$0xf] %vm780, %v705
    %835 = vst.msk [vmem:[%s2 + $0xd8] sm:$0xf] %vm780, %v706
    %836 = vst.msk [vmem:[%s2 + $0xdc] sm:$0xf] %vm780, %v707
    %837 = vst.msk [vmem:[%s2 + $0xe0] sm:$0xf] %vm780, %v708
    %838 = vst.msk [vmem:[%s2 + $0xe4] sm:$0xf] %vm780, %v709
    %839 = vst.msk [vmem:[%s2 + $0xe8] sm:$0xf] %vm780, %v710
    %840 = vst.msk [vmem:[%s2 + $0xec] sm:$0xf] %vm780, %v711
    %841 = vst.msk [vmem:[%s2 + $0xf0] sm:$0xf] %vm780, %v712
    %842 = vst.msk [vmem:[%s2 + $0xf4] sm:$0xf] %vm780, %v713
    %843 = vst.msk [vmem:[%s2 + $0xf8] sm:$0xf] %vm780, %v714
    %844 = vst.msk [vmem:[%s2 + $0xfc] sm:$0xf] %vm780, %v715
    // Predicated region
    $region14: #{a_call__.2} parent=1 // pred_check
      _
    $region15: #{a_call__.2} parent=1 // pred_check_branch
      %846 = sbr.rel (0) target = $region17
    $region16: #{a_call__.2} parent=1 // pred_region
      _
    $region17: #{a_call__.2} parent=1 // pred_fallthru
      _
    // Predicated region
    $region18: #{a_call__.2} parent=1 // pred_check
      _
    $region19: #{a_call__.2} parent=1 // pred_check_branch
      %848 = sbr.rel (0) target = $region21
    $region20: #{a_call__.2} parent=1 // pred_region
      _
    $region21: #{a_call__.2} parent=1 // pred_fallthru
      _
    %849 = vsyncpa [#allocation3], 1

// kernel: a_call__.3
$region0: #{a_call__.3}
  #allocation0 [shape = 'u32[]', space=smem, size = 0x4, offset = 0x4, fixed_abs, tag = 'smem constant byte address 0x4 - core index']
  #allocation1 [shape = 'u32[144,128]{1,0:T(1,128)}', space=vmem, size = 0x12000, scoped, tag = 'internal scratch']
  #allocation2 [shape = 'bf16[144,64]{1,0:T(16,128)(2,1)}', space=vmem, size = 0x9000, scoped, tag = 'scratch operand']
  #allocation3 [shape = 'bf16[64,32]{1,0:T(16,128)(2,1)}', space=vmem, size = 0x4000, scoped, tag = 'scratch operand']
  %s0 = inlined_call_operand.vmem [shape: bf16[2,16,16,96], index: 0, kind: input, shape index: {}]
  %s1 = inlined_call_operand.vmem [shape: bf16[2,2,12,20,64], index: 1, kind: input, shape index: {}]
  %s2 = inlined_call_operand.vmem [shape: f32[4,64,144], index: 2, kind: input, shape index: {}]
  %s3 = inlined_call_operand.vmem [shape: f32[2,2,1,144], index: 3, kind: input, shape index: {}]
  %s4 = inlined_call_operand.vmem [shape: bf16[32,32], index: 4, kind: input, shape index: {}]
  %s5 = inlined_call_operand.vmem [shape: f32[1,32], index: 5, kind: input, shape index: {}]
  %s6 = inlined_call_operand.hbm [shape: bf16[2,16,16,32], index: 6, kind: output, shape index: {}]
  %s7 = sld [smem:[#allocation0]]
  $region98: #{a_call__.3} parent=0
    _
  %s9 = ssub.s32 1, %s7
  %s10 = scalar_select 0, %s9, %s7
  $region1: #{a_call__.3} parent=0
    #allocation4 [shape = 'u8[32768]{0}', space=vmem, size = 0x8000, scoped, tag = 'input window, operand 0']
    #allocation5 [shape = 'u8[32768]{0}', space=vmem, size = 0x8000, scoped, tag = 'output window, operand 0']
    #allocation6 [shape = 's32[2]{0}', space=sflag, size = 0x8, scoped, tag = 'scoped memory for a_call__.3']
    %11 = vsyncpa [#allocation6], 0
    %s12 = scalar_lea.sflag [#allocation6], 1
    %13 = vsyncpa %s12, 0
    loop: start=0, step=1, limit=10
    $region2: #{a_call__.3} parent=1 // loop_pre_header
      _
    $region3: #{a_call__.3} parent=1 // loop_header
      %s15 = sphi 0, %s19
      %p16 = scmp.ge.s32.totalorder %s15, 10
      %s22 = sphi 0, %s41
      %s23 = sphi 0, %s37
      %s24 = sphi 0, %s33
      %s25 = sphi 0, %s22
      %s26 = sphi 0, %s23
      %s27 = sphi 0, %s24
      %s28 = sphi 0, %s25
      %s29 = sphi 0, %s26
      %s30 = sphi 0, %s27
      %s48 = sphi 0, %s50
      %s51 = sphi 0, %s48
      %s52 = sphi 0, %s51
      %s68 = sphi 0, %s52
      %s76 = sphi 0, %s78
      %s79 = sphi 0, %s76
      %s80 = sphi 0, %s79
      %s96 = sphi 0, %s80
      %s100 = sphi 0, %s100
      %s102 = sphi 0, %s100
      %s103 = sphi 0, %s102
      %s117 = sphi 0, %s103
      %s125 = sphi 0, %s127
      %s128 = sphi 0, %s125
      %s129 = sphi 0, %s128
      %s145 = sphi 0, %s129
      %s149 = sphi 0, %s149
      %s151 = sphi 0, %s149
      %s152 = sphi 0, %s151
      %s166 = sphi 0, %s152
      %s170 = sphi 0, %s170
      %s172 = sphi 0, %s170
      %s173 = sphi 0, %s172
      %s187 = sphi 0, %s173
      %s197 = sphi 0, %s199
      %s200 = sphi 0, %s197
      %s201 = sphi 0, %s200
      %s217 = sphi 0, %s201
    $region4: #{a_call__.3} parent=1 // loop_header_branch
      %18 = sbr.rel (%p16) target = $region8
    $region5: #{a_call__.3} parent=1 // loop_body
      %s20 = ssub.s32 %s15, 1
      %s21 = ssub.s32 %s15, 2
      %s31 = sadd.s32 1, %s24
      %p32 = scmp.ge.s32.totalorder %s31, 2
      %s33 = scalar_select %p32, 0, %s31
      %s34 = sadd.s32 1, %s23
      %s35 = scalar_select %p32, %s34, %s23
      %p36 = scmp.ge.s32.totalorder %s35, 2
      %s37 = scalar_select %p36, 0, %s35
      %s38 = sadd.s32 1, %s22
      %s39 = scalar_select %p36, %s38, %s22
      %p40 = scmp.ge.s32.totalorder %s39, 2
      %s41 = scalar_select %p40, 0, %s39
      %s42 = ssub.s32 %s22, %s41
      %s43 = ssub.s32 %s23, %s37
      %s44 = sor.u32 %s42, %s43
      %s45 = ssub.s32 %s24, %s33
      %s46 = sor.u32 %s44, %s45
      %p47 = scmp.eq.s32.totalorder %s46, 0
      %s49 = sadd.s32 %s48, 1
      %s50 = scalar_select %p47, %s48, %s49
      %p53 = pneg %p47
      %p54 = scmp.eq.s32.totalorder %s15, 7
      %p55 = por %p53, %p54
      %p56 = scmp.ne.s32.totalorder %s48, %s51
      %p57 = scmp.eq.s32.totalorder %s15, 0
      %p58 = por %p56, %p57
      %p59 = scmp.ne.s32.totalorder %s48, %s51
      %p60 = scmp.eq.s32.totalorder %s20, 7
      %p61 = por %p59, %p60
      %p62 = scmp.ne.s32.totalorder %s51, %s52
      %p63 = scmp.eq.s32.totalorder %s20, 0
      %p64 = por %p62, %p63
      %p65 = scmp.ne.s32.totalorder %s51, %s52
      %p66 = scmp.eq.s32.totalorder %s21, 7
      %p67 = por %p65, %p66
      %p69 = scmp.ne.s32.totalorder %s52, %s68
      %p70 = scmp.eq.s32.totalorder %s21, 0
      %p71 = por %p69, %p70
      %s72 = ssub.s32 %s22, %s41
      %s73 = ssub.s32 %s23, %s37
      %s74 = sor.u32 %s72, %s73
      %p75 = scmp.eq.s32.totalorder %s74, 0
      %s77 = sadd.s32 %s76, 1
      %s78 = scalar_select %p75, %s76, %s77
      %p81 = pneg %p75
      %p82 = scmp.eq.s32.totalorder %s15, 7
      %p83 = por %p81, %p82
      %p84 = scmp.ne.s32.totalorder %s76, %s79
      %p85 = scmp.eq.s32.totalorder %s15, 0
      %p86 = por %p84, %p85
      %p87 = scmp.ne.s32.totalorder %s76, %s79
      %p88 = scmp.eq.s32.totalorder %s20, 7
      %p89 = por %p87, %p88
      %p90 = scmp.ne.s32.totalorder %s79, %s80
      %p91 = scmp.eq.s32.totalorder %s20, 0
      %p92 = por %p90, %p91
      %p93 = scmp.ne.s32.totalorder %s79, %s80
      %p94 = scmp.eq.s32.totalorder %s21, 7
      %p95 = por %p93, %p94
      %p97 = scmp.ne.s32.totalorder %s80, %s96
      %p98 = scmp.eq.s32.totalorder %s21, 0
      %p99 = por %p97, %p98
      %s101 = sadd.s32 %s100, 1
      %p104 = scmp.eq.s32.totalorder %s15, 7
      %p105 = scmp.ne.s32.totalorder %s100, %s102
      %p106 = scmp.eq.s32.totalorder %s15, 0
      %p107 = por %p105, %p106
      %p108 = scmp.ne.s32.totalorder %s100, %s102
      %p109 = scmp.eq.s32.totalorder %s20, 7
      %p110 = por %p108, %p109
      %p111 = scmp.ne.s32.totalorder %s102, %s103
      %p112 = scmp.eq.s32.totalorder %s20, 0
      %p113 = por %p111, %p112
      %p114 = scmp.ne.s32.totalorder %s102, %s103
      %p115 = scmp.eq.s32.totalorder %s21, 7
      %p116 = por %p114, %p115
      %p118 = scmp.ne.s32.totalorder %s103, %s117
      %p119 = scmp.eq.s32.totalorder %s21, 0
      %p120 = por %p118, %p119
      %s121 = ssub.s32 %s23, %s37
      %s122 = ssub.s32 %s24, %s33
      %s123 = sor.u32 %s121, %s122
      %p124 = scmp.eq.s32.totalorder %s123, 0
      %s126 = sadd.s32 %s125, 1
      %s127 = scalar_select %p124, %s125, %s126
      %p130 = pneg %p124
      %p131 = scmp.eq.s32.totalorder %s15, 7
      %p132 = por %p130, %p131
      %p133 = scmp.ne.s32.totalorder %s125, %s128
      %p134 = scmp.eq.s32.totalorder %s15, 0
      %p135 = por %p133, %p134
      %p136 = scmp.ne.s32.totalorder %s125, %s128
      %p137 = scmp.eq.s32.totalorder %s20, 7
      %p138 = por %p136, %p137
      %p139 = scmp.ne.s32.totalorder %s128, %s129
      %p140 = scmp.eq.s32.totalorder %s20, 0
      %p141 = por %p139, %p140
      %p142 = scmp.ne.s32.totalorder %s128, %s129
      %p143 = scmp.eq.s32.totalorder %s21, 7
      %p144 = por %p142, %p143
      %p146 = scmp.ne.s32.totalorder %s129, %s145
      %p147 = scmp.eq.s32.totalorder %s21, 0
      %p148 = por %p146, %p147
      %s150 = sadd.s32 %s149, 1
      %p153 = scmp.eq.s32.totalorder %s15, 7
      %p154 = scmp.ne.s32.totalorder %s149, %s151
      %p155 = scmp.eq.s32.totalorder %s15, 0
      %p156 = por %p154, %p155
      %p157 = scmp.ne.s32.totalorder %s149, %s151
      %p158 = scmp.eq.s32.totalorder %s20, 7
      %p159 = por %p157, %p158
      %p160 = scmp.ne.s32.totalorder %s151, %s152
      %p161 = scmp.eq.s32.totalorder %s20, 0
      %p162 = por %p160, %p161
      %p163 = scmp.ne.s32.totalorder %s151, %s152
      %p164 = scmp.eq.s32.totalorder %s21, 7
      %p165 = por %p163, %p164
      %p167 = scmp.ne.s32.totalorder %s152, %s166
      %p168 = scmp.eq.s32.totalorder %s21, 0
      %p169 = por %p167, %p168
      %s171 = sadd.s32 %s170, 1
      %p174 = scmp.eq.s32.totalorder %s15, 7
      %p175 = scmp.ne.s32.totalorder %s170, %s172
      %p176 = scmp.eq.s32.totalorder %s15, 0
      %p177 = por %p175, %p176
      %p178 = scmp.ne.s32.totalorder %s170, %s172
      %p179 = scmp.eq.s32.totalorder %s20, 7
      %p180 = por %p178, %p179
      %p181 = scmp.ne.s32.totalorder %s172, %s173
      %p182 = scmp.eq.s32.totalorder %s20, 0
      %p183 = por %p181, %p182
      %p184 = scmp.ne.s32.totalorder %s172, %s173
      %p185 = scmp.eq.s32.totalorder %s21, 7
      %p186 = por %p184, %p185
      %p188 = scmp.ne.s32.totalorder %s173, %s187
      %p189 = scmp.eq.s32.totalorder %s21, 0
      %p190 = por %p188, %p189
      %s191 = ssub.s32 %s22, %s41
      %s192 = ssub.s32 %s23, %s37
      %s193 = sor.u32 %s191, %s192
      %s194 = ssub.s32 %s24, %s33
      %s195 = sor.u32 %s193, %s194
      %p196 = scmp.eq.s32.totalorder %s195, 0
      %s198 = sadd.s32 %s197, 1
      %s199 = scalar_select %p196, %s197, %s198
      %p202 = pneg %p196
      %p203 = scmp.eq.s32.totalorder %s15, 7
      %p204 = por %p202, %p203
      %p205 = scmp.ne.s32.totalorder %s197, %s200
      %p206 = scmp.eq.s32.totalorder %s15, 0
      %p207 = por %p205, %p206
      %p208 = scmp.ne.s32.totalorder %s197, %s200
      %p209 = scmp.eq.s32.totalorder %s20, 7
      %p210 = por %p208, %p209
      %p211 = scmp.ne.s32.totalorder %s200, %s201
      %p212 = scmp.eq.s32.totalorder %s20, 0
      %p213 = por %p211, %p212
      %p214 = scmp.ne.s32.totalorder %s200, %s201
      %p215 = scmp.eq.s32.totalorder %s21, 7
      %p216 = por %p214, %p215
      %p218 = scmp.ne.s32.totalorder %s201, %s217
      %p219 = scmp.eq.s32.totalorder %s21, 0
      %p220 = por %p218, %p219
      %p221 = scmp.le.s32.totalorder 1, %s15
      %p222 = scmp.lt.s32.totalorder %s15, 9
      %p223 = pnand %p221, %p222
      %p224 = pneg %p223
      // Predicated region
      $region9: #{a_call__.3} parent=5 // pred_check
        _
      $region10: #{a_call__.3} parent=5 // pred_check_branch
        %226 = sbr.rel (%p223) target = $region12
      $region11: #{a_call__.3} parent=5 // pred_region
        %s227 = ssub.s32 %s15, 1
        // Predicated region
        $region13: #{a_call__.3} parent=11 // pred_check
          %p228 = pneg %p113
        $region14: #{a_call__.3} parent=11 // pred_check_branch
          %230 = sbr.rel (%p228) target = $region16
        $region15: #{a_call__.3} parent=11 // pred_region
          _
        $region16: #{a_call__.3} parent=11 // pred_fallthru
          _
        // Predicated region
        $region17: #{a_call__.3} parent=11 // pred_check
          %p231 = pneg %p162
        $region18: #{a_call__.3} parent=11 // pred_check_branch
          %233 = sbr.rel (%p231) target = $region20
        $region19: #{a_call__.3} parent=11 // pred_region
          _
        $region20: #{a_call__.3} parent=11 // pred_fallthru
          _
        // Predicated region
        $region21: #{a_call__.3} parent=11 // pred_check
          %p234 = pneg %p183
        $region22: #{a_call__.3} parent=11 // pred_check_branch
          %236 = sbr.rel (%p234) target = $region24
        $region23: #{a_call__.3} parent=11 // pred_region
          _
        $region24: #{a_call__.3} parent=11 // pred_fallthru
          _
      $region12: #{a_call__.3} parent=5 // pred_fallthru
        _
      %p237 = scmp.lt.s32.totalorder %s15, 8
      // Predicated region
      $region25: #{a_call__.3} parent=5 // pred_check
        %p238 = pneg %p237
      $region26: #{a_call__.3} parent=5 // pred_check_branch
        %240 = sbr.rel (%p238) target = $region28
      $region27: #{a_call__.3} parent=5 // pred_region
        // Predicated region
        $region29: #{a_call__.3} parent=27 // pred_check
          %p241 = pneg %p58
        $region30: #{a_call__.3} parent=27 // pred_check_branch
          %243 = sbr.rel (%p241) target = $region32
        $region31: #{a_call__.3} parent=27 // pred_region
          %s244 = sand.u32 %s48, 1
          %s245 = sand.u32 %s48, 1
          %s246 = smul.addr %s245, 32
          %s247 = scalar_lea.vmem [#allocation4], %s246
          %s248 = smul.u32 8, %s23
          %s249 = smul.addr %s248, 2
          %s250 = sadd.s32 %s24, %s249
          %s251 = smul.addr %s22, 32
          %s252 = sadd.s32 %s250, %s251
          %s253 = smul.addr %s252, 4
          %s254 = scalar_lea.vmem %s0, %s253
          // Predicated region
          $region33: #{a_call__.3} parent=31 // pred_check
            _
          $region34: #{a_call__.3} parent=31 // pred_check_branch
            %256 = sbr.rel (0) target = $region36
          $region35: #{a_call__.3} parent=31 // pred_region
            // Predicated region
            $region37: #{a_call__.3} parent=35 // pred_check
              _
            $region38: #{a_call__.3} parent=35 // pred_check_branch
              %258 = sbr.rel target = $region40
            $region39: #{a_call__.3} parent=35 // pred_region
              // Predicated region
              $region52: #{a_call__.3} parent=39 // pred_check
                _
              $region53: #{a_call__.3} parent=39 // pred_check_branch
                %287 = sbr.rel (0) target = $region55
              $region54: #{a_call__.3} parent=39 // pred_region
                loop: start=0, step=1, limit=1
                $region56: #{a_call__.3} parent=54 // loop_pre_header
                  _
                $region57: #{a_call__.3} parent=54 // loop_header
                  %s289 = sphi 0, %s293
                  %p290 = scmp.ge.s32.totalorder %s289, 1
                  %s294 = sphi %s254, %s254
                  %s295 = sphi %s247, %s247
                $region58: #{a_call__.3} parent=54 // loop_header_branch
                  %292 = sbr.rel (%p290) target = $region62
                $region59: #{a_call__.3} parent=54 // loop_body
                  _
                $region60: #{a_call__.3} parent=54 // loop_footer
                  %s293 = sadd.s32 1, %s289
                $region61: #{a_call__.3} parent=54 // loop_footer_branch
                  %288 = sbr.rel target = $region57
                $region62: #{a_call__.3} parent=54 // loop_exit
                  _
                loop: start=0, step=1, limit=1
                $region63: #{a_call__.3} parent=54 // loop_pre_header
                  _
                $region64: #{a_call__.3} parent=54 // loop_header
                  %s298 = sphi 0, %s302
                  %p299 = scmp.ge.s32.totalorder %s298, 1
                  %s303 = sphi %s254, %s254
                  %s304 = sphi %s247, %s247
                $region65: #{a_call__.3} parent=54 // loop_header_branch
                  %301 = sbr.rel (%p299) target = $region69
                $region66: #{a_call__.3} parent=54 // loop_body
                  %v305 = vld [vmem:[%s303] sm:$0xf]
                  %306 = vst [vmem:[%s304] sm:$0xf] %v305
                  %v307 = vld [vmem:[%s303 + $0x8] sm:$0xf]
                  %308 = vst [vmem:[%s304 + $0x4] sm:$0xf] %v307
                  %v309 = vld [vmem:[%s303 + $0x10] sm:$0xf]
                  %310 = vst [vmem:[%s304 + $0x8] sm:$0xf] %v309
                  %v311 = vld [vmem:[%s303 + $0x18] sm:$0xf]
                  %312 = vst [vmem:[%s304 + $0xc] sm:$0xf] %v311
                  %v313 = vld [vmem:[%s303 + $0x20] sm:$0xf]
                  %314 = vst [vmem:[%s304 + $0x10] sm:$0xf] %v313
                  %v315 = vld [vmem:[%s303 + $0x28] sm:$0xf]
                  %316 = vst [vmem:[%s304 + $0x14] sm:$0xf] %v315
                  %v317 = vld [vmem:[%s303 + $0x30] sm:$0xf]
                  %318 = vst [vmem:[%s304 + $0x18] sm:$0xf] %v317
                  %v319 = vld [vmem:[%s303 + $0x38] sm:$0xf]
                  %320 = vst [vmem:[%s304 + $0x1c] sm:$0xf] %v319
                $region67: #{a_call__.3} parent=54 // loop_footer
                  %s302 = sadd.s32 1, %s298
                $region68: #{a_call__.3} parent=54 // loop_footer_branch
                  %297 = sbr.rel target = $region64
                $region69: #{a_call__.3} parent=54 // loop_exit
                  _
              $region55: #{a_call__.3} parent=39 // pred_fallthru
                _
            $region40: #{a_call__.3} parent=35 // pred_fallthru
              _
            // Predicated region
            $region41: #{a_call__.3} parent=35 // pred_check
              _
            $region42: #{a_call__.3} parent=35 // pred_check_branch
              %260 = sbr.rel (0) target = $region44
            $region43: #{a_call__.3} parent=35 // pred_region
              loop: start=0, step=1, limit=1
              $region45: #{a_call__.3} parent=43 // loop_pre_header
                _
              $region46: #{a_call__.3} parent=43 // loop_header
                %s263 = sphi 0, %s267
                %p264 = scmp.ge.s32.totalorder %s263, 1
                %s268 = sphi %s254, %s254
                %s269 = sphi %s247, %s247
              $region47: #{a_call__.3} parent=43 // loop_header_branch
                %266 = sbr.rel (%p264) target = $region51
              $region48: #{a_call__.3} parent=43 // loop_body
                %v270 = vld [vmem:[%s268] sm:$0xf]
                %271 = vst [vmem:[%s269] sm:$0xf] %v270
                %v272 = vld [vmem:[%s268 + $0x8] sm:$0xf]
                %273 = vst [vmem:[%s269 + $0x4] sm:$0xf] %v272
                %v274 = vld [vmem:[%s268 + $0x10] sm:$0xf]
                %275 = vst [vmem:[%s269 + $0x8] sm:$0xf] %v274
                %v276 = vld [vmem:[%s268 + $0x18] sm:$0xf]
                %277 = vst [vmem:[%s269 + $0xc] sm:$0xf] %v276
                %v278 = vld [vmem:[%s268 + $0x20] sm:$0xf]
                %279 = vst [vmem:[%s269 + $0x10] sm:$0xf] %v278
                %v280 = vld [vmem:[%s268 + $0x28] sm:$0xf]
                %281 = vst [vmem:[%s269 + $0x14] sm:$0xf] %v280
                %v282 = vld [vmem:[%s268 + $0x30] sm:$0xf]
                %283 = vst [vmem:[%s269 + $0x18] sm:$0xf] %v282
                %v284 = vld [vmem:[%s268 + $0x38] sm:$0xf]
                %285 = vst [vmem:[%s269 + $0x1c] sm:$0xf] %v284
              $region49: #{a_call__.3} parent=43 // loop_footer
                %s267 = sadd.s32 1, %s263
              $region50: #{a_call__.3} parent=43 // loop_footer_branch
                %262 = sbr.rel target = $region46
              $region51: #{a_call__.3} parent=43 // loop_exit
                _
            $region44: #{a_call__.3} parent=35 // pred_fallthru
              _
          $region36: #{a_call__.3} parent=31 // pred_fallthru
            _
          %321 = vnop
        $region32: #{a_call__.3} parent=27 // pred_fallthru
          _
        // Predicated region
        $region70: #{a_call__.3} parent=27 // pred_check
          %p322 = pneg %p86
        $region71: #{a_call__.3} parent=27 // pred_check_branch
          %324 = sbr.rel (%p322) target = $region73
        $region72: #{a_call__.3} parent=27 // pred_region
          %p325 = scmp.lt.s32.totalorder %s22, 1
          %s326 = scalar_select %p325, %s22, 1
          %p327 = scmp.lt.s32.totalorder %s23, 1
          %s328 = scalar_select %p327, %s23, 1
          %s329 = smul.addr %s328, 36
          %s330 = smul.addr %s326, 72
          %s331 = sadd.s32 %s329, %s330
          %s332 = smul.addr %s331, 4
          %s333 = scalar_lea.vmem %s1, %s332
        $region73: #{a_call__.3} parent=27 // pred_fallthru
          _
        // Predicated region
        $region74: #{a_call__.3} parent=27 // pred_check
          %p334 = pneg %p135
        $region75: #{a_call__.3} parent=27 // pred_check_branch
          %336 = sbr.rel (%p334) target = $region77
        $region76: #{a_call__.3} parent=27 // pred_region
          %p337 = scmp.lt.s32.totalorder %s23, 1
          %s338 = scalar_select %p337, %s23, 1
          %p339 = scmp.lt.s32.totalorder %s24, 1
          %s340 = scalar_select %p339, %s24, 1
          %s341 = smul.addr %s340, 2
          %s342 = smul.addr %s338, 4
          %s343 = sadd.s32 %s341, %s342
          %s344 = scalar_lea.vmem %s3, %s343
        $region77: #{a_call__.3} parent=27 // pred_fallthru
          _
      $region28: #{a_call__.3} parent=5 // pred_fallthru
        _
      %p345 = scmp.le.s32.totalorder 1, %s15
      %p346 = scmp.lt.s32.totalorder %s15, 9
      %p347 = pnand %p345, %p346
      %p348 = pneg %p347
      // Predicated region
      $region78: #{a_call__.3} parent=5 // pred_check
        _
      $region79: #{a_call__.3} parent=5 // pred_check_branch
        %350 = sbr.rel (%p347) target = $region81
      $region80: #{a_call__.3} parent=5 // pred_region
        %s351 = ssub.s32 %s15, 1
        %s352 = sand.u32 %s51, 1
        %s353 = sand.u32 %s51, 1
        %s354 = smul.addr %s353, 32
        %s355 = scalar_lea.vmem [#allocation4], %s354
        // Predicated region
        $region82: #{a_call__.3} parent=80 // pred_check
          %p356 = pneg %p64
        $region83: #{a_call__.3} parent=80 // pred_check_branch
          %358 = sbr.rel (%p356) target = $region85
        $region84: #{a_call__.3} parent=80 // pred_region
          _
        $region85: #{a_call__.3} parent=80 // pred_fallthru
          _
        %s359 = sand.u32 %s51, 1
        %s360 = sand.u32 %s51, 1
        %s361 = smul.addr %s360, 32
        %s362 = scalar_lea.vmem [#allocation4], %s361
        %p363 = pneg %p64
        %p364 = pneg %p61
        %p365 = scmp.lt.s32.totalorder %s25, 1
        %s366 = scalar_select %p365, %s25, 1
        %p367 = scmp.lt.s32.totalorder %s26, 1
        %s368 = scalar_select %p367, %s26, 1
        %s369 = smul.addr %s368, 36
        %s370 = smul.addr %s366, 72
        %s371 = sadd.s32 %s369, %s370
        %s372 = smul.addr %s371, 4
        %s373 = scalar_lea.vmem %s1, %s372
        %p374 = pneg %p92
        %p375 = pneg %p89
        %p376 = pneg %p113
        %p377 = pneg %p110
        %p378 = scmp.lt.s32.totalorder %s26, 1
        %s379 = scalar_select %p378, %s26, 1
        %p380 = scmp.lt.s32.totalorder %s27, 1
        %s381 = scalar_select %p380, %s27, 1
        %s382 = smul.addr %s381, 2
        %s383 = smul.addr %s379, 4
        %s384 = sadd.s32 %s382, %s383
        %s385 = scalar_lea.vmem %s3, %s384
        %p386 = pneg %p141
        %p387 = pneg %p138
        %p388 = pneg %p162
        %p389 = pneg %p159
        %p390 = pneg %p183
        %p391 = pneg %p180
        %p392 = pneg %p213
        %p393 = pneg %p210
        %s394 = sand.u32 %s200, 1
        %s395 = scalar_lea.sflag [#allocation6], %s394
        %s396 = sand.u32 %s200, 1
        %s397 = smul.addr %s396, 32
        %s398 = scalar_lea.vmem [#allocation5], %s397
        %s399 = smul.u32 8, %s26
        %p400 = scmp.lt.s32.totalorder %s25, 1
        %s401 = scalar_select %p400, %s25, 1
        %p402 = scmp.lt.s32.totalorder %s26, 1
        %s403 = scalar_select %p402, %s26, 1
        %s404 = smul.addr %s403, 36
        %s405 = smul.addr %s401, 72
        %s406 = sadd.s32 %s404, %s405
        %s407 = smul.addr %s406, 4
        %s408 = scalar_lea.vmem %s1, %s407
        %p409 = scmp.lt.s32.totalorder %s26, 1
        %s410 = scalar_select %p409, %s26, 1
        %p411 = scmp.lt.s32.totalorder %s27, 1
        %s412 = scalar_select %p411, %s27, 1
        %s413 = smul.addr %s412, 2
        %s414 = smul.addr %s410, 4
        %s415 = sadd.s32 %s413, %s414
        %s416 = scalar_lea.vmem %s3, %s415
        %s417 = smul.u32 8, %s26
        %s419 = smul.u32 %s27, 8
        %s420 = sshra.s32 %s419, 3
        %s421 = sand.u32 %s419, 7
        %s422 = smul.addr %s420, 4
        %s423 = scalar_lea.vmem %s408, %s422
        %v424 = vld [vmem:[%s423] sm:$0xf]
        %v425 = vld [vmem:[%s423 + $0x4] sm:$0x3]
        %v428 = vunpack.c.l.b16 %v424
        %v429 = vunpack.c.l.b16 %v425
        %v430 = vpack.c.b16 %v429, %v428
        %vm432 = vcmask 521216
        %433 = vst.msk [vmem:[#allocation2] sm:$0x3f] %vm432, %v430
        %s434 = sadd.s32 %s420, 3
        %s435 = smul.addr %s434, 4
        %s436 = scalar_lea.vmem %s408, %s435
        %v437 = vld [vmem:[%s436] sm:$0xf]
        %v438 = vld [vmem:[%s436 + $0x4] sm:$0x3]
        %v441 = vunpack.c.l.b16 %v437
        %v442 = vunpack.c.l.b16 %v438
        %v443 = vpack.c.b16 %v442, %v441
        %v444 = vrot.slane %v443, 2
        %vm446 = vcmask 523270
        %447 = vst.msk [vmem:[#allocation2] sm:$0xc0] %vm446, %v444
        %vm448 = vcmask 519168
        %449 = vst.msk [vmem:[#allocation2 + $0x8] sm:$0xf] %vm448, %v444
        %s450 = sadd.s32 %s420, 6
        %s451 = smul.addr %s450, 4
        %s452 = scalar_lea.vmem %s408, %s451
        %v453 = vld [vmem:[%s452] sm:$0xf]
        %v454 = vld [vmem:[%s452 + $0x4] sm:$0x3]
        %v457 = vunpack.c.l.b16 %v453
        %v458 = vunpack.c.l.b16 %v454
        %v459 = vpack.c.b16 %v457, %v457
        %v460 = vpack.c.b16 %v458, %v458
        %vm463 = vcmask 523268
        %464 = vst.msk [vmem:[#allocation2 + $0x8] sm:$0xf0] %vm463, %v459
        %vm465 = vcmask 517120
        %466 = vst.msk [vmem:[#allocation2 + $0x10] sm:$0x3] %vm465, %v460
        %s467 = sadd.s32 %s420, 9
        %s468 = smul.addr %s467, 4
        %s469 = scalar_lea.vmem %s408, %s468
        %v470 = vld [vmem:[%s469] sm:$0xf]
        %v471 = vld [vmem:[%s469 + $0x4] sm:$0x3]
        %v474 = vunpack.c.l.b16 %v470
        %v475 = vunpack.c.l.b16 %v471
        %v476 = vpack.c.b16 %v475, %v474
        %v477 = vrot.slane %v476, 6
        %vm479 = vcmask 523266
        %480 = vst.msk [vmem:[#allocation2 + $0x10] sm:$0xfc] %vm479, %v477
        %s481 = sadd.s32 %s420, 12
        %s482 = smul.addr %s481, 4
        %s483 = scalar_lea.vmem %s408, %s482
        %v484 = vld [vmem:[%s483] sm:$0xf]
        %v485 = vld [vmem:[%s483 + $0x4] sm:$0x3]
        %v488 = vunpack.c.l.b16 %v484
        %v489 = vunpack.c.l.b16 %v485
        %v490 = vpack.c.b16 %v489, %v488
        %492 = vst.msk [vmem:[#allocation2 + $0x18] sm:$0x3f] %vm432, %v490
        %s493 = sadd.s32 %s420, 15
        %s494 = smul.addr %s493, 4
        %s495 = scalar_lea.vmem %s408, %s494
        %v496 = vld [vmem:[%s495] sm:$0xf]
        %v497 = vld [vmem:[%s495 + $0x4] sm:$0x3]
        %v500 = vunpack.c.l.b16 %v496
        %v501 = vunpack.c.l.b16 %v497
        %v502 = vpack.c.b16 %v501, %v500
        %v503 = vrot.slane %v502, 2
        %505 = vst.msk [vmem:[#allocation2 + $0x18] sm:$0xc0] %vm446, %v503
        %506 = vst.msk [vmem:[#allocation2 + $0x20] sm:$0xf] %vm448, %v503
        %s507 = sadd.s32 %s420, 18
        %s508 = smul.addr %s507, 4
        %s509 = scalar_lea.vmem %s408, %s508
        %v510 = vld [vmem:[%s509] sm:$0xf]
        %v511 = vld [vmem:[%s509 + $0x4] sm:$0x3]
        %v514 = vunpack.c.l.b16 %v510
        %v515 = vunpack.c.l.b16 %v511
        %v516 = vpack.c.b16 %v514, %v514
        %v517 = vpack.c.b16 %v515, %v515
        %520 = vst.msk [vmem:[#allocation2 + $0x20] sm:$0xf0] %vm463, %v516
        %521 = vst.msk [vmem:[#allocation2 + $0x28] sm:$0x3] %vm465, %v517
        %s522 = sadd.s32 %s420, 21
        %s523 = smul.addr %s522, 4
        %s524 = scalar_lea.vmem %s408, %s523
        %v525 = vld [vmem:[%s524] sm:$0xf]
        %v526 = vld [vmem:[%s524 + $0x4] sm:$0x3]
        %v529 = vunpack.c.l.b16 %v525
        %v530 = vunpack.c.l.b16 %v526
        %v531 = vpack.c.b16 %v530, %v529
        %v532 = vrot.slane %v531, 6
        %534 = vst.msk [vmem:[#allocation2 + $0x28] sm:$0xfc] %vm479, %v532
        %s535 = sadd.s32 %s420, 24
        %s536 = smul.addr %s535, 4
        %s537 = scalar_lea.vmem %s408, %s536
        %v538 = vld [vmem:[%s537] sm:$0xf]
        %v539 = vld [vmem:[%s537 + $0x4] sm:$0x3]
        %v542 = vunpack.c.l.b16 %v538
        %v543 = vunpack.c.l.b16 %v539
        %v544 = vpack.c.b16 %v543, %v542
        %546 = vst.msk [vmem:[#allocation2 + $0x30] sm:$0x3f] %vm432, %v544
        %s547 = sadd.s32 %s420, 27
        %s548 = smul.addr %s547, 4
        %s549 = scalar_lea.vmem %s408, %s548
        %v550 = vld [vmem:[%s549] sm:$0xf]
        %v551 = vld [vmem:[%s549 + $0x4] sm:$0x3]
        %v554 = vunpack.c.l.b16 %v550
        %v555 = vunpack.c.l.b16 %v551
        %v556 = vpack.c.b16 %v555, %v554
        %v557 = vrot.slane %v556, 2
        %559 = vst.msk [vmem:[#allocation2 + $0x30] sm:$0xc0] %vm446, %v557
        %560 = vst.msk [vmem:[#allocation2 + $0x38] sm:$0xf] %vm448, %v557
        %s561 = sadd.s32 %s420, 30
        %s562 = smul.addr %s561, 4
        %s563 = scalar_lea.vmem %s408, %s562
        %v564 = vld [vmem:[%s563] sm:$0xf]
        %v565 = vld [vmem:[%s563 + $0x4] sm:$0x3]
        %v568 = vunpack.c.l.b16 %v564
        %v569 = vunpack.c.l.b16 %v565
        %v570 = vpack.c.b16 %v568, %v568
        %v571 = vpack.c.b16 %v569, %v569
        %574 = vst.msk [vmem:[#allocation2 + $0x38] sm:$0xf0] %vm463, %v570
        %575 = vst.msk [vmem:[#allocation2 + $0x40] sm:$0x3] %vm465, %v571
        %s576 = sadd.s32 %s420, 33
        %s577 = smul.addr %s576, 4
        %s578 = scalar_lea.vmem %s408, %s577
        %v579 = vld [vmem:[%s578] sm:$0xf]
        %v580 = vld [vmem:[%s578 + $0x4] sm:$0x3]
        %v583 = vunpack.c.l.b16 %v579
        %v584 = vunpack.c.l.b16 %v580
        %v585 = vpack.c.b16 %v584, %v583
        %v586 = vrot.slane %v585, 6
        %588 = vst.msk [vmem:[#allocation2 + $0x40] sm:$0xfc] %vm479, %v586
        %v589 = vld [vmem:[%s355] sm:$0xf]
        %v590 = vld [vmem:[%s355 + $0x4] sm:$0xf]
        %v591 = vld [vmem:[%s355 + $0x8] sm:$0xf]
        %v592 = vld [vmem:[%s355 + $0xc] sm:$0xf]
        %v593 = vld [vmem:[%s355 + $0x10] sm:$0xf]
        %v594 = vld [vmem:[%s355 + $0x14] sm:$0xf]
        %v595 = vld [vmem:[%s355 + $0x18] sm:$0xf]
        %v596 = vld [vmem:[%s355 + $0x1c] sm:$0xf]
        %v597 = vld [vmem:[%s416] sm:$0x3]
        %v598 = vld [vmem:[#allocation2] sm:$0xff]
        %v599 = vld [vmem:[#allocation2 + $0x8] sm:$0xff]
        %v600 = vld [vmem:[#allocation2 + $0x10] sm:$0xff]
        %v601 = vld [vmem:[#allocation2 + $0x18] sm:$0xff]
        %v602 = vld [vmem:[#allocation2 + $0x20] sm:$0xff]
        %v603 = vld [vmem:[#allocation2 + $0x28] sm:$0xff]
        %v604 = vld [vmem:[#allocation2 + $0x30] sm:$0xff]
        %v605 = vld [vmem:[#allocation2 + $0x38] sm:$0xff]
        %v606 = vld [vmem:[#allocation2 + $0x40] sm:$0xff]
        %v607 = vld [vmem:[%s2] sm:$0xff]
        %v608 = vld [vmem:[%s2 + $0x8] sm:$0xff]
        %v609 = vld [vmem:[%s2 + $0x10] sm:$0xff]
        %v610 = vld [vmem:[%s2 + $0x18] sm:$0xff]
        %v611 = vld [vmem:[%s2 + $0x20] sm:$0xff]
        %v612 = vld [vmem:[%s2 + $0x28] sm:$0xff]
        %v613 = vld [vmem:[%s2 + $0x30] sm:$0xff]
        %v614 = vld [vmem:[%s2 + $0x38] sm:$0xff]
        %v615 = vld [vmem:[%s2 + $0x40] sm:$0xff]
        %v616 = vld [vmem:[%s2 + $0x48] sm:$0xff]
        %v617 = vld [vmem:[%s2 + $0x50] sm:$0xff]
        %v618 = vld [vmem:[%s2 + $0x58] sm:$0xff]
        %v619 = vld [vmem:[%s2 + $0x60] sm:$0xff]
        %v620 = vld [vmem:[%s2 + $0x68] sm:$0xff]
        %v621 = vld [vmem:[%s2 + $0x70] sm:$0xff]
        %v622 = vld [vmem:[%s2 + $0x78] sm:$0xff]
        %v631 = vunpack.c.l.b16 %v589
        %v632 = vunpack.c.l.b16 %v590
        %v633 = vunpack.c.l.b16 %v591
        %v634 = vunpack.c.l.b16 %v592
        %v635 = vunpack.c.l.b16 %v593
        %v636 = vunpack.c.l.b16 %v594
        %v637 = vunpack.c.l.b16 %v595
        %v638 = vunpack.c.l.b16 %v596
        %v639 = vpack.c.b16 %v632, %v631
        %v640 = vpack.c.b16 %v634, %v633
        %v641 = vpack.c.b16 %v636, %v635
        %v642 = vpack.c.b16 %v638, %v637
        %vm643 = vcmask 64512
        %v645 = vsel %vm643, %v639, 0
        %v648 = vsel %vm643, %v640, 0
        %v651 = vsel %vm643, %v641, 0
        %v654 = vsel %vm643, %v642, 0
        %v657 = vsel %vm643, %v598, 0
        %v660 = vsel %vm643, %v599, 0
        %v663 = vsel %vm643, %v600, 0
        %v666 = vsel %vm643, %v601, 0
        %v669 = vsel %vm643, %v602, 0
        %v672 = vsel %vm643, %v603, 0
        %v675 = vsel %vm643, %v604, 0
        %v678 = vsel %vm643, %v605, 0
        %v681 = vsel %vm643, %v606, 0
        %683 = vmatprep.subr.bf16.mxu0 0
        %684 = vmatpush1.bf16.xpose.msra.mxu0 %v657
        %685 = vmatprep.subr.bf16.mxu0 0
        %686 = vmatpush1.bf16.xpose.msra.mxu0 %v660
        %687 = vmatprep.subr.bf16.mxu0 0
        %688 = vmatpush1.bf16.xpose.msra.mxu0 %v663
        %689 = vmatprep.subr.bf16.mxu0 0
        %690 = vmatpush1.bf16.xpose.msra.mxu0 %v666
        %691 = vmatprep.subr.bf16.mxu0 0
        %692 = vmatpush1.bf16.xpose.msra.mxu0 %v669
        %693 = vmatprep.subr.bf16.mxu0 0
        %694 = vmatpush1.bf16.xpose.msra.mxu0 %v672
        %695 = vmatprep.subr.bf16.mxu0 0
        %696 = vmatpush1.bf16.xpose.msra.mxu0 %v675
        %697 = vmatprep.subr.bf16.mxu0 0
        %698 = vmatpush1.bf16.xpose.msra.mxu0 %v678
        %699 = vmatprep.subr.bf16.mxu0 0
        %700 = vmatpush1.bf16.xpose.msra.mxu0 %v681
        %701 = vmatprep.subr.bf16.mxu0 0
        %702 = vmatpush1.bf16.xpose.msra.mxu0 0
        %703 = vmatprep.subr.bf16.mxu0 0
        %704 = vmatpush1.bf16.xpose.msra.mxu0 0
        %705 = vmatprep.subr.bf16.mxu0 0
        %706 = vmatpush1.bf16.xpose.msra.mxu0 0
        %707 = vmatprep.subr.bf16.mxu0 0
        %708 = vmatpush1.bf16.xpose.msra.mxu0 0
        %709 = vmatprep.subr.bf16.mxu0 0
        %710 = vmatpush1.bf16.xpose.msra.mxu0 0
        %711 = vmatprep.subr.bf16.mxu0 0
        %712 = vmatpush1.bf16.xpose.msra.mxu0 0
        %713 = vmatprep.subr.bf16.mxu0 0
        %714 = vmatpush1.bf16.xpose.msra.mxu0 0
        %715 = vmatprep.mubr.bf16.mxu0 0
        %716 = vmatmul.mubr.bf16.gmra.mrb[0].mxu0 %v645
        %v717 = vpop.f32.mrb[0].mxu0
        %v718 = vadd.f32 %v607, %v717
        %v719 = vpop.f32.mrb[0].mxu0
        %v720 = vadd.f32 %v608, %v719
        %v721 = vpop.f32.mrb[0].mxu0
        %v722 = vadd.f32 %v609, %v721
        %v723 = vpop.f32.mrb[0].mxu0
        %v724 = vadd.f32 %v610, %v723
        %725 = vmatprep.mubr.bf16.mxu0 0
        %726 = vmatmul.mubr.bf16.gmra.mrb[0].mxu0 %v648
        %v727 = vpop.f32.mrb[0].mxu0
        %v728 = vadd.f32 %v611, %v727
        %v729 = vpop.f32.mrb[0].mxu0
        %v730 = vadd.f32 %v612, %v729
        %v731 = vpop.f32.mrb[0].mxu0
        %v732 = vadd.f32 %v613, %v731
        %v733 = vpop.f32.mrb[0].mxu0
        %v734 = vadd.f32 %v614, %v733
        %735 = vmatprep.mubr.bf16.mxu0 0
        %736 = vmatmul.mubr.bf16.gmra.mrb[0].mxu0 %v651
        %v737 = vpop.f32.mrb[0].mxu0
        %v738 = vadd.f32 %v615, %v737
        %v739 = vpop.f32.mrb[0].mxu0
        %v740 = vadd.f32 %v616, %v739
        %v741 = vpop.f32.mrb[0].mxu0
        %v742 = vadd.f32 %v617, %v741
        %v743 = vpop.f32.mrb[0].mxu0
        %v744 = vadd.f32 %v618, %v743
        %745 = vmatprep.mubr.bf16.mxu0 0
        %746 = vmatmul.mubr.bf16.gmra.mrb[0].mxu0 %v654
        %v747 = vpop.f32.mrb[0].mxu0
        %v748 = vadd.f32 %v619, %v747
        %v749 = vpop.f32.mrb[0].mxu0
        %v750 = vadd.f32 %v620, %v749
        %v751 = vpop.f32.mrb[0].mxu0
        %v752 = vadd.f32 %v621, %v751
        %v753 = vpop.f32.mrb[0].mxu0
        %v754 = vadd.f32 %v622, %v753
        %755 = vdwg.mxu0
        %v757 = vlaneseq
        %v758 = vshrl.u32 %v757, 7
        %v759 = vsub.s32 0, %v758
        %v760 = vrot.slane %v597, %v759
        %v761 = vlaneseq
        %v762 = vshrl.u32 %v761, 7
        %v763 = vsub.s32 1, %v762
        %v764 = vrot.slane %v597, %v763
        %v767 = vadd.f32 %v718, %v760
        %v768 = vadd.f32 %v720, %v764
        %v769 = vadd.f32 %v722, %v760
        %v770 = vadd.f32 %v724, %v764
        %v771 = vadd.f32 %v728, %v760
        %v772 = vadd.f32 %v730, %v764
        %v773 = vadd.f32 %v732, %v760
        %v774 = vadd.f32 %v734, %v764
        %v775 = vadd.f32 %v738, %v760
        %v776 = vadd.f32 %v740, %v764
        %v777 = vadd.f32 %v742, %v760
        %v778 = vadd.f32 %v744, %v764
        %v779 = vadd.f32 %v748, %v760
        %v780 = vadd.f32 %v750, %v764
        %v781 = vadd.f32 %v752, %v760
        %v782 = vadd.f32 %v754, %v764
        %vm783 = vcmask 130048
        %v784 = vsel %vm783, %v768, -inf
        %v785 = vmax.f32 %v767, %v784
        %786 = vmax.xlane.f32.xlu0 %v785
        %v787 = vpop.xlane.xlu0 %786
        %v788 = vsel %vm783, %v770, -inf
        %v789 = vmax.f32 %v769, %v788
        %790 = vmax.xlane.f32.xlu0 %v789
        %v791 = vpop.xlane.xlu0 %790
        %v792 = vsel %vm783, %v772, -inf
        %v793 = vmax.f32 %v771, %v792
        %794 = vmax.xlane.f32.xlu0 %v793
        %v795 = vpop.xlane.xlu0 %794
        %v796 = vsel %vm783, %v774, -inf
        %v797 = vmax.f32 %v773, %v796
        %798 = vmax.xlane.f32.xlu0 %v797
        %v799 = vpop.xlane.xlu0 %798
        %v800 = vsel %vm783, %v776, -inf
        %v801 = vmax.f32 %v775, %v800
        %802 = vmax.xlane.f32.xlu0 %v801
        %v803 = vpop.xlane.xlu0 %802
        %v804 = vsel %vm783, %v778, -inf
        %v805 = vmax.f32 %v777, %v804
        %806 = vmax.xlane.f32.xlu0 %v805
        %v807 = vpop.xlane.xlu0 %806
        %v808 = vsel %vm783, %v780, -inf
        %v809 = vmax.f32 %v779, %v808
        %810 = vmax.xlane.f32.xlu0 %v809
        %v811 = vpop.xlane.xlu0 %810
        %v812 = vsel %vm783, %v782, -inf
        %v813 = vmax.f32 %v781, %v812
        %814 = vmax.xlane.f32.xlu0 %v813
        %v815 = vpop.xlane.xlu0 %814
        %v816 = vsub.f32 %v767, %v787
        %v817 = vsub.f32 %v768, %v787
        %v818 = vsub.f32 %v769, %v791
        %v819 = vsub.f32 %v770, %v791
        %v820 = vsub.f32 %v771, %v795
        %v821 = vsub.f32 %v772, %v795
        %v822 = vsub.f32 %v773, %v799
        %v823 = vsub.f32 %v774, %v799
        %v824 = vsub.f32 %v775, %v803
        %v825 = vsub.f32 %v776, %v803
        %v826 = vsub.f32 %v777, %v807
        %v827 = vsub.f32 %v778, %v807
        %v828 = vsub.f32 %v779, %v811
        %v829 = vsub.f32 %v780, %v811
        %v830 = vsub.f32 %v781, %v815
        %v831 = vsub.f32 %v782, %v815
        %v832 = vmul.f32 %v816, 1.442695
        %v833 = vpow.pop %v832
        %v834 = vmul.f32 %v817, 1.442695
        %v835 = vpow.pop %v834
        %v836 = vmul.f32 %v818, 1.442695
        %v837 = vpow.pop %v836
        %v838 = vmul.f32 %v819, 1.442695
        %v839 = vpow.pop %v838
        %v840 = vmul.f32 %v820, 1.442695
        %v841 = vpow.pop %v840
        %v842 = vmul.f32 %v821, 1.442695
        %v843 = vpow.pop %v842
        %v844 = vmul.f32 %v822, 1.442695
        %v845 = vpow.pop %v844
        %v846 = vmul.f32 %v823, 1.442695
        %v847 = vpow.pop %v846
        %v848 = vmul.f32 %v824, 1.442695
        %v849 = vpow.pop %v848
        %v850 = vmul.f32 %v825, 1.442695
        %v851 = vpow.pop %v850
        %v852 = vmul.f32 %v826, 1.442695
        %v853 = vpow.pop %v852
        %v854 = vmul.f32 %v827, 1.442695
        %v855 = vpow.pop %v854
        %v856 = vmul.f32 %v828, 1.442695
        %v857 = vpow.pop %v856
        %v858 = vmul.f32 %v829, 1.442695
        %v859 = vpow.pop %v858
        %v860 = vmul.f32 %v830, 1.442695
        %v861 = vpow.pop %v860
        %v862 = vmul.f32 %v831, 1.442695
        %v863 = vpow.pop %v862
        %v864 = vsel %vm783, %v835, 0.0
        %v865 = vadd.f32 %v833, %v864
        %866 = vadd.xlane.f32.xlu0 %v865
        %v867 = vpop.xlane.xlu0 %866
        %v868 = vsel %vm783, %v839, 0.0
        %v869 = vadd.f32 %v837, %v868
        %870 = vadd.xlane.f32.xlu0 %v869
        %v871 = vpop.xlane.xlu0 %870
        %v872 = vsel %vm783, %v843, 0.0
        %v873 = vadd.f32 %v841, %v872
        %874 = vadd.xlane.f32.xlu0 %v873
        %v875 = vpop.xlane.xlu0 %874
        %v876 = vsel %vm783, %v847, 0.0
        %v877 = vadd.f32 %v845, %v876
        %878 = vadd.xlane.f32.xlu0 %v877
        %v879 = vpop.xlane.xlu0 %878
        %v880 = vsel %vm783, %v851, 0.0
        %v881 = vadd.f32 %v849, %v880
        %882 = vadd.xlane.f32.xlu0 %v881
        %v883 = vpop.xlane.xlu0 %882
        %v884 = vsel %vm783, %v855, 0.0
        %v885 = vadd.f32 %v853, %v884
        %886 = vadd.xlane.f32.xlu0 %v885
        %v887 = vpop.xlane.xlu0 %886
        %v888 = vsel %vm783, %v859, 0.0
        %v889 = vadd.f32 %v857, %v888
        %890 = vadd.xlane.f32.xlu0 %v889
        %v891 = vpop.xlane.xlu0 %890
        %v892 = vsel %vm783, %v863, 0.0
        %v893 = vadd.f32 %v861, %v892
        %894 = vadd.xlane.f32.xlu0 %v893
        %v895 = vpop.xlane.xlu0 %894
        %v896 = vpack.c.bf16 %v837, %v833
        %v897 = vpack.c.bf16 %v839, %v835
        %v898 = vpack.c.bf16 %v845, %v841
        %v899 = vpack.c.bf16 %v847, %v843
        %v900 = vpack.c.bf16 %v853, %v849
        %v901 = vpack.c.bf16 %v855, %v851
        %v902 = vpack.c.bf16 %v861, %v857
        %v903 = vpack.c.bf16 %v863, %v859
        %913 = vrot.lane.b32.xlu0 %v598, 96
        %v914 = vpop.permute.xlu0 %913
        %915 = vrot.lane.b32.xlu0 %v599, 96
        %v916 = vpop.permute.xlu0 %915
        %917 = vrot.lane.b32.xlu0 %v600, 96
        %v918 = vpop.permute.xlu0 %917
        %919 = vrot.lane.b32.xlu0 %v601, 96
        %v920 = vpop.permute.xlu0 %919
        %921 = vrot.lane.b32.xlu0 %v602, 96
        %v922 = vpop.permute.xlu0 %921
        %923 = vrot.lane.b32.xlu0 %v603, 96
        %v924 = vpop.permute.xlu0 %923
        %925 = vrot.lane.b32.xlu0 %v604, 96
        %v926 = vpop.permute.xlu0 %925
        %927 = vrot.lane.b32.xlu0 %v605, 96
        %v928 = vpop.permute.xlu0 %927
        %929 = vrot.lane.b32.xlu0 %v606, 96
        %v930 = vpop.permute.xlu0 %929
        %v941 = vsel %vm783, %v897, 0
        %v944 = vsel %vm783, %v899, 0
        %v947 = vsel %vm783, %v901, 0
        %v950 = vsel %vm783, %v903, 0
        %952 = vmatprep.subr.bf16.mxu0 0
        %953 = vmatpush1.bf16.msra.mxu0 %v914
        %954 = vmatprep.subr.bf16.mxu0 0
        %955 = vmatpush1.bf16.msra.mxu0 %v916
        %956 = vmatprep.subr.bf16.mxu0 0
        %957 = vmatpush1.bf16.msra.mxu0 %v918
        %958 = vmatprep.subr.bf16.mxu0 0
        %959 = vmatpush1.bf16.msra.mxu0 %v920
        %960 = vmatprep.subr.bf16.mxu0 0
        %961 = vmatpush1.bf16.msra.mxu0 %v922
        %962 = vmatprep.subr.bf16.mxu0 0
        %963 = vmatpush1.bf16.msra.mxu0 %v924
        %964 = vmatprep.subr.bf16.mxu0 0
        %965 = vmatpush1.bf16.msra.mxu0 %v926
        %966 = vmatprep.subr.bf16.mxu0 0
        %967 = vmatpush1.bf16.msra.mxu0 %v928
        %968 = vmatprep.subr.bf16.mxu0 0
        %969 = vmatpush1.bf16.msra.mxu0 %v930
        %970 = vmatprep.subr.bf16.mxu0 0
        %971 = vmatpush1.bf16.msra.mxu0 0
        %972 = vmatprep.subr.bf16.mxu0 0
        %973 = vmatpush1.bf16.msra.mxu0 0
        %974 = vmatprep.subr.bf16.mxu0 0
        %975 = vmatpush1.bf16.msra.mxu0 0
        %976 = vmatprep.subr.bf16.mxu0 0
        %977 = vmatpush1.bf16.msra.mxu0 0
        %978 = vmatprep.subr.bf16.mxu0 0
        %979 = vmatpush1.bf16.msra.mxu0 0
        %980 = vmatprep.subr.bf16.mxu0 0
        %981 = vmatpush1.bf16.msra.mxu0 0
        %982 = vmatprep.subr.bf16.mxu0 0
        %983 = vmatpush1.bf16.msra.mxu0 0
        %984 = vmatprep.mubr.bf16.mxu0 %v941
        %985 = vmatmul.mubr.bf16.gmra.mrb[0].mxu0 %v896
        %v986 = vpop.f32.mrb[0].mxu0
        %v987 = vadd.f32 0.0, %v986
        %v988 = vpop.f32.mrb[0].mxu0
        %v989 = vpop.f32.mrb[0].mxu0
        %v990 = vadd.f32 0.0, %v989
        %v991 = vpop.f32.mrb[0].mxu0
        %992 = vmatprep.mubr.bf16.mxu0 %v944
        %993 = vmatmul.mubr.bf16.gmra.mrb[0].mxu0 %v898
        %v994 = vpop.f32.mrb[0].mxu0
        %v995 = vadd.f32 0.0, %v994
        %v996 = vpop.f32.mrb[0].mxu0
        %v997 = vpop.f32.mrb[0].mxu0
        %v998 = vadd.f32 0.0, %v997
        %v999 = vpop.f32.mrb[0].mxu0
        %1000 = vmatprep.mubr.bf16.mxu0 %v947
        %1001 = vmatmul.mubr.bf16.gmra.mrb[0].mxu0 %v900
        %v1002 = vpop.f32.mrb[0].mxu0
        %v1003 = vadd.f32 0.0, %v1002
        %v1004 = vpop.f32.mrb[0].mxu0
        %v1005 = vpop.f32.mrb[0].mxu0
        %v1006 = vadd.f32 0.0, %v1005
        %v1007 = vpop.f32.mrb[0].mxu0
        %1008 = vmatprep.mubr.bf16.mxu0 %v950
        %1009 = vmatmul.mubr.bf16.gmra.mrb[0].mxu0 %v902
        %v1010 = vpop.f32.mrb[0].mxu0
        %v1011 = vadd.f32 0.0, %v1010
        %v1012 = vpop.f32.mrb[0].mxu0
        %v1013 = vpop.f32.mrb[0].mxu0
        %v1014 = vadd.f32 0.0, %v1013
        %v1015 = vpop.f32.mrb[0].mxu0
        %1016 = vdwg.mxu0
        %v1017 = vrcp.pop %v867
        %v1018 = vrcp.pop %v871
        %v1019 = vrcp.pop %v875
        %v1020 = vrcp.pop %v879
        %v1021 = vrcp.pop %v883
        %v1022 = vrcp.pop %v887
        %v1023 = vrcp.pop %v891
        %v1024 = vrcp.pop %v895
        %v1025 = vmul.f32 %v987, %v1017
        %v1026 = vmul.f32 %v990, %v1018
        %v1027 = vmul.f32 %v995, %v1019
        %v1028 = vmul.f32 %v998, %v1020
        %v1029 = vmul.f32 %v1003, %v1021
        %v1030 = vmul.f32 %v1006, %v1022
        %v1031 = vmul.f32 %v1011, %v1023
        %v1032 = vmul.f32 %v1014, %v1024
        %v1033 = vpack.c.bf16 %v1026, %v1025
        %v1034 = vpack.c.bf16 %v1028, %v1027
        %v1035 = vpack.c.bf16 %v1030, %v1029
        %v1036 = vpack.c.bf16 %v1032, %v1031
        %1037 = vst.msk [vmem:[#allocation3] sm:$0xff] %vm643, %v1033
        %1038 = vst.msk [vmem:[#allocation3 + $0x8] sm:$0xff] %vm643, %v1034
        %1039 = vst.msk [vmem:[#allocation3 + $0x10] sm:$0xff] %vm643, %v1035
        %1040 = vst.msk [vmem:[#allocation3 + $0x18] sm:$0xff] %vm643, %v1036
        %v1041 = vld [vmem:[#allocation2] sm:$0xff]
        %v1042 = vld [vmem:[#allocation2 + $0x8] sm:$0xff]
        %v1043 = vld [vmem:[#allocation2 + $0x10] sm:$0xff]
        %v1044 = vld [vmem:[#allocation2 + $0x18] sm:$0xff]
        %v1045 = vld [vmem:[#allocation2 + $0x20] sm:$0xff]
        %v1046 = vld [vmem:[#allocation2 + $0x28] sm:$0xff]
        %v1047 = vld [vmem:[#allocation2 + $0x30] sm:$0xff]
        %v1048 = vld [vmem:[#allocation2 + $0x38] sm:$0xff]
        %v1049 = vld [vmem:[#allocation2 + $0x40] sm:$0xff]
        %s1050 = scalar_lea.vmem %s2, 128
        %v1051 = vld [vmem:[%s1050] sm:$0xff]
        %v1052 = vld [vmem:[%s1050 + $0x8] sm:$0xff]
        %v1053 = vld [vmem:[%s1050 + $0x10] sm:$0xff]
        %v1054 = vld [vmem:[%s1050 + $0x18] sm:$0xff]
        %v1055 = vld [vmem:[%s1050 + $0x20] sm:$0xff]
        %v1056 = vld [vmem:[%s1050 + $0x28] sm:$0xff]
        %v1057 = vld [vmem:[%s1050 + $0x30] sm:$0xff]
        %v1058 = vld [vmem:[%s1050 + $0x38] sm:$0xff]
        %v1059 = vld [vmem:[%s1050 + $0x40] sm:$0xff]
        %v1060 = vld [vmem:[%s1050 + $0x48] sm:$0xff]
        %v1061 = vld [vmem:[%s1050 + $0x50] sm:$0xff]
        %v1062 = vld [vmem:[%s1050 + $0x58] sm:$0xff]
        %v1063 = vld [vmem:[%s1050 + $0x60] sm:$0xff]
        %v1064 = vld [vmem:[%s1050 + $0x68] sm:$0xff]
        %v1065 = vld [vmem:[%s1050 + $0x70] sm:$0xff]
        %v1066 = vld [vmem:[%s1050 + $0x78] sm:$0xff]
        %1067 = vrot.lane.b32.xlu0 %v639, 120
        %v1068 = vpop.permute.xlu0 %1067
        %1069 = vrot.lane.b32.xlu0 %v640, 120
        %v1070 = vpop.permute.xlu0 %1069
        %1071 = vrot.lane.b32.xlu0 %v641, 120
        %v1072 = vpop.permute.xlu0 %1071
        %1073 = vrot.lane.b32.xlu0 %v642, 120
        %v1074 = vpop.permute.xlu0 %1073
        %1084 = vrot.lane.b32.xlu0 %v1041, 120
        %v1085 = vpop.permute.xlu0 %1084
        %1086 = vrot.lane.b32.xlu0 %v1042, 120
        %v1087 = vpop.permute.xlu0 %1086
        %1088 = vrot.lane.b32.xlu0 %v1043, 120
        %v1089 = vpop.permute.xlu0 %1088
        %1090 = vrot.lane.b32.xlu0 %v1044, 120
        %v1091 = vpop.permute.xlu0 %1090
        %1092 = vrot.lane.b32.xlu0 %v1045, 120
        %v1093 = vpop.permute.xlu0 %1092
        %1094 = vrot.lane.b32.xlu0 %v1046, 120
        %v1095 = vpop.permute.xlu0 %1094
        %1096 = vrot.lane.b32.xlu0 %v1047, 120
        %v1097 = vpop.permute.xlu0 %1096
        %1098 = vrot.lane.b32.xlu0 %v1048, 120
        %v1099 = vpop.permute.xlu0 %1098
        %1100 = vrot.lane.b32.xlu0 %v1049, 120
        %v1101 = vpop.permute.xlu0 %1100
        %v1103 = vsel %vm643, %v1068, 0
        %v1106 = vsel %vm643, %v1070, 0
        %v1109 = vsel %vm643, %v1072, 0
        %v1112 = vsel %vm643, %v1074, 0
        %v1115 = vsel %vm643, %v1085, 0
        %v1118 = vsel %vm643, %v1087, 0
        %v1121 = vsel %vm643, %v1089, 0
        %v1124 = vsel %vm643, %v1091, 0
        %v1127 = vsel %vm643, %v1093, 0
        %v1130 = vsel %vm643, %v1095, 0
        %v1133 = vsel %vm643, %v1097, 0
        %v1136 = vsel %vm643, %v1099, 0
        %v1139 = vsel %vm643, %v1101, 0
        %1141 = vmatprep.subr.bf16.mxu0 0
        %1142 = vmatpush1.bf16.xpose.msra.mxu0 %v1115
        %1143 = vmatprep.subr.bf16.mxu0 0
        %1144 = vmatpush1.bf16.xpose.msra.mxu0 %v1118
        %1145 = vmatprep.subr.bf16.mxu0 0
        %1146 = vmatpush1.bf16.xpose.msra.mxu0 %v1121
        %1147 = vmatprep.subr.bf16.mxu0 0
        %1148 = vmatpush1.bf16.xpose.msra.mxu0 %v1124
        %1149 = vmatprep.subr.bf16.mxu0 0
        %1150 = vmatpush1.bf16.xpose.msra.mxu0 %v1127
        %1151 = vmatprep.subr.bf16.mxu0 0
        %1152 = vmatpush1.bf16.xpose.msra.mxu0 %v1130
        %1153 = vmatprep.subr.bf16.mxu0 0
        %1154 = vmatpush1.bf16.xpose.msra.mxu0 %v1133
        %1155 = vmatprep.subr.bf16.mxu0 0
        %1156 = vmatpush1.bf16.xpose.msra.mxu0 %v1136
        %1157 = vmatprep.subr.bf16.mxu0 0
        %1158 = vmatpush1.bf16.xpose.msra.mxu0 %v1139
        %1159 = vmatprep.subr.bf16.mxu0 0
        %1160 = vmatpush1.bf16.xpose.msra.mxu0 0
        %1161 = vmatprep.subr.bf16.mxu0 0
        %1162 = vmatpush1.bf16.xpose.msra.mxu0 0
        %1163 = vmatprep.subr.bf16.mxu0 0
        %1164 = vmatpush1.bf16.xpose.msra.mxu0 0
        %1165 = vmatprep.subr.bf16.mxu0 0
        %1166 = vmatpush1.bf16.xpose.msra.mxu0 0
        %1167 = vmatprep.subr.bf16.mxu0 0
        %1168 = vmatpush1.bf16.xpose.msra.mxu0 0
        %1169 = vmatprep.subr.bf16.mxu0 0
        %1170 = vmatpush1.bf16.xpose.msra.mxu0 0
        %1171 = vmatprep.subr.bf16.mxu0 0
        %1172 = vmatpush1.bf16.xpose.msra.mxu0 0
        %1173 = vmatprep.mubr.bf16.mxu0 0
        %1174 = vmatmul.mubr.bf16.gmra.mrb[0].mxu0 %v1103
        %v1175 = vpop.f32.mrb[0].mxu0
        %v1176 = vadd.f32 %v1051, %v1175
        %v1177 = vpop.f32.mrb[0].mxu0
        %v1178 = vadd.f32 %v1052, %v1177
        %v1179 = vpop.f32.mrb[0].mxu0
        %v1180 = vadd.f32 %v1053, %v1179
        %v1181 = vpop.f32.mrb[0].mxu0
        %v1182 = vadd.f32 %v1054, %v1181
        %1183 = vmatprep.mubr.bf16.mxu0 0
        %1184 = vmatmul.mubr.bf16.gmra.mrb[0].mxu0 %v1106
        %v1185 = vpop.f32.mrb[0].mxu0
        %v1186 = vadd.f32 %v1055, %v1185
        %v1187 = vpop.f32.mrb[0].mxu0
        %v1188 = vadd.f32 %v1056, %v1187
        %v1189 = vpop.f32.mrb[0].mxu0
        %v1190 = vadd.f32 %v1057, %v1189
        %v1191 = vpop.f32.mrb[0].mxu0
        %v1192 = vadd.f32 %v1058, %v1191
        %1193 = vmatprep.mubr.bf16.mxu0 0
        %1194 = vmatmul.mubr.bf16.gmra.mrb[0].mxu0 %v1109
        %v1195 = vpop.f32.mrb[0].mxu0
        %v1196 = vadd.f32 %v1059, %v1195
        %v1197 = vpop.f32.mrb[0].mxu0
        %v1198 = vadd.f32 %v1060, %v1197
        %v1199 = vpop.f32.mrb[0].mxu0
        %v1200 = vadd.f32 %v1061, %v1199
        %v1201 = vpop.f32.mrb[0].mxu0
        %v1202 = vadd.f32 %v1062, %v1201
        %1203 = vmatprep.mubr.bf16.mxu0 0
        %1204 = vmatmul.mubr.bf16.gmra.mrb[0].mxu0 %v1112
        %v1205 = vpop.f32.mrb[0].mxu0
        %v1206 = vadd.f32 %v1063, %v1205
        %v1207 = vpop.f32.mrb[0].mxu0
        %v1208 = vadd.f32 %v1064, %v1207
        %v1209 = vpop.f32.mrb[0].mxu0
        %v1210 = vadd.f32 %v1065, %v1209
        %v1211 = vpop.f32.mrb[0].mxu0
        %v1212 = vadd.f32 %v1066, %v1211
        %1213 = vdwg.mxu0
        %v1214 = vadd.f32 %v1176, %v760
        %v1215 = vadd.f32 %v1178, %v764
        %v1216 = vadd.f32 %v1180, %v760
        %v1217 = vadd.f32 %v1182, %v764
        %v1218 = vadd.f32 %v1186, %v760
        %v1219 = vadd.f32 %v1188, %v764
        %v1220 = vadd.f32 %v1190, %v760
        %v1221 = vadd.f32 %v1192, %v764
        %v1222 = vadd.f32 %v1196, %v760
        %v1223 = vadd.f32 %v1198, %v764
        %v1224 = vadd.f32 %v1200, %v760
        %v1225 = vadd.f32 %v1202, %v764
        %v1226 = vadd.f32 %v1206, %v760
        %v1227 = vadd.f32 %v1208, %v764
        %v1228 = vadd.f32 %v1210, %v760
        %v1229 = vadd.f32 %v1212, %v764
        %v1230 = vsel %vm783, %v1215, -inf
        %v1231 = vmax.f32 %v1214, %v1230
        %1232 = vmax.xlane.f32.xlu0 %v1231
        %v1233 = vpop.xlane.xlu0 %1232
        %v1234 = vsel %vm783, %v1217, -inf
        %v1235 = vmax.f32 %v1216, %v1234
        %1236 = vmax.xlane.f32.xlu0 %v1235
        %v1237 = vpop.xlane.xlu0 %1236
        %v1238 = vsel %vm783, %v1219, -inf
        %v1239 = vmax.f32 %v1218, %v1238
        %1240 = vmax.xlane.f32.xlu0 %v1239
        %v1241 = vpop.xlane.xlu0 %1240
        %v1242 = vsel %vm783, %v1221, -inf
        %v1243 = vmax.f32 %v1220, %v1242
        %1244 = vmax.xlane.f32.xlu0 %v1243
        %v1245 = vpop.xlane.xlu0 %1244
        %v1246 = vsel %vm783, %v1223, -inf
        %v1247 = vmax.f32 %v1222, %v1246
        %1248 = vmax.xlane.f32.xlu0 %v1247
        %v1249 = vpop.xlane.xlu0 %1248
        %v1250 = vsel %vm783, %v1225, -inf
        %v1251 = vmax.f32 %v1224, %v1250
        %1252 = vmax.xlane.f32.xlu0 %v1251
        %v1253 = vpop.xlane.xlu0 %1252
        %v1254 = vsel %vm783, %v1227, -inf
        %v1255 = vmax.f32 %v1226, %v1254
        %1256 = vmax.xlane.f32.xlu0 %v1255
        %v1257 = vpop.xlane.xlu0 %1256
        %v1258 = vsel %vm783, %v1229, -inf
        %v1259 = vmax.f32 %v1228, %v1258
        %1260 = vmax.xlane.f32.xlu0 %v1259
        %v1261 = vpop.xlane.xlu0 %1260
        %v1262 = vsub.f32 %v1214, %v1233
        %v1263 = vsub.f32 %v1215, %v1233
        %v1264 = vsub.f32 %v1216, %v1237
        %v1265 = vsub.f32 %v1217, %v1237
        %v1266 = vsub.f32 %v1218, %v1241
        %v1267 = vsub.f32 %v1219, %v1241
        %v1268 = vsub.f32 %v1220, %v1245
        %v1269 = vsub.f32 %v1221, %v1245
        %v1270 = vsub.f32 %v1222, %v1249
        %v1271 = vsub.f32 %v1223, %v1249
        %v1272 = vsub.f32 %v1224, %v1253
        %v1273 = vsub.f32 %v1225, %v1253
        %v1274 = vsub.f32 %v1226, %v1257
        %v1275 = vsub.f32 %v1227, %v1257
        %v1276 = vsub.f32 %v1228, %v1261
        %v1277 = vsub.f32 %v1229, %v1261
        %v1278 = vmul.f32 %v1262, 1.442695
        %v1279 = vpow.pop %v1278
        %v1280 = vmul.f32 %v1263, 1.442695
        %v1281 = vpow.pop %v1280
        %v1282 = vmul.f32 %v1264, 1.442695
        %v1283 = vpow.pop %v1282
        %v1284 = vmul.f32 %v1265, 1.442695
        %v1285 = vpow.pop %v1284
        %v1286 = vmul.f32 %v1266, 1.442695
        %v1287 = vpow.pop %v1286
        %v1288 = vmul.f32 %v1267, 1.442695
        %v1289 = vpow.pop %v1288
        %v1290 = vmul.f32 %v1268, 1.442695
        %v1291 = vpow.pop %v1290
        %v1292 = vmul.f32 %v1269, 1.442695
        %v1293 = vpow.pop %v1292
        %v1294 = vmul.f32 %v1270, 1.442695
        %v1295 = vpow.pop %v1294
        %v1296 = vmul.f32 %v1271, 1.442695
        %v1297 = vpow.pop %v1296
        %v1298 = vmul.f32 %v1272, 1.442695
        %v1299 = vpow.pop %v1298
        %v1300 = vmul.f32 %v1273, 1.442695
        %v1301 = vpow.pop %v1300
        %v1302 = vmul.f32 %v1274, 1.442695
        %v1303 = vpow.pop %v1302
        %v1304 = vmul.f32 %v1275, 1.442695
        %v1305 = vpow.pop %v1304
        %v1306 = vmul.f32 %v1276, 1.442695
        %v1307 = vpow.pop %v1306
        %v1308 = vmul.f32 %v1277, 1.442695
        %v1309 = vpow.pop %v1308
        %v1310 = vsel %vm783, %v1281, 0.0
        %v1311 = vadd.f32 %v1279, %v1310
        %1312 = vadd.xlane.f32.xlu0 %v1311
        %v1313 = vpop.xlane.xlu0 %1312
        %v1314 = vsel %vm783, %v1285, 0.0
        %v1315 = vadd.f32 %v1283, %v1314
        %1316 = vadd.xlane.f32.xlu0 %v1315
        %v1317 = vpop.xlane.xlu0 %1316
        %v1318 = vsel %vm783, %v1289, 0.0
        %v1319 = vadd.f32 %v1287, %v1318
        %1320 = vadd.xlane.f32.xlu0 %v1319
        %v1321 = vpop.xlane.xlu0 %1320
        %v1322 = vsel %vm783, %v1293, 0.0
        %v1323 = vadd.f32 %v1291, %v1322
        %1324 = vadd.xlane.f32.xlu0 %v1323
        %v1325 = vpop.xlane.xlu0 %1324
        %v1326 = vsel %vm783, %v1297, 0.0
        %v1327 = vadd.f32 %v1295, %v1326
        %1328 = vadd.xlane.f32.xlu0 %v1327
        %v1329 = vpop.xlane.xlu0 %1328
        %v1330 = vsel %vm783, %v1301, 0.0
        %v1331 = vadd.f32 %v1299, %v1330
        %1332 = vadd.xlane.f32.xlu0 %v1331
        %v1333 = vpop.xlane.xlu0 %1332
        %v1334 = vsel %vm783, %v1305, 0.0
        %v1335 = vadd.f32 %v1303, %v1334
        %1336 = vadd.xlane.f32.xlu0 %v1335
        %v1337 = vpop.xlane.xlu0 %1336
        %v1338 = vsel %vm783, %v1309, 0.0
        %v1339 = vadd.f32 %v1307, %v1338
        %1340 = vadd.xlane.f32.xlu0 %v1339
        %v1341 = vpop.xlane.xlu0 %1340
        %v1342 = vpack.c.bf16 %v1283, %v1279
        %v1343 = vpack.c.bf16 %v1285, %v1281
        %v1344 = vpack.c.bf16 %v1291, %v1287
        %v1345 = vpack.c.bf16 %v1293, %v1289
        %v1346 = vpack.c.bf16 %v1299, %v1295
        %v1347 = vpack.c.bf16 %v1301, %v1297
        %v1348 = vpack.c.bf16 %v1307, %v1303
        %v1349 = vpack.c.bf16 %v1309, %v1305
        %1350 = vrot.lane.b32.xlu0 %v1041, 88
        %v1351 = vpop.permute.xlu0 %1350
        %1352 = vrot.lane.b32.xlu0 %v1042, 88
        %v1353 = vpop.permute.xlu0 %1352
        %1354 = vrot.lane.b32.xlu0 %v1043, 88
        %v1355 = vpop.permute.xlu0 %1354
        %1356 = vrot.lane.b32.xlu0 %v1044, 88
        %v1357 = vpop.permute.xlu0 %1356
        %1358 = vrot.lane.b32.xlu0 %v1045, 88
        %v1359 = vpop.permute.xlu0 %1358
        %1360 = vrot.lane.b32.xlu0 %v1046, 88
        %v1361 = vpop.permute.xlu0 %1360
        %1362 = vrot.lane.b32.xlu0 %v1047, 88
        %v1363 = vpop.permute.xlu0 %1362
        %1364 = vrot.lane.b32.xlu0 %v1048, 88
        %v1365 = vpop.permute.xlu0 %1364
        %1366 = vrot.lane.b32.xlu0 %v1049, 88
        %v1367 = vpop.permute.xlu0 %1366
        %v1378 = vsel %vm783, %v1343, 0
        %v1381 = vsel %vm783, %v1345, 0
        %v1384 = vsel %vm783, %v1347, 0
        %v1387 = vsel %vm783, %v1349, 0
        %1389 = vmatprep.subr.bf16.mxu0 0
        %1390 = vmatpush1.bf16.msra.mxu0 %v1351
        %1391 = vmatprep.subr.bf16.mxu0 0
        %1392 = vmatpush1.bf16.msra.mxu0 %v1353
        %1393 = vmatprep.subr.bf16.mxu0 0
        %1394 = vmatpush1.bf16.msra.mxu0 %v1355
        %1395 = vmatprep.subr.bf16.mxu0 0
        %1396 = vmatpush1.bf16.msra.mxu0 %v1357
        %1397 = vmatprep.subr.bf16.mxu0 0
        %1398 = vmatpush1.bf16.msra.mxu0 %v1359
        %1399 = vmatprep.subr.bf16.mxu0 0
        %1400 = vmatpush1.bf16.msra.mxu0 %v1361
        %1401 = vmatprep.subr.bf16.mxu0 0
        %1402 = vmatpush1.bf16.msra.mxu0 %v1363
        %1403 = vmatprep.subr.bf16.mxu0 0
        %1404 = vmatpush1.bf16.msra.mxu0 %v1365
        %1405 = vmatprep.subr.bf16.mxu0 0
        %1406 = vmatpush1.bf16.msra.mxu0 %v1367
        %1407 = vmatprep.subr.bf16.mxu0 0
        %1408 = vmatpush1.bf16.msra.mxu0 0
        %1409 = vmatprep.subr.bf16.mxu0 0
        %1410 = vmatpush1.bf16.msra.mxu0 0
        %1411 = vmatprep.subr.bf16.mxu0 0
        %1412 = vmatpush1.bf16.msra.mxu0 0
        %1413 = vmatprep.subr.bf16.mxu0 0
        %1414 = vmatpush1.bf16.msra.mxu0 0
        %1415 = vmatprep.subr.bf16.mxu0 0
        %1416 = vmatpush1.bf16.msra.mxu0 0
        %1417 = vmatprep.subr.bf16.mxu0 0
        %1418 = vmatpush1.bf16.msra.mxu0 0
        %1419 = vmatprep.subr.bf16.mxu0 0
        %1420 = vmatpush1.bf16.msra.mxu0 0
        %1421 = vmatprep.mubr.bf16.mxu0 %v1378
        %1422 = vmatmul.mubr.bf16.gmra.mrb[0].mxu0 %v1342
        %v1423 = vpop.f32.mrb[0].mxu0
        %v1424 = vadd.f32 0.0, %v1423
        %v1425 = vpop.f32.mrb[0].mxu0
        %v1426 = vpop.f32.mrb[0].mxu0
        %v1427 = vadd.f32 0.0, %v1426
        %v1428 = vpop.f32.mrb[0].mxu0
        %1429 = vmatprep.mubr.bf16.mxu0 %v1381
        %1430 = vmatmul.mubr.bf16.gmra.mrb[0].mxu0 %v1344
        %v1431 = vpop.f32.mrb[0].mxu0
        %v1432 = vadd.f32 0.0, %v1431
        %v1433 = vpop.f32.mrb[0].mxu0
        %v1434 = vpop.f32.mrb[0].mxu0
        %v1435 = vadd.f32 0.0, %v1434
        %v1436 = vpop.f32.mrb[0].mxu0
        %1437 = vmatprep.mubr.bf16.mxu0 %v1384
        %1438 = vmatmul.mubr.bf16.gmra.mrb[0].mxu0 %v1346
        %v1439 = vpop.f32.mrb[0].mxu0
        %v1440 = vadd.f32 0.0, %v1439
        %v1441 = vpop.f32.mrb[0].mxu0
        %v1442 = vpop.f32.mrb[0].mxu0
        %v1443 = vadd.f32 0.0, %v1442
        %v1444 = vpop.f32.mrb[0].mxu0
        %1445 = vmatprep.mubr.bf16.mxu0 %v1387
        %1446 = vmatmul.mubr.bf16.gmra.mrb[0].mxu0 %v1348
        %v1447 = vpop.f32.mrb[0].mxu0
        %v1448 = vadd.f32 0.0, %v1447
        %v1449 = vpop.f32.mrb[0].mxu0
        %v1450 = vpop.f32.mrb[0].mxu0
        %v1451 = vadd.f32 0.0, %v1450
        %v1452 = vpop.f32.mrb[0].mxu0
        %1453 = vdwg.mxu0
        %v1454 = vrcp.pop %v1313
        %v1455 = vrcp.pop %v1317
        %v1456 = vrcp.pop %v1321
        %v1457 = vrcp.pop %v1325
        %v1458 = vrcp.pop %v1329
        %v1459 = vrcp.pop %v1333
        %v1460 = vrcp.pop %v1337
        %v1461 = vrcp.pop %v1341
        %v1462 = vmul.f32 %v1424, %v1454
        %v1463 = vmul.f32 %v1427, %v1455
        %v1464 = vmul.f32 %v1432, %v1456
        %v1465 = vmul.f32 %v1435, %v1457
        %v1466 = vmul.f32 %v1440, %v1458
        %v1467 = vmul.f32 %v1443, %v1459
        %v1468 = vmul.f32 %v1448, %v1460
        %v1469 = vmul.f32 %v1451, %v1461
        %v1470 = vpack.c.bf16 %v1463, %v1462
        %v1471 = vpack.c.bf16 %v1465, %v1464
        %v1472 = vpack.c.bf16 %v1467, %v1466
        %v1473 = vpack.c.bf16 %v1469, %v1468
        %1478 = vrot.lane.b32.xlu0 %v1470, 8
        %v1479 = vpop.permute.xlu0 %1478
        %1480 = vrot.lane.b32.xlu0 %v1471, 8
        %v1481 = vpop.permute.xlu0 %1480
        %1482 = vrot.lane.b32.xlu0 %v1472, 8
        %v1483 = vpop.permute.xlu0 %1482
        %1484 = vrot.lane.b32.xlu0 %v1473, 8
        %v1485 = vpop.permute.xlu0 %1484
        %vm1490 = vcmask 130112
        %1491 = vst.msk [vmem:[#allocation3] sm:$0xff] %vm1490, %v1479
        %1492 = vst.msk [vmem:[#allocation3 + $0x8] sm:$0xff] %vm1490, %v1481
        %1493 = vst.msk [vmem:[#allocation3 + $0x10] sm:$0xff] %vm1490, %v1483
        %1494 = vst.msk [vmem:[#allocation3 + $0x18] sm:$0xff] %vm1490, %v1485
        %v1495 = vld [vmem:[#allocation2] sm:$0xff]
        %v1496 = vld [vmem:[#allocation2 + $0x8] sm:$0xff]
        %v1497 = vld [vmem:[#allocation2 + $0x10] sm:$0xff]
        %v1498 = vld [vmem:[#allocation2 + $0x18] sm:$0xff]
        %v1499 = vld [vmem:[#allocation2 + $0x20] sm:$0xff]
        %v1500 = vld [vmem:[#allocation2 + $0x28] sm:$0xff]
        %v1501 = vld [vmem:[#allocation2 + $0x30] sm:$0xff]
        %v1502 = vld [vmem:[#allocation2 + $0x38] sm:$0xff]
        %v1503 = vld [vmem:[#allocation2 + $0x40] sm:$0xff]
        %s1504 = scalar_lea.vmem %s2, 256
        %v1505 = vld [vmem:[%s1504] sm:$0xff]
        %v1506 = vld [vmem:[%s1504 + $0x8] sm:$0xff]
        %v1507 = vld [vmem:[%s1504 + $0x10] sm:$0xff]
        %v1508 = vld [vmem:[%s1504 + $0x18] sm:$0xff]
        %v1509 = vld [vmem:[%s1504 + $0x20] sm:$0xff]
        %v1510 = vld [vmem:[%s1504 + $0x28] sm:$0xff]
        %v1511 = vld [vmem:[%s1504 + $0x30] sm:$0xff]
        %v1512 = vld [vmem:[%s1504 + $0x38] sm:$0xff]
        %v1513 = vld [vmem:[%s1504 + $0x40] sm:$0xff]
        %v1514 = vld [vmem:[%s1504 + $0x48] sm:$0xff]
        %v1515 = vld [vmem:[%s1504 + $0x50] sm:$0xff]
        %v1516 = vld [vmem:[%s1504 + $0x58] sm:$0xff]
        %v1517 = vld [vmem:[%s1504 + $0x60] sm:$0xff]
        %v1518 = vld [vmem:[%s1504 + $0x68] sm:$0xff]
        %v1519 = vld [vmem:[%s1504 + $0x70] sm:$0xff]
        %v1520 = vld [vmem:[%s1504 + $0x78] sm:$0xff]
        %1521 = vrot.lane.b32.xlu0 %v639, 112
        %v1522 = vpop.permute.xlu0 %1521
        %1523 = vrot.lane.b32.xlu0 %v640, 112
        %v1524 = vpop.permute.xlu0 %1523
        %1525 = vrot.lane.b32.xlu0 %v641, 112
        %v1526 = vpop.permute.xlu0 %1525
        %1527 = vrot.lane.b32.xlu0 %v642, 112
        %v1528 = vpop.permute.xlu0 %1527
        %1538 = vrot.lane.b32.xlu0 %v1495, 112
        %v1539 = vpop.permute.xlu0 %1538
        %1540 = vrot.lane.b32.xlu0 %v1496, 112
        %v1541 = vpop.permute.xlu0 %1540
        %1542 = vrot.lane.b32.xlu0 %v1497, 112
        %v1543 = vpop.permute.xlu0 %1542
        %1544 = vrot.lane.b32.xlu0 %v1498, 112
        %v1545 = vpop.permute.xlu0 %1544
        %1546 = vrot.lane.b32.xlu0 %v1499, 112
        %v1547 = vpop.permute.xlu0 %1546
        %1548 = vrot.lane.b32.xlu0 %v1500, 112
        %v1549 = vpop.permute.xlu0 %1548
        %1550 = vrot.lane.b32.xlu0 %v1501, 112
        %v1551 = vpop.permute.xlu0 %1550
        %1552 = vrot.lane.b32.xlu0 %v1502, 112
        %v1553 = vpop.permute.xlu0 %1552
        %1554 = vrot.lane.b32.xlu0 %v1503, 112
        %v1555 = vpop.permute.xlu0 %1554
        %v1557 = vsel %vm643, %v1522, 0
        %v1560 = vsel %vm643, %v1524, 0
        %v1563 = vsel %vm643, %v1526, 0
        %v1566 = vsel %vm643, %v1528, 0
        %v1569 = vsel %vm643, %v1539, 0
        %v1572 = vsel %vm643, %v1541, 0
        %v1575 = vsel %vm643, %v1543, 0
        %v1578 = vsel %vm643, %v1545, 0
        %v1581 = vsel %vm643, %v1547, 0
        %v1584 = vsel %vm643, %v1549, 0
        %v1587 = vsel %vm643, %v1551, 0
        %v1590 = vsel %vm643, %v1553, 0
        %v1593 = vsel %vm643, %v1555, 0
        %1595 = vmatprep.subr.bf16.mxu0 0
        %1596 = vmatpush1.bf16.xpose.msra.mxu0 %v1569
        %1597 = vmatprep.subr.bf16.mxu0 0
        %1598 = vmatpush1.bf16.xpose.msra.mxu0 %v1572
        %1599 = vmatprep.subr.bf16.mxu0 0
        %1600 = vmatpush1.bf16.xpose.msra.mxu0 %v1575
        %1601 = vmatprep.subr.bf16.mxu0 0
        %1602 = vmatpush1.bf16.xpose.msra.mxu0 %v1578
        %1603 = vmatprep.subr.bf16.mxu0 0
        %1604 = vmatpush1.bf16.xpose.msra.mxu0 %v1581
        %1605 = vmatprep.subr.bf16.mxu0 0
        %1606 = vmatpush1.bf16.xpose.msra.mxu0 %v1584
        %1607 = vmatprep.subr.bf16.mxu0 0
        %1608 = vmatpush1.bf16.xpose.msra.mxu0 %v1587
        %1609 = vmatprep.subr.bf16.mxu0 0
        %1610 = vmatpush1.bf16.xpose.msra.mxu0 %v1590
        %1611 = vmatprep.subr.bf16.mxu0 0
        %1612 = vmatpush1.bf16.xpose.msra.mxu0 %v1593
        %1613 = vmatprep.subr.bf16.mxu0 0
        %1614 = vmatpush1.bf16.xpose.msra.mxu0 0
        %1615 = vmatprep.subr.bf16.mxu0 0
        %1616 = vmatpush1.bf16.xpose.msra.mxu0 0
        %1617 = vmatprep.subr.bf16.mxu0 0
        %1618 = vmatpush1.bf16.xpose.msra.mxu0 0
        %1619 = vmatprep.subr.bf16.mxu0 0
        %1620 = vmatpush1.bf16.xpose.msra.mxu0 0
        %1621 = vmatprep.subr.bf16.mxu0 0
        %1622 = vmatpush1.bf16.xpose.msra.mxu0 0
        %1623 = vmatprep.subr.bf16.mxu0 0
        %1624 = vmatpush1.bf16.xpose.msra.mxu0 0
        %1625 = vmatprep.subr.bf16.mxu0 0
        %1626 = vmatpush1.bf16.xpose.msra.mxu0 0
        %1627 = vmatprep.mubr.bf16.mxu0 0
        %1628 = vmatmul.mubr.bf16.gmra.mrb[0].mxu0 %v1557
        %v1629 = vpop.f32.mrb[0].mxu0
        %v1630 = vadd.f32 %v1505, %v1629
        %v1631 = vpop.f32.mrb[0].mxu0
        %v1632 = vadd.f32 %v1506, %v1631
        %v1633 = vpop.f32.mrb[0].mxu0
        %v1634 = vadd.f32 %v1507, %v1633
        %v1635 = vpop.f32.mrb[0].mxu0
        %v1636 = vadd.f32 %v1508, %v1635
        %1637 = vmatprep.mubr.bf16.mxu0 0
        %1638 = vmatmul.mubr.bf16.gmra.mrb[0].mxu0 %v1560
        %v1639 = vpop.f32.mrb[0].mxu0
        %v1640 = vadd.f32 %v1509, %v1639
        %v1641 = vpop.f32.mrb[0].mxu0
        %v1642 = vadd.f32 %v1510, %v1641
        %v1643 = vpop.f32.mrb[0].mxu0
        %v1644 = vadd.f32 %v1511, %v1643
        %v1645 = vpop.f32.mrb[0].mxu0
        %v1646 = vadd.f32 %v1512, %v1645
        %1647 = vmatprep.mubr.bf16.mxu0 0
        %1648 = vmatmul.mubr.bf16.gmra.mrb[0].mxu0 %v1563
        %v1649 = vpop.f32.mrb[0].mxu0
        %v1650 = vadd.f32 %v1513, %v1649
        %v1651 = vpop.f32.mrb[0].mxu0
        %v1652 = vadd.f32 %v1514, %v1651
        %v1653 = vpop.f32.mrb[0].mxu0
        %v1654 = vadd.f32 %v1515, %v1653
        %v1655 = vpop.f32.mrb[0].mxu0
        %v1656 = vadd.f32 %v1516, %v1655
        %1657 = vmatprep.mubr.bf16.mxu0 0
        %1658 = vmatmul.mubr.bf16.gmra.mrb[0].mxu0 %v1566
        %v1659 = vpop.f32.mrb[0].mxu0
        %v1660 = vadd.f32 %v1517, %v1659
        %v1661 = vpop.f32.mrb[0].mxu0
        %v1662 = vadd.f32 %v1518, %v1661
        %v1663 = vpop.f32.mrb[0].mxu0
        %v1664 = vadd.f32 %v1519, %v1663
        %v1665 = vpop.f32.mrb[0].mxu0
        %v1666 = vadd.f32 %v1520, %v1665
        %1667 = vdwg.mxu0
        %v1668 = vadd.f32 %v1630, %v760
        %v1669 = vadd.f32 %v1632, %v764
        %v1670 = vadd.f32 %v1634, %v760
        %v1671 = vadd.f32 %v1636, %v764
        %v1672 = vadd.f32 %v1640, %v760
        %v1673 = vadd.f32 %v1642, %v764
        %v1674 = vadd.f32 %v1644, %v760
        %v1675 = vadd.f32 %v1646, %v764
        %v1676 = vadd.f32 %v1650, %v760
        %v1677 = vadd.f32 %v1652, %v764
        %v1678 = vadd.f32 %v1654, %v760
        %v1679 = vadd.f32 %v1656, %v764
        %v1680 = vadd.f32 %v1660, %v760
        %v1681 = vadd.f32 %v1662, %v764
        %v1682 = vadd.f32 %v1664, %v760
        %v1683 = vadd.f32 %v1666, %v764
        %v1684 = vsel %vm783, %v1669, -inf
        %v1685 = vmax.f32 %v1668, %v1684
        %1686 = vmax.xlane.f32.xlu0 %v1685
        %v1687 = vpop.xlane.xlu0 %1686
        %v1688 = vsel %vm783, %v1671, -inf
        %v1689 = vmax.f32 %v1670, %v1688
        %1690 = vmax.xlane.f32.xlu0 %v1689
        %v1691 = vpop.xlane.xlu0 %1690
        %v1692 = vsel %vm783, %v1673, -inf
        %v1693 = vmax.f32 %v1672, %v1692
        %1694 = vmax.xlane.f32.xlu0 %v1693
        %v1695 = vpop.xlane.xlu0 %1694
        %v1696 = vsel %vm783, %v1675, -inf
        %v1697 = vmax.f32 %v1674, %v1696
        %1698 = vmax.xlane.f32.xlu0 %v1697
        %v1699 = vpop.xlane.xlu0 %1698
        %v1700 = vsel %vm783, %v1677, -inf
        %v1701 = vmax.f32 %v1676, %v1700
        %1702 = vmax.xlane.f32.xlu0 %v1701
        %v1703 = vpop.xlane.xlu0 %1702
        %v1704 = vsel %vm783, %v1679, -inf
        %v1705 = vmax.f32 %v1678, %v1704
        %1706 = vmax.xlane.f32.xlu0 %v1705
        %v1707 = vpop.xlane.xlu0 %1706
        %v1708 = vsel %vm783, %v1681, -inf
        %v1709 = vmax.f32 %v1680, %v1708
        %1710 = vmax.xlane.f32.xlu0 %v1709
        %v1711 = vpop.xlane.xlu0 %1710
        %v1712 = vsel %vm783, %v1683, -inf
        %v1713 = vmax.f32 %v1682, %v1712
        %1714 = vmax.xlane.f32.xlu0 %v1713
        %v1715 = vpop.xlane.xlu0 %1714
        %v1716 = vsub.f32 %v1668, %v1687
        %v1717 = vsub.f32 %v1669, %v1687
        %v1718 = vsub.f32 %v1670, %v1691
        %v1719 = vsub.f32 %v1671, %v1691
        %v1720 = vsub.f32 %v1672, %v1695
        %v1721 = vsub.f32 %v1673, %v1695
        %v1722 = vsub.f32 %v1674, %v1699
        %v1723 = vsub.f32 %v1675, %v1699
        %v1724 = vsub.f32 %v1676, %v1703
        %v1725 = vsub.f32 %v1677, %v1703
        %v1726 = vsub.f32 %v1678, %v1707
        %v1727 = vsub.f32 %v1679, %v1707
        %v1728 = vsub.f32 %v1680, %v1711
        %v1729 = vsub.f32 %v1681, %v1711
        %v1730 = vsub.f32 %v1682, %v1715
        %v1731 = vsub.f32 %v1683, %v1715
        %v1732 = vmul.f32 %v1716, 1.442695
        %v1733 = vpow.pop %v1732
        %v1734 = vmul.f32 %v1717, 1.442695
        %v1735 = vpow.pop %v1734
        %v1736 = vmul.f32 %v1718, 1.442695
        %v1737 = vpow.pop %v1736
        %v1738 = vmul.f32 %v1719, 1.442695
        %v1739 = vpow.pop %v1738
        %v1740 = vmul.f32 %v1720, 1.442695
        %v1741 = vpow.pop %v1740
        %v1742 = vmul.f32 %v1721, 1.442695
        %v1743 = vpow.pop %v1742
        %v1744 = vmul.f32 %v1722, 1.442695
        %v1745 = vpow.pop %v1744
        %v1746 = vmul.f32 %v1723, 1.442695
        %v1747 = vpow.pop %v1746
        %v1748 = vmul.f32 %v1724, 1.442695
        %v1749 = vpow.pop %v1748
        %v1750 = vmul.f32 %v1725, 1.442695
        %v1751 = vpow.pop %v1750
        %v1752 = vmul.f32 %v1726, 1.442695
        %v1753 = vpow.pop %v1752
        %v1754 = vmul.f32 %v1727, 1.442695
        %v1755 = vpow.pop %v1754
        %v1756 = vmul.f32 %v1728, 1.442695
        %v1757 = vpow.pop %v1756
        %v1758 = vmul.f32 %v1729, 1.442695
        %v1759 = vpow.pop %v1758
        %v1760 = vmul.f32 %v1730, 1.442695
        %v1761 = vpow.pop %v1760
        %v1762 = vmul.f32 %v1731, 1.442695
        %v1763 = vpow.pop %v1762
        %v1764 = vsel %vm783, %v1735, 0.0
        %v1765 = vadd.f32 %v1733, %v1764
        %1766 = vadd.xlane.f32.xlu0 %v1765
        %v1767 = vpop.xlane.xlu0 %1766
        %v1768 = vsel %vm783, %v1739, 0.0
        %v1769 = vadd.f32 %v1737, %v1768
        %1770 = vadd.xlane.f32.xlu0 %v1769
        %v1771 = vpop.xlane.xlu0 %1770
        %v1772 = vsel %vm783, %v1743, 0.0
        %v1773 = vadd.f32 %v1741, %v1772
        %1774 = vadd.xlane.f32.xlu0 %v1773
        %v1775 = vpop.xlane.xlu0 %1774
        %v1776 = vsel %vm783, %v1747, 0.0
        %v1777 = vadd.f32 %v1745, %v1776
        %1778 = vadd.xlane.f32.xlu0 %v1777
        %v1779 = vpop.xlane.xlu0 %1778
        %v1780 = vsel %vm783, %v1751, 0.0
        %v1781 = vadd.f32 %v1749, %v1780
        %1782 = vadd.xlane.f32.xlu0 %v1781
        %v1783 = vpop.xlane.xlu0 %1782
        %v1784 = vsel %vm783, %v1755, 0.0
        %v1785 = vadd.f32 %v1753, %v1784
        %1786 = vadd.xlane.f32.xlu0 %v1785
        %v1787 = vpop.xlane.xlu0 %1786
        %v1788 = vsel %vm783, %v1759, 0.0
        %v1789 = vadd.f32 %v1757, %v1788
        %1790 = vadd.xlane.f32.xlu0 %v1789
        %v1791 = vpop.xlane.xlu0 %1790
        %v1792 = vsel %vm783, %v1763, 0.0
        %v1793 = vadd.f32 %v1761, %v1792
        %1794 = vadd.xlane.f32.xlu0 %v1793
        %v1795 = vpop.xlane.xlu0 %1794
        %v1796 = vpack.c.bf16 %v1737, %v1733
        %v1797 = vpack.c.bf16 %v1739, %v1735
        %v1798 = vpack.c.bf16 %v1745, %v1741
        %v1799 = vpack.c.bf16 %v1747, %v1743
        %v1800 = vpack.c.bf16 %v1753, %v1749
        %v1801 = vpack.c.bf16 %v1755, %v1751
        %v1802 = vpack.c.bf16 %v1761, %v1757
        %v1803 = vpack.c.bf16 %v1763, %v1759
        %1804 = vrot.lane.b32.xlu0 %v1495, 80
        %v1805 = vpop.permute.xlu0 %1804
        %1806 = vrot.lane.b32.xlu0 %v1496, 80
        %v1807 = vpop.permute.xlu0 %1806
        %1808 = vrot.lane.b32.xlu0 %v1497, 80
        %v1809 = vpop.permute.xlu0 %1808
        %1810 = vrot.lane.b32.xlu0 %v1498, 80
        %v1811 = vpop.permute.xlu0 %1810
        %1812 = vrot.lane.b32.xlu0 %v1499, 80
        %v1813 = vpop.permute.xlu0 %1812
        %1814 = vrot.lane.b32.xlu0 %v1500, 80
        %v1815 = vpop.permute.xlu0 %1814
        %1816 = vrot.lane.b32.xlu0 %v1501, 80
        %v1817 = vpop.permute.xlu0 %1816
        %1818 = vrot.lane.b32.xlu0 %v1502, 80
        %v1819 = vpop.permute.xlu0 %1818
        %1820 = vrot.lane.b32.xlu0 %v1503, 80
        %v1821 = vpop.permute.xlu0 %1820
        %v1832 = vsel %vm783, %v1797, 0
        %v1835 = vsel %vm783, %v1799, 0
        %v1838 = vsel %vm783, %v1801, 0
        %v1841 = vsel %vm783, %v1803, 0
        %1843 = vmatprep.subr.bf16.mxu0 0
        %1844 = vmatpush1.bf16.msra.mxu0 %v1805
        %1845 = vmatprep.subr.bf16.mxu0 0
        %1846 = vmatpush1.bf16.msra.mxu0 %v1807
        %1847 = vmatprep.subr.bf16.mxu0 0
        %1848 = vmatpush1.bf16.msra.mxu0 %v1809
        %1849 = vmatprep.subr.bf16.mxu0 0
        %1850 = vmatpush1.bf16.msra.mxu0 %v1811
        %1851 = vmatprep.subr.bf16.mxu0 0
        %1852 = vmatpush1.bf16.msra.mxu0 %v1813
        %1853 = vmatprep.subr.bf16.mxu0 0
        %1854 = vmatpush1.bf16.msra.mxu0 %v1815
        %1855 = vmatprep.subr.bf16.mxu0 0
        %1856 = vmatpush1.bf16.msra.mxu0 %v1817
        %1857 = vmatprep.subr.bf16.mxu0 0
        %1858 = vmatpush1.bf16.msra.mxu0 %v1819
        %1859 = vmatprep.subr.bf16.mxu0 0
        %1860 = vmatpush1.bf16.msra.mxu0 %v1821
        %1861 = vmatprep.subr.bf16.mxu0 0
        %1862 = vmatpush1.bf16.msra.mxu0 0
        %1863 = vmatprep.subr.bf16.mxu0 0
        %1864 = vmatpush1.bf16.msra.mxu0 0
        %1865 = vmatprep.subr.bf16.mxu0 0
        %1866 = vmatpush1.bf16.msra.mxu0 0
        %1867 = vmatprep.subr.bf16.mxu0 0
        %1868 = vmatpush1.bf16.msra.mxu0 0
        %1869 = vmatprep.subr.bf16.mxu0 0
        %1870 = vmatpush1.bf16.msra.mxu0 0
        %1871 = vmatprep.subr.bf16.mxu0 0
        %1872 = vmatpush1.bf16.msra.mxu0 0
        %1873 = vmatprep.subr.bf16.mxu0 0
        %1874 = vmatpush1.bf16.msra.mxu0 0
        %1875 = vmatprep.mubr.bf16.mxu0 %v1832
        %1876 = vmatmul.mubr.bf16.gmra.mrb[0].mxu0 %v1796
        %v1877 = vpop.f32.mrb[0].mxu0
        %v1878 = vadd.f32 0.0, %v1877
        %v1879 = vpop.f32.mrb[0].mxu0
        %v1880 = vpop.f32.mrb[0].mxu0
        %v1881 = vadd.f32 0.0, %v1880
        %v1882 = vpop.f32.mrb[0].mxu0
        %1883 = vmatprep.mubr.bf16.mxu0 %v1835
        %1884 = vmatmul.mubr.bf16.gmra.mrb[0].mxu0 %v1798
        %v1885 = vpop.f32.mrb[0].mxu0
        %v1886 = vadd.f32 0.0, %v1885
        %v1887 = vpop.f32.mrb[0].mxu0
        %v1888 = vpop.f32.mrb[0].mxu0
        %v1889 = vadd.f32 0.0, %v1888
        %v1890 = vpop.f32.mrb[0].mxu0
        %1891 = vmatprep.mubr.bf16.mxu0 %v1838
        %1892 = vmatmul.mubr.bf16.gmra.mrb[0].mxu0 %v1800
        %v1893 = vpop.f32.mrb[0].mxu0
        %v1894 = vadd.f32 0.0, %v1893
        %v1895 = vpop.f32.mrb[0].mxu0
        %v1896 = vpop.f32.mrb[0].mxu0
        %v1897 = vadd.f32 0.0, %v1896
        %v1898 = vpop.f32.mrb[0].mxu0
        %1899 = vmatprep.mubr.bf16.mxu0 %v1841
        %1900 = vmatmul.mubr.bf16.gmra.mrb[0].mxu0 %v1802
        %v1901 = vpop.f32.mrb[0].mxu0
        %v1902 = vadd.f32 0.0, %v1901
        %v1903 = vpop.f32.mrb[0].mxu0
        %v1904 = vpop.f32.mrb[0].mxu0
        %v1905 = vadd.f32 0.0, %v1904
        %v1906 = vpop.f32.mrb[0].mxu0
        %1907 = vdwg.mxu0
        %v1908 = vrcp.pop %v1767
        %v1909 = vrcp.pop %v1771
        %v1910 = vrcp.pop %v1775
        %v1911 = vrcp.pop %v1779
        %v1912 = vrcp.pop %v1783
        %v1913 = vrcp.pop %v1787
        %v1914 = vrcp.pop %v1791
        %v1915 = vrcp.pop %v1795
        %v1916 = vmul.f32 %v1878, %v1908
        %v1917 = vmul.f32 %v1881, %v1909
        %v1918 = vmul.f32 %v1886, %v1910
        %v1919 = vmul.f32 %v1889, %v1911
        %v1920 = vmul.f32 %v1894, %v1912
        %v1921 = vmul.f32 %v1897, %v1913
        %v1922 = vmul.f32 %v1902, %v1914
        %v1923 = vmul.f32 %v1905, %v1915
        %v1924 = vpack.c.bf16 %v1917, %v1916
        %v1925 = vpack.c.bf16 %v1919, %v1918
        %v1926 = vpack.c.bf16 %v1921, %v1920
        %v1927 = vpack.c.bf16 %v1923, %v1922
        %1932 = vrot.lane.b32.xlu0 %v1924, 16
        %v1933 = vpop.permute.xlu0 %1932
        %1934 = vrot.lane.b32.xlu0 %v1925, 16
        %v1935 = vpop.permute.xlu0 %1934
        %1936 = vrot.lane.b32.xlu0 %v1926, 16
        %v1937 = vpop.permute.xlu0 %1936
        %1938 = vrot.lane.b32.xlu0 %v1927, 16
        %v1939 = vpop.permute.xlu0 %1938
        %vm1944 = vcmask 195712
        %1945 = vst.msk [vmem:[#allocation3] sm:$0xff] %vm1944, %v1933
        %1946 = vst.msk [vmem:[#allocation3 + $0x8] sm:$0xff] %vm1944, %v1935
        %1947 = vst.msk [vmem:[#allocation3 + $0x10] sm:$0xff] %vm1944, %v1937
        %1948 = vst.msk [vmem:[#allocation3 + $0x18] sm:$0xff] %vm1944, %v1939
        %v1949 = vld [vmem:[#allocation2] sm:$0xff]
        %v1950 = vld [vmem:[#allocation2 + $0x8] sm:$0xff]
        %v1951 = vld [vmem:[#allocation2 + $0x10] sm:$0xff]
        %v1952 = vld [vmem:[#allocation2 + $0x18] sm:$0xff]
        %v1953 = vld [vmem:[#allocation2 + $0x20] sm:$0xff]
        %v1954 = vld [vmem:[#allocation2 + $0x28] sm:$0xff]
        %v1955 = vld [vmem:[#allocation2 + $0x30] sm:$0xff]
        %v1956 = vld [vmem:[#allocation2 + $0x38] sm:$0xff]
        %v1957 = vld [vmem:[#allocation2 + $0x40] sm:$0xff]
        %s1958 = scalar_lea.vmem %s2, 384
        %v1959 = vld [vmem:[%s1958] sm:$0xff]
        %v1960 = vld [vmem:[%s1958 + $0x8] sm:$0xff]
        %v1961 = vld [vmem:[%s1958 + $0x10] sm:$0xff]
        %v1962 = vld [vmem:[%s1958 + $0x18] sm:$0xff]
        %v1963 = vld [vmem:[%s1958 + $0x20] sm:$0xff]
        %v1964 = vld [vmem:[%s1958 + $0x28] sm:$0xff]
        %v1965 = vld [vmem:[%s1958 + $0x30] sm:$0xff]
        %v1966 = vld [vmem:[%s1958 + $0x38] sm:$0xff]
        %v1967 = vld [vmem:[%s1958 + $0x40] sm:$0xff]
        %v1968 = vld [vmem:[%s1958 + $0x48] sm:$0xff]
        %v1969 = vld [vmem:[%s1958 + $0x50] sm:$0xff]
        %v1970 = vld [vmem:[%s1958 + $0x58] sm:$0xff]
        %v1971 = vld [vmem:[%s1958 + $0x60] sm:$0xff]
        %v1972 = vld [vmem:[%s1958 + $0x68] sm:$0xff]
        %v1973 = vld [vmem:[%s1958 + $0x70] sm:$0xff]
        %v1974 = vld [vmem:[%s1958 + $0x78] sm:$0xff]
        %1975 = vrot.lane.b32.xlu0 %v639, 104
        %v1976 = vpop.permute.xlu0 %1975
        %1977 = vrot.lane.b32.xlu0 %v640, 104
        %v1978 = vpop.permute.xlu0 %1977
        %1979 = vrot.lane.b32.xlu0 %v641, 104
        %v1980 = vpop.permute.xlu0 %1979
        %1981 = vrot.lane.b32.xlu0 %v642, 104
        %v1982 = vpop.permute.xlu0 %1981
        %1992 = vrot.lane.b32.xlu0 %v1949, 104
        %v1993 = vpop.permute.xlu0 %1992
        %1994 = vrot.lane.b32.xlu0 %v1950, 104
        %v1995 = vpop.permute.xlu0 %1994
        %1996 = vrot.lane.b32.xlu0 %v1951, 104
        %v1997 = vpop.permute.xlu0 %1996
        %1998 = vrot.lane.b32.xlu0 %v1952, 104
        %v1999 = vpop.permute.xlu0 %1998
        %2000 = vrot.lane.b32.xlu0 %v1953, 104
        %v2001 = vpop.permute.xlu0 %2000
        %2002 = vrot.lane.b32.xlu0 %v1954, 104
        %v2003 = vpop.permute.xlu0 %2002
        %2004 = vrot.lane.b32.xlu0 %v1955, 104
        %v2005 = vpop.permute.xlu0 %2004
        %2006 = vrot.lane.b32.xlu0 %v1956, 104
        %v2007 = vpop.permute.xlu0 %2006
        %2008 = vrot.lane.b32.xlu0 %v1957, 104
        %v2009 = vpop.permute.xlu0 %2008
        %v2011 = vsel %vm643, %v1976, 0
        %v2014 = vsel %vm643, %v1978, 0
        %v2017 = vsel %vm643, %v1980, 0
        %v2020 = vsel %vm643, %v1982, 0
        %v2023 = vsel %vm643, %v1993, 0
        %v2026 = vsel %vm643, %v1995, 0
        %v2029 = vsel %vm643, %v1997, 0
        %v2032 = vsel %vm643, %v1999, 0
        %v2035 = vsel %vm643, %v2001, 0
        %v2038 = vsel %vm643, %v2003, 0
        %v2041 = vsel %vm643, %v2005, 0
        %v2044 = vsel %vm643, %v2007, 0
        %v2047 = vsel %vm643, %v2009, 0
        %2049 = vmatprep.subr.bf16.mxu0 0
        %2050 = vmatpush1.bf16.xpose.msra.mxu0 %v2023
        %2051 = vmatprep.subr.bf16.mxu0 0
        %2052 = vmatpush1.bf16.xpose.msra.mxu0 %v2026
        %2053 = vmatprep.subr.bf16.mxu0 0
        %2054 = vmatpush1.bf16.xpose.msra.mxu0 %v2029
        %2055 = vmatprep.subr.bf16.mxu0 0
        %2056 = vmatpush1.bf16.xpose.msra.mxu0 %v2032
        %2057 = vmatprep.subr.bf16.mxu0 0
        %2058 = vmatpush1.bf16.xpose.msra.mxu0 %v2035
        %2059 = vmatprep.subr.bf16.mxu0 0
        %2060 = vmatpush1.bf16.xpose.msra.mxu0 %v2038
        %2061 = vmatprep.subr.bf16.mxu0 0
        %2062 = vmatpush1.bf16.xpose.msra.mxu0 %v2041
        %2063 = vmatprep.subr.bf16.mxu0 0
        %2064 = vmatpush1.bf16.xpose.msra.mxu0 %v2044
        %2065 = vmatprep.subr.bf16.mxu0 0
        %2066 = vmatpush1.bf16.xpose.msra.mxu0 %v2047
        %2067 = vmatprep.subr.bf16.mxu0 0
        %2068 = vmatpush1.bf16.xpose.msra.mxu0 0
        %2069 = vmatprep.subr.bf16.mxu0 0
        %2070 = vmatpush1.bf16.xpose.msra.mxu0 0
        %2071 = vmatprep.subr.bf16.mxu0 0
        %2072 = vmatpush1.bf16.xpose.msra.mxu0 0
        %2073 = vmatprep.subr.bf16.mxu0 0
        %2074 = vmatpush1.bf16.xpose.msra.mxu0 0
        %2075 = vmatprep.subr.bf16.mxu0 0
        %2076 = vmatpush1.bf16.xpose.msra.mxu0 0
        %2077 = vmatprep.subr.bf16.mxu0 0
        %2078 = vmatpush1.bf16.xpose.msra.mxu0 0
        %2079 = vmatprep.subr.bf16.mxu0 0
        %2080 = vmatpush1.bf16.xpose.msra.mxu0 0
        %2081 = vmatprep.mubr.bf16.mxu0 0
        %2082 = vmatmul.mubr.bf16.gmra.mrb[0].mxu0 %v2011
        %v2083 = vpop.f32.mrb[0].mxu0
        %v2084 = vadd.f32 %v1959, %v2083
        %v2085 = vpop.f32.mrb[0].mxu0
        %v2086 = vadd.f32 %v1960, %v2085
        %v2087 = vpop.f32.mrb[0].mxu0
        %v2088 = vadd.f32 %v1961, %v2087
        %v2089 = vpop.f32.mrb[0].mxu0
        %v2090 = vadd.f32 %v1962, %v2089
        %2091 = vmatprep.mubr.bf16.mxu0 0
        %2092 = vmatmul.mubr.bf16.gmra.mrb[0].mxu0 %v2014
        %v2093 = vpop.f32.mrb[0].mxu0
        %v2094 = vadd.f32 %v1963, %v2093
        %v2095 = vpop.f32.mrb[0].mxu0
        %v2096 = vadd.f32 %v1964, %v2095
        %v2097 = vpop.f32.mrb[0].mxu0
        %v2098 = vadd.f32 %v1965, %v2097
        %v2099 = vpop.f32.mrb[0].mxu0
        %v2100 = vadd.f32 %v1966, %v2099
        %2101 = vmatprep.mubr.bf16.mxu0 0
        %2102 = vmatmul.mubr.bf16.gmra.mrb[0].mxu0 %v2017
        %v2103 = vpop.f32.mrb[0].mxu0
        %v2104 = vadd.f32 %v1967, %v2103
        %v2105 = vpop.f32.mrb[0].mxu0
        %v2106 = vadd.f32 %v1968, %v2105
        %v2107 = vpop.f32.mrb[0].mxu0
        %v2108 = vadd.f32 %v1969, %v2107
        %v2109 = vpop.f32.mrb[0].mxu0
        %v2110 = vadd.f32 %v1970, %v2109
        %2111 = vmatprep.mubr.bf16.mxu0 0
        %2112 = vmatmul.mubr.bf16.gmra.mrb[0].mxu0 %v2020
        %v2113 = vpop.f32.mrb[0].mxu0
        %v2114 = vadd.f32 %v1971, %v2113
        %v2115 = vpop.f32.mrb[0].mxu0
        %v2116 = vadd.f32 %v1972, %v2115
        %v2117 = vpop.f32.mrb[0].mxu0
        %v2118 = vadd.f32 %v1973, %v2117
        %v2119 = vpop.f32.mrb[0].mxu0
        %v2120 = vadd.f32 %v1974, %v2119
        %2121 = vdwg.mxu0
        %v2122 = vadd.f32 %v2084, %v760
        %v2123 = vadd.f32 %v2086, %v764
        %v2124 = vadd.f32 %v2088, %v760
        %v2125 = vadd.f32 %v2090, %v764
        %v2126 = vadd.f32 %v2094, %v760
        %v2127 = vadd.f32 %v2096, %v764
        %v2128 = vadd.f32 %v2098, %v760
        %v2129 = vadd.f32 %v2100, %v764
        %v2130 = vadd.f32 %v2104, %v760
        %v2131 = vadd.f32 %v2106, %v764
        %v2132 = vadd.f32 %v2108, %v760
        %v2133 = vadd.f32 %v2110, %v764
        %v2134 = vadd.f32 %v2114, %v760
        %v2135 = vadd.f32 %v2116, %v764
        %v2136 = vadd.f32 %v2118, %v760
        %v2137 = vadd.f32 %v2120, %v764
        %v2138 = vsel %vm783, %v2123, -inf
        %v2139 = vmax.f32 %v2122, %v2138
        %2140 = vmax.xlane.f32.xlu0 %v2139
        %v2141 = vpop.xlane.xlu0 %2140
        %v2142 = vsel %vm783, %v2125, -inf
        %v2143 = vmax.f32 %v2124, %v2142
        %2144 = vmax.xlane.f32.xlu0 %v2143
        %v2145 = vpop.xlane.xlu0 %2144
        %v2146 = vsel %vm783, %v2127, -inf
        %v2147 = vmax.f32 %v2126, %v2146
        %2148 = vmax.xlane.f32.xlu0 %v2147
        %v2149 = vpop.xlane.xlu0 %2148
        %v2150 = vsel %vm783, %v2129, -inf
        %v2151 = vmax.f32 %v2128, %v2150
        %2152 = vmax.xlane.f32.xlu0 %v2151
        %v2153 = vpop.xlane.xlu0 %2152
        %v2154 = vsel %vm783, %v2131, -inf
        %v2155 = vmax.f32 %v2130, %v2154
        %2156 = vmax.xlane.f32.xlu0 %v2155
        %v2157 = vpop.xlane.xlu0 %2156
        %v2158 = vsel %vm783, %v2133, -inf
        %v2159 = vmax.f32 %v2132, %v2158
        %2160 = vmax.xlane.f32.xlu0 %v2159
        %v2161 = vpop.xlane.xlu0 %2160
        %v2162 = vsel %vm783, %v2135, -inf
        %v2163 = vmax.f32 %v2134, %v2162
        %2164 = vmax.xlane.f32.xlu0 %v2163
        %v2165 = vpop.xlane.xlu0 %2164
        %v2166 = vsel %vm783, %v2137, -inf
        %v2167 = vmax.f32 %v2136, %v2166
        %2168 = vmax.xlane.f32.xlu0 %v2167
        %v2169 = vpop.xlane.xlu0 %2168
        %v2170 = vsub.f32 %v2122, %v2141
        %v2171 = vsub.f32 %v2123, %v2141
        %v2172 = vsub.f32 %v2124, %v2145
        %v2173 = vsub.f32 %v2125, %v2145
        %v2174 = vsub.f32 %v2126, %v2149
        %v2175 = vsub.f32 %v2127, %v2149
        %v2176 = vsub.f32 %v2128, %v2153
        %v2177 = vsub.f32 %v2129, %v2153
        %v2178 = vsub.f32 %v2130, %v2157
        %v2179 = vsub.f32 %v2131, %v2157
        %v2180 = vsub.f32 %v2132, %v2161
        %v2181 = vsub.f32 %v2133, %v2161
        %v2182 = vsub.f32 %v2134, %v2165
        %v2183 = vsub.f32 %v2135, %v2165
        %v2184 = vsub.f32 %v2136, %v2169
        %v2185 = vsub.f32 %v2137, %v2169
        %v2186 = vmul.f32 %v2170, 1.442695
        %v2187 = vpow.pop %v2186
        %v2188 = vmul.f32 %v2171, 1.442695
        %v2189 = vpow.pop %v2188
        %v2190 = vmul.f32 %v2172, 1.442695
        %v2191 = vpow.pop %v2190
        %v2192 = vmul.f32 %v2173, 1.442695
        %v2193 = vpow.pop %v2192
        %v2194 = vmul.f32 %v2174, 1.442695
        %v2195 = vpow.pop %v2194
        %v2196 = vmul.f32 %v2175, 1.442695
        %v2197 = vpow.pop %v2196
        %v2198 = vmul.f32 %v2176, 1.442695
        %v2199 = vpow.pop %v2198
        %v2200 = vmul.f32 %v2177, 1.442695
        %v2201 = vpow.pop %v2200
        %v2202 = vmul.f32 %v2178, 1.442695
        %v2203 = vpow.pop %v2202
        %v2204 = vmul.f32 %v2179, 1.442695
        %v2205 = vpow.pop %v2204
        %v2206 = vmul.f32 %v2180, 1.442695
        %v2207 = vpow.pop %v2206
        %v2208 = vmul.f32 %v2181, 1.442695
        %v2209 = vpow.pop %v2208
        %v2210 = vmul.f32 %v2182, 1.442695
        %v2211 = vpow.pop %v2210
        %v2212 = vmul.f32 %v2183, 1.442695
        %v2213 = vpow.pop %v2212
        %v2214 = vmul.f32 %v2184, 1.442695
        %v2215 = vpow.pop %v2214
        %v2216 = vmul.f32 %v2185, 1.442695
        %v2217 = vpow.pop %v2216
        %v2218 = vsel %vm783, %v2189, 0.0
        %v2219 = vadd.f32 %v2187, %v2218
        %2220 = vadd.xlane.f32.xlu0 %v2219
        %v2221 = vpop.xlane.xlu0 %2220
        %v2222 = vsel %vm783, %v2193, 0.0
        %v2223 = vadd.f32 %v2191, %v2222
        %2224 = vadd.xlane.f32.xlu0 %v2223
        %v2225 = vpop.xlane.xlu0 %2224
        %v2226 = vsel %vm783, %v2197, 0.0
        %v2227 = vadd.f32 %v2195, %v2226
        %2228 = vadd.xlane.f32.xlu0 %v2227
        %v2229 = vpop.xlane.xlu0 %2228
        %v2230 = vsel %vm783, %v2201, 0.0
        %v2231 = vadd.f32 %v2199, %v2230
        %2232 = vadd.xlane.f32.xlu0 %v2231
        %v2233 = vpop.xlane.xlu0 %2232
        %v2234 = vsel %vm783, %v2205, 0.0
        %v2235 = vadd.f32 %v2203, %v2234
        %2236 = vadd.xlane.f32.xlu0 %v2235
        %v2237 = vpop.xlane.xlu0 %2236
        %v2238 = vsel %vm783, %v2209, 0.0
        %v2239 = vadd.f32 %v2207, %v2238
        %2240 = vadd.xlane.f32.xlu0 %v2239
        %v2241 = vpop.xlane.xlu0 %2240
        %v2242 = vsel %vm783, %v2213, 0.0
        %v2243 = vadd.f32 %v2211, %v2242
        %2244 = vadd.xlane.f32.xlu0 %v2243
        %v2245 = vpop.xlane.xlu0 %2244
        %v2246 = vsel %vm783, %v2217, 0.0
        %v2247 = vadd.f32 %v2215, %v2246
        %2248 = vadd.xlane.f32.xlu0 %v2247
        %v2249 = vpop.xlane.xlu0 %2248
        %v2250 = vpack.c.bf16 %v2191, %v2187
        %v2251 = vpack.c.bf16 %v2193, %v2189
        %v2252 = vpack.c.bf16 %v2199, %v2195
        %v2253 = vpack.c.bf16 %v2201, %v2197
        %v2254 = vpack.c.bf16 %v2207, %v2203
        %v2255 = vpack.c.bf16 %v2209, %v2205
        %v2256 = vpack.c.bf16 %v2215, %v2211
        %v2257 = vpack.c.bf16 %v2217, %v2213
        %2258 = vrot.lane.b32.xlu0 %v1949, 72
        %v2259 = vpop.permute.xlu0 %2258
        %2260 = vrot.lane.b32.xlu0 %v1950, 72
        %v2261 = vpop.permute.xlu0 %2260
        %2262 = vrot.lane.b32.xlu0 %v1951, 72
        %v2263 = vpop.permute.xlu0 %2262
        %2264 = vrot.lane.b32.xlu0 %v1952, 72
        %v2265 = vpop.permute.xlu0 %2264
        %2266 = vrot.lane.b32.xlu0 %v1953, 72
        %v2267 = vpop.permute.xlu0 %2266
        %2268 = vrot.lane.b32.xlu0 %v1954, 72
        %v2269 = vpop.permute.xlu0 %2268
        %2270 = vrot.lane.b32.xlu0 %v1955, 72
        %v2271 = vpop.permute.xlu0 %2270
        %2272 = vrot.lane.b32.xlu0 %v1956, 72
        %v2273 = vpop.permute.xlu0 %2272
        %2274 = vrot.lane.b32.xlu0 %v1957, 72
        %v2275 = vpop.permute.xlu0 %2274
        %v2286 = vsel %vm783, %v2251, 0
        %v2289 = vsel %vm783, %v2253, 0
        %v2292 = vsel %vm783, %v2255, 0
        %v2295 = vsel %vm783, %v2257, 0
        %2297 = vmatprep.subr.bf16.mxu0 0
        %2298 = vmatpush1.bf16.msra.mxu0 %v2259
        %2299 = vmatprep.subr.bf16.mxu0 0
        %2300 = vmatpush1.bf16.msra.mxu0 %v2261
        %2301 = vmatprep.subr.bf16.mxu0 0
        %2302 = vmatpush1.bf16.msra.mxu0 %v2263
        %2303 = vmatprep.subr.bf16.mxu0 0
        %2304 = vmatpush1.bf16.msra.mxu0 %v2265
        %2305 = vmatprep.subr.bf16.mxu0 0
        %2306 = vmatpush1.bf16.msra.mxu0 %v2267
        %2307 = vmatprep.subr.bf16.mxu0 0
        %2308 = vmatpush1.bf16.msra.mxu0 %v2269
        %2309 = vmatprep.subr.bf16.mxu0 0
        %2310 = vmatpush1.bf16.msra.mxu0 %v2271
        %2311 = vmatprep.subr.bf16.mxu0 0
        %2312 = vmatpush1.bf16.msra.mxu0 %v2273
        %2313 = vmatprep.subr.bf16.mxu0 0
        %2314 = vmatpush1.bf16.msra.mxu0 %v2275
        %2315 = vmatprep.subr.bf16.mxu0 0
        %2316 = vmatpush1.bf16.msra.mxu0 0
        %2317 = vmatprep.subr.bf16.mxu0 0
        %2318 = vmatpush1.bf16.msra.mxu0 0
        %2319 = vmatprep.subr.bf16.mxu0 0
        %2320 = vmatpush1.bf16.msra.mxu0 0
        %2321 = vmatprep.subr.bf16.mxu0 0
        %2322 = vmatpush1.bf16.msra.mxu0 0
        %2323 = vmatprep.subr.bf16.mxu0 0
        %2324 = vmatpush1.bf16.msra.mxu0 0
        %2325 = vmatprep.subr.bf16.mxu0 0
        %2326 = vmatpush1.bf16.msra.mxu0 0
        %2327 = vmatprep.subr.bf16.mxu0 0
        %2328 = vmatpush1.bf16.msra.mxu0 0
        %2329 = vmatprep.mubr.bf16.mxu0 %v2286
        %2330 = vmatmul.mubr.bf16.gmra.mrb[0].mxu0 %v2250
        %v2331 = vpop.f32.mrb[0].mxu0
        %v2332 = vadd.f32 0.0, %v2331
        %v2333 = vpop.f32.mrb[0].mxu0
        %v2334 = vpop.f32.mrb[0].mxu0
        %v2335 = vadd.f32 0.0, %v2334
        %v2336 = vpop.f32.mrb[0].mxu0
        %2337 = vmatprep.mubr.bf16.mxu0 %v2289
        %2338 = vmatmul.mubr.bf16.gmra.mrb[0].mxu0 %v2252
        %v2339 = vpop.f32.mrb[0].mxu0
        %v2340 = vadd.f32 0.0, %v2339
        %v2341 = vpop.f32.mrb[0].mxu0
        %v2342 = vpop.f32.mrb[0].mxu0
        %v2343 = vadd.f32 0.0, %v2342
        %v2344 = vpop.f32.mrb[0].mxu0
        %2345 = vmatprep.mubr.bf16.mxu0 %v2292
        %2346 = vmatmul.mubr.bf16.gmra.mrb[0].mxu0 %v2254
        %v2347 = vpop.f32.mrb[0].mxu0
        %v2348 = vadd.f32 0.0, %v2347
        %v2349 = vpop.f32.mrb[0].mxu0
        %v2350 = vpop.f32.mrb[0].mxu0
        %v2351 = vadd.f32 0.0, %v2350
        %v2352 = vpop.f32.mrb[0].mxu0
        %2353 = vmatprep.mubr.bf16.mxu0 %v2295
        %2354 = vmatmul.mubr.bf16.gmra.mrb[0].mxu0 %v2256
        %v2355 = vpop.f32.mrb[0].mxu0
        %v2356 = vadd.f32 0.0, %v2355
        %v2357 = vpop.f32.mrb[0].mxu0
        %v2358 = vpop.f32.mrb[0].mxu0
        %v2359 = vadd.f32 0.0, %v2358
        %v2360 = vpop.f32.mrb[0].mxu0
        %2361 = vdwg.mxu0
        %v2362 = vrcp.pop %v2221
        %v2363 = vrcp.pop %v2225
        %v2364 = vrcp.pop %v2229
        %v2365 = vrcp.pop %v2233
        %v2366 = vrcp.pop %v2237
        %v2367 = vrcp.pop %v2241
        %v2368 = vrcp.pop %v2245
        %v2369 = vrcp.pop %v2249
        %v2370 = vmul.f32 %v2332, %v2362
        %v2371 = vmul.f32 %v2335, %v2363
        %v2372 = vmul.f32 %v2340, %v2364
        %v2373 = vmul.f32 %v2343, %v2365
        %v2374 = vmul.f32 %v2348, %v2366
        %v2375 = vmul.f32 %v2351, %v2367
        %v2376 = vmul.f32 %v2356, %v2368
        %v2377 = vmul.f32 %v2359, %v2369
        %v2378 = vpack.c.bf16 %v2371, %v2370
        %v2379 = vpack.c.bf16 %v2373, %v2372
        %v2380 = vpack.c.bf16 %v2375, %v2374
        %v2381 = vpack.c.bf16 %v2377, %v2376
        %2386 = vrot.lane.b32.xlu0 %v2378, 24
        %v2387 = vpop.permute.xlu0 %2386
        %2388 = vrot.lane.b32.xlu0 %v2379, 24
        %v2389 = vpop.permute.xlu0 %2388
        %2390 = vrot.lane.b32.xlu0 %v2380, 24
        %v2391 = vpop.permute.xlu0 %2390
        %2392 = vrot.lane.b32.xlu0 %v2381, 24
        %v2393 = vpop.permute.xlu0 %2392
        %vm2398 = vcmask 261312
        %2399 = vst.msk [vmem:[#allocation3] sm:$0xff] %vm2398, %v2387
        %2400 = vst.msk [vmem:[#allocation3 + $0x8] sm:$0xff] %vm2398, %v2389
        %2401 = vst.msk [vmem:[#allocation3 + $0x10] sm:$0xff] %vm2398, %v2391
        %2402 = vst.msk [vmem:[#allocation3 + $0x18] sm:$0xff] %vm2398, %v2393
        %v2403 = vld [vmem:[#allocation3] sm:$0xff]
        %v2404 = vld [vmem:[#allocation3 + $0x8] sm:$0xff]
        %v2405 = vld [vmem:[#allocation3 + $0x10] sm:$0xff]
        %v2406 = vld [vmem:[#allocation3 + $0x18] sm:$0xff]
        %v2407 = vld [vmem:[%s4] sm:$0xf]
        %v2408 = vld [vmem:[%s4 + $0x4] sm:$0xf]
        %v2409 = vld [vmem:[%s4 + $0x8] sm:$0xf]
        %v2410 = vld [vmem:[%s4 + $0xc] sm:$0xf]
        %v2411 = vld [vmem:[%s5] sm:$0x1]
        %v2413 = vlaneseq
        %v2414 = vshrl.u32 %v2413, 7
        %v2415 = vsub.s32 0, %v2414
        %v2416 = vrot.slane %v2411, %v2415
        %v2422 = vunpack.c.l.b16 %v2407
        %v2423 = vunpack.c.l.b16 %v2408
        %v2424 = vunpack.c.l.b16 %v2409
        %v2425 = vunpack.c.l.b16 %v2410
        %v2426 = vpack.c.b16 %v2423, %v2422
        %v2427 = vpack.c.b16 %v2425, %v2424
        %vm2430 = vcmask 261120
        %v2432 = vsel %vm2430, %v2403, 0
        %v2435 = vsel %vm2430, %v2404, 0
        %v2438 = vsel %vm2430, %v2405, 0
        %v2441 = vsel %vm2430, %v2406, 0
        %2443 = vmatprep.subr.bf16.mxu0 0
        %2444 = vmatpush1.bf16.msra.mxu0 %v2426
        %2445 = vmatprep.subr.bf16.mxu0 0
        %2446 = vmatpush1.bf16.msra.mxu0 %v2427
        %2447 = vmatprep.subr.bf16.mxu0 0
        %2448 = vmatpush1.bf16.msra.mxu0 0
        %2449 = vmatprep.subr.bf16.mxu0 0
        %2450 = vmatpush1.bf16.msra.mxu0 0
        %2451 = vmatprep.subr.bf16.mxu0 0
        %2452 = vmatpush1.bf16.msra.mxu0 0
        %2453 = vmatprep.subr.bf16.mxu0 0
        %2454 = vmatpush1.bf16.msra.mxu0 0
        %2455 = vmatprep.subr.bf16.mxu0 0
        %2456 = vmatpush1.bf16.msra.mxu0 0
        %2457 = vmatprep.subr.bf16.mxu0 0
        %2458 = vmatpush1.bf16.msra.mxu0 0
        %2459 = vmatprep.subr.bf16.mxu0 0
        %2460 = vmatpush1.bf16.msra.mxu0 0
        %2461 = vmatprep.subr.bf16.mxu0 0
        %2462 = vmatpush1.bf16.msra.mxu0 0
        %2463 = vmatprep.subr.bf16.mxu0 0
        %2464 = vmatpush1.bf16.msra.mxu0 0
        %2465 = vmatprep.subr.bf16.mxu0 0
        %2466 = vmatpush1.bf16.msra.mxu0 0
        %2467 = vmatprep.subr.bf16.mxu0 0
        %2468 = vmatpush1.bf16.msra.mxu0 0
        %2469 = vmatprep.subr.bf16.mxu0 0
        %2470 = vmatpush1.bf16.msra.mxu0 0
        %2471 = vmatprep.subr.bf16.mxu0 0
        %2472 = vmatpush1.bf16.msra.mxu0 0
        %2473 = vmatprep.subr.bf16.mxu0 0
        %2474 = vmatpush1.bf16.msra.mxu0 0
        %2475 = vmatprep.mubr.bf16.mxu0 0
        %2476 = vmatmul.mubr.bf16.gmra.mrb[0].mxu0 %v2432
        %v2477 = vpop.f32.mrb[0].mxu0
        %v2478 = vadd.f32 %v2416, %v2477
        %v2479 = vpop.f32.mrb[0].mxu0
        %v2480 = vpop.f32.mrb[0].mxu0
        %v2481 = vadd.f32 %v2416, %v2480
        %v2482 = vpop.f32.mrb[0].mxu0
        %2483 = vmatprep.mubr.bf16.mxu0 0
        %2484 = vmatmul.mubr.bf16.gmra.mrb[0].mxu0 %v2435
        %v2485 = vpop.f32.mrb[0].mxu0
        %v2486 = vadd.f32 %v2416, %v2485
        %v2487 = vpop.f32.mrb[0].mxu0
        %v2488 = vpop.f32.mrb[0].mxu0
        %v2489 = vadd.f32 %v2416, %v2488
        %v2490 = vpop.f32.mrb[0].mxu0
        %2491 = vmatprep.mubr.bf16.mxu0 0
        %2492 = vmatmul.mubr.bf16.gmra.mrb[0].mxu0 %v2438
        %v2493 = vpop.f32.mrb[0].mxu0
        %v2494 = vadd.f32 %v2416, %v2493
        %v2495 = vpop.f32.mrb[0].mxu0
        %v2496 = vpop.f32.mrb[0].mxu0
        %v2497 = vadd.f32 %v2416, %v2496
        %v2498 = vpop.f32.mrb[0].mxu0
        %2499 = vmatprep.mubr.bf16.mxu0 0
        %2500 = vmatmul.mubr.bf16.gmra.mrb[0].mxu0 %v2441
        %v2501 = vpop.f32.mrb[0].mxu0
        %v2502 = vadd.f32 %v2416, %v2501
        %v2503 = vpop.f32.mrb[0].mxu0
        %v2504 = vpop.f32.mrb[0].mxu0
        %v2505 = vadd.f32 %v2416, %v2504
        %v2506 = vpop.f32.mrb[0].mxu0
        %2507 = vdwg.mxu0
        %v2508 = vpack.c.bf16 %v2478, %v2478
        %v2509 = vpack.c.bf16 %v2481, %v2481
        %v2510 = vpack.c.bf16 %v2486, %v2486
        %v2511 = vpack.c.bf16 %v2489, %v2489
        %v2512 = vpack.c.bf16 %v2494, %v2494
        %v2513 = vpack.c.bf16 %v2497, %v2497
        %v2514 = vpack.c.bf16 %v2502, %v2502
        %v2515 = vpack.c.bf16 %v2505, %v2505
        %vm2516 = vcmask 257024
        %2517 = vst.msk [vmem:[%s398] sm:$0xf] %vm2516, %v2508
        %2518 = vst.msk [vmem:[%s398 + $0x4] sm:$0xf] %vm2516, %v2509
        %2519 = vst.msk [vmem:[%s398 + $0x8] sm:$0xf] %vm2516, %v2510
        %2520 = vst.msk [vmem:[%s398 + $0xc] sm:$0xf] %vm2516, %v2511
        %2521 = vst.msk [vmem:[%s398 + $0x10] sm:$0xf] %vm2516, %v2512
        %2522 = vst.msk [vmem:[%s398 + $0x14] sm:$0xf] %vm2516, %v2513
        %2523 = vst.msk [vmem:[%s398 + $0x18] sm:$0xf] %vm2516, %v2514
        %2524 = vst.msk [vmem:[%s398 + $0x1c] sm:$0xf] %vm2516, %v2515
        %s2525 = sand.u32 %s200, 1
        %s2526 = scalar_lea.sflag [#allocation6], %s2525
        %s2527 = sand.u32 %s200, 1
        %s2528 = smul.addr %s2527, 32
        %s2529 = scalar_lea.vmem [#allocation5], %s2528
        // Predicated region
        $region86: #{a_call__.3} parent=80 // pred_check
          %p2530 = pneg %p210
        $region87: #{a_call__.3} parent=80 // pred_check_branch
          %2532 = sbr.rel (%p2530) target = $region89
        $region88: #{a_call__.3} parent=80 // pred_region
          %s2533 = smul.u32 8, %s26
          %s2535 = ssub.s32 512, 512
          %2536 = vsyncadd %s2526, %s2535
          %s2537 = smul.addr %s2533, 2
          %s2538 = sadd.s32 %s27, %s2537
          %s2539 = smul.addr %s25, 32
          %s2540 = sadd.s32 %s2538, %s2539
          %s2541 = smul.addr %s2540, 64
          %s2542 = scalar_lea.hbm %s6, %s2541
          %s2543 = sshll.u32 %s2529, 4
          %s2544 = int_to_ptr.vmem [resolvable:$true] %s2543
          %2549 = dma.vmem_to_hbm [thread:$0]  %s2544, 512, %s2542, %s2526, 64, 128, 4
        $region89: #{a_call__.3} parent=80 // pred_fallthru
          _
      $region81: #{a_call__.3} parent=5 // pred_fallthru
        _
      %p2550 = scmp.le.s32.totalorder 2, %s15
      // Predicated region
      $region90: #{a_call__.3} parent=5 // pred_check
        %p2551 = pneg %p2550
      $region91: #{a_call__.3} parent=5 // pred_check_branch
        %2553 = sbr.rel (%p2551) target = $region93
      $region92: #{a_call__.3} parent=5 // pred_region
        %s2554 = ssub.s32 %s15, 2
        // Predicated region
        $region94: #{a_call__.3} parent=92 // pred_check
          %p2555 = pneg %p216
        $region95: #{a_call__.3} parent=92 // pred_check_branch
          %2557 = sbr.rel (%p2555) target = $region97
        $region96: #{a_call__.3} parent=92 // pred_region
          %s2558 = sand.u32 %s201, 1
          %s2559 = scalar_lea.sflag [#allocation6], %s2558
          %s2560 = sand.u32 %s201, 1
          %s2561 = smul.addr %s2560, 32
          %s2562 = scalar_lea.vmem [#allocation5], %s2561
          %2563 = dma.done %s2559, 512
        $region97: #{a_call__.3} parent=92 // pred_fallthru
          _
      $region93: #{a_call__.3} parent=5 // pred_fallthru
        _
    $region6: #{a_call__.3} parent=1 // loop_footer
      %s19 = sadd.s32 1, %s15
    $region7: #{a_call__.3} parent=1 // loop_footer_branch
      %14 = sbr.rel target = $region3
    $region8: #{a_call__.3} parent=1 // loop_exit
      _
    %2564 = vsyncpa [#allocation6], 1
    %s2565 = scalar_lea.sflag [#allocation6], 1
    %2566 = vsyncpa %s2565, 1

</llo_original>
